<compile_context>
chip_gen: v6e
topology: v6e:2x2x1
jax: 0.10.0
libtpu: 0.0.40
codegen_flags: <defaults>
</compile_context>

<pallas_src>
import jax
import jax.numpy as jnp
from jax.experimental import pallas as pl
from jax.experimental.pallas import tpu as pltpu

_TILE_B = 16  # samples per grid step (8 activation rows per sample)


# ----------------------------- Pallas kernel -------------------------------

def _shift_rows_up(v, a):
    """w[j] = v[j + a] (cyclic, static small a) via static slice + concat."""
    if a == 0:
        return v
    return jnp.concatenate([v[a:], v[:a]], axis=0)


def _net_kernel(x_ref, wb1_ref, wb2_ref, wf1_ref, wf2_ref, wf3_ref,
                cb1_ref, cb2_ref, fb1_ref, fb2_ref, fb3_ref, out_ref):
    f32 = jnp.float32
    bf16 = jnp.bfloat16
    x = x_ref[...]                                   # (R, 512) bf16, R = 8*tile_b

    # Row-phase m of the input image: phases[m][b*8 + t] = image row 4*t + m
    # (lanes = 3*col + chan, zero padded 96 -> 128 so slices are vreg aligned).
    phases = [x[:, 128 * m:128 * (m + 1)] for m in range(4)]

    # ---------------- conv1 + ReLU + 2x2 maxpool ----------------
    # For pooled-row parity e, accumulator `acc[di]` row b*8+p holds conv rows
    # 4p + 2e + di; lanes = dj*140 + 10*q + co (dj = pool column phase).
    cb1 = cb1_ref[...]                               # (1, 140) f32
    z1_halves = []                                   # [even pooled rows, odd]
    for e in (0, 1):
        acc = []
        for di in (0, 1):
            s = None
            for ki in range(5):
                v = 2 * e + di + ki
                lhs = _shift_rows_up(phases[v % 4], v // 4)
                t = jnp.dot(lhs, wb1_ref[ki], preferred_element_type=f32)
                s = t if s is None else s + t
            acc.append(s)                            # (R, 280) f32
        m = jnp.maximum(acc[0], acc[1])              # max over pool-row offset
        m = jnp.maximum(m[:, :140], m[:, 140:])      # max over pool-col offset
        z1_halves.append(jnp.maximum(m + cb1, 0.0).astype(bf16))
    z1e, z1o = z1_halves                             # (R, 140) each; rows 2p / 2p+1

    # ---------------- conv2 + ReLU + 2x2 maxpool ----------------
    cb2 = cb2_ref[...]                               # (1, 100) f32
    acc2 = []
    for e2 in (0, 1):
        s = None
        for ki in range(5):
            v = e2 + ki
            src = z1e if (v % 2 == 0) else z1o
            lhs = _shift_rows_up(src, v // 2)
            t = jnp.dot(lhs, wb2_ref[ki], preferred_element_type=f32)
            s = t if s is None else s + t
        acc2.append(s)                               # (R, 200) f32
    m = jnp.maximum(acc2[0], acc2[1])
    m = jnp.maximum(m[:, :100], m[:, 100:])
    z2 = jnp.maximum(m + cb2, 0.0).astype(bf16)      # (R, 100); valid rows b*8+h, h<5

    # ------- fc1 + ReLU (torch flatten folded into 5 row-shifted matmuls) ----
    wf1 = wf1_ref[...]                               # (100, 600) bf16
    s = None
    for h in range(5):
        t = jnp.dot(_shift_rows_up(z2, h), wf1[:, 120 * h:120 * (h + 1)],
                    preferred_element_type=f32)
        s = t if s is None else s + t
    h1 = jnp.maximum(s + fb1_ref[...], 0.0).astype(bf16)   # (R, 120); valid at rows b*8

    # ---------------- fc2 + ReLU, fc3 ----------------
    h2 = jnp.dot(h1, wf2_ref[...], preferred_element_type=f32) + fb2_ref[...]
    h2 = jnp.maximum(h2, 0.0).astype(bf16)                   # (R, 84)
    out_ref[...] = (jnp.dot(h2, wf3_ref[...], preferred_element_type=f32)
                    + fb3_ref[...])                          # (R, 10) f32


# --------------------------- weight preparation -----------------------------

def _banded_pool_weight(w, w_in, pad_rows_to=None):
    """Fold conv-along-width + the two 2x2-pool column phases into one matrix.

    w: (C_out, C_in, kh, kw) torch layout.  Returns (kh, w_in*C_in, 2*Q*C_out)
    where row u = C_in*s + ci (s = input column), and output column
    dj*(Q*C_out) + q*C_out + co holds w[co,ci,ki,kj] when s = 2q + dj + kj.
    """
    C_out, C_in, kh, kw = map(int, w.shape)
    Q = (w_in - kw + 1) // 2
    K = jnp.transpose(w, (2, 3, 1, 0)).reshape(kh, kw * C_in, C_out)
    rows = w_in * C_in
    out = jnp.zeros((kh, rows, 2 * Q * C_out), w.dtype)
    for ki in range(kh):
        for dj in range(2):
            for q in range(Q):
                r0 = C_in * (2 * q + dj)
                c0 = dj * Q * C_out + q * C_out
                out = out.at[ki, r0:r0 + kw * C_in, c0:c0 + C_out].set(K[ki])
    if pad_rows_to is not None and pad_rows_to > rows:
        out = jnp.pad(out, ((0, 0), (0, pad_rows_to - rows), (0, 0)))
    return out


def _fc1_weight(fc1_w):
    """(120,500) torch fc1 weight -> (100, 5*120) matching the kernel's z2
    layout (rows = h, lanes = q2*20 + co2) and the per-h column blocks."""
    w = jnp.transpose(fc1_w.reshape(120, 20, 5, 5), (3, 1, 2, 0))  # (q, co, h, n)
    return w.reshape(100, 600)


# ------------------------------- forward ------------------------------------

@jax.jit
def net_forward(params, x_nchw):
    B = x_nchw.shape[0]
    tb = min(_TILE_B, B)
    n_tiles = -(-B // tb)
    Bp = n_tiles * tb
    R = tb * 8
    bf16 = jnp.bfloat16

    # Input: NCHW -> NHWC -> rows = (b, img_row // 4), lanes = (img_row % 4,
    # col, chan), each of the 4 row phases zero-padded 96 -> 128 lanes.
    x = jnp.transpose(x_nchw, (0, 2, 3, 1)).astype(bf16)           # (B,32,32,3)
    if Bp != B:
        x = jnp.pad(x, ((0, Bp - B), (0, 0), (0, 0), (0, 0)))
    x = x.reshape(Bp, 8, 4, 96)
    x = jnp.pad(x, ((0, 0), (0, 0), (0, 0), (0, 32)))
    xin = x.reshape(Bp * 8, 512)

    wb1 = _banded_pool_weight(params['conv1_w'], 32, pad_rows_to=128).astype(bf16)
    wb2 = _banded_pool_weight(params['conv2_w'], 14).astype(bf16)
    wf1 = _fc1_weight(params['fc1_w']).astype(bf16)
    wf2 = params['fc2_w'].T.astype(bf16)
    wf3 = params['fc3_w'].T.astype(bf16)
    cb1 = jnp.tile(params['conv1_b'], 14)[None].astype(jnp.float32)   # (1,140)
    cb2 = jnp.tile(params['conv2_b'], 5)[None].astype(jnp.float32)    # (1,100)
    fb1 = params['fc1_b'][None].astype(jnp.float32)
    fb2 = params['fc2_b'][None].astype(jnp.float32)
    fb3 = params['fc3_b'][None].astype(jnp.float32)

    out = pl.pallas_call(
        _net_kernel,
        out_shape=jax.ShapeDtypeStruct((Bp * 8, 10), jnp.float32),
        grid_spec=pltpu.PrefetchScalarGridSpec(
            num_scalar_prefetch=0,
            grid=(n_tiles,),
            in_specs=[
                pl.BlockSpec((R, 512), lambda i: (i, 0)),            # activations
                pl.BlockSpec((5, 128, 280), lambda i: (0, 0, 0)),    # conv1 (banded)
                pl.BlockSpec((5, 140, 200), lambda i: (0, 0, 0)),    # conv2 (banded)
                pl.BlockSpec((100, 600), lambda i: (0, 0)),          # fc1
                pl.BlockSpec((120, 84), lambda i: (0, 0)),           # fc2
                pl.BlockSpec((84, 10), lambda i: (0, 0)),            # fc3
                pl.BlockSpec((1, 140), lambda i: (0, 0)),            # conv1 bias (tiled)
                pl.BlockSpec((1, 100), lambda i: (0, 0)),            # conv2 bias (tiled)
                pl.BlockSpec((1, 120), lambda i: (0, 0)),
                pl.BlockSpec((1, 84), lambda i: (0, 0)),
                pl.BlockSpec((1, 10), lambda i: (0, 0)),
            ],
            out_specs=pl.BlockSpec((R, 10), lambda i: (i, 0)),
        ),
        compiler_params=pltpu.CompilerParams(
            dimension_semantics=("parallel",)),
    )(xin, wb1, wb2, wf1, wf2, wf3, cb1, cb2, fb1, fb2, fb3)

    # Row b*8 of each 8-row block holds sample b's logits.
    return out.reshape(Bp, 8, 10)[:B, 0, :]


# ------------------------------ references ----------------------------------

def init_params(key):
    # Deterministic, PyTorch-default-style uniform(-1/sqrt(fan_in), 1/sqrt(fan_in)).
    def u(k, shape, fan_in):
        bound = 1.0 / (fan_in ** 0.5)
        return jax.random.uniform(k, shape, jnp.float32, -bound, bound)

    ks = jax.random.split(key, 10)
    return dict(
        conv1_w=u(ks[0], (10, 3, 5, 5), 3 * 25),
        conv1_b=u(ks[1], (10,), 3 * 25),
        conv2_w=u(ks[2], (20, 10, 5, 5), 10 * 25),
        conv2_b=u(ks[3], (20,), 10 * 25),
        fc1_w=u(ks[4], (120, 20 * 5 * 5), 20 * 5 * 5),
        fc1_b=u(ks[5], (120,), 20 * 5 * 5),
        fc2_w=u(ks[6], (84, 120), 120),
        fc2_b=u(ks[7], (84,), 120),
        fc3_w=u(ks[8], (10, 84), 84),
        fc3_b=u(ks[9], (10,), 84),
    )


def net_forward_ref(params, x, bf16_faithful=False):
    # Pure-JAX reference. With bf16_faithful=True it rounds inputs/weights/
    # activations to bf16 exactly where the kernel does (f32 accumulation),
    # so it isolates kernel-math errors from the intended mixed precision.
    f32 = jnp.float32
    rnd = (lambda a: a.astype(jnp.bfloat16).astype(f32)) if bf16_faithful else (lambda a: a)
    dn = ('NCHW', 'OIHW', 'NCHW')
    y = jax.lax.conv_general_dilated(rnd(x), rnd(params['conv1_w']), (1, 1), 'VALID',
                                     dimension_numbers=dn)
    y = jax.nn.relu(y + params['conv1_b'][None, :, None, None])
    y = jax.lax.reduce_window(y, -jnp.inf, jax.lax.max, (1, 1, 2, 2), (1, 1, 2, 2), 'VALID')
    y = jax.lax.conv_general_dilated(rnd(y), rnd(params['conv2_w']), (1, 1), 'VALID',
                                     dimension_numbers=dn)
    y = jax.nn.relu(y + params['conv2_b'][None, :, None, None])
    y = jax.lax.reduce_window(y, -jnp.inf, jax.lax.max, (1, 1, 2, 2), (1, 1, 2, 2), 'VALID')
    y = rnd(y).reshape(y.shape[0], -1)
    y = rnd(jax.nn.relu(y @ rnd(params['fc1_w']).T + params['fc1_b']))
    y = rnd(jax.nn.relu(y @ rnd(params['fc2_w']).T + params['fc2_b']))
    return y @ rnd(params['fc3_w']).T + params['fc3_b']


if __name__ == "__main__":
    key = jax.random.PRNGKey(0)
    pkey, xkey = jax.random.split(key)
    params = init_params(pkey)
    # CIFAR-10 geometry is required by the 20*5*5 flatten; small batch=2.
    x = jax.random.normal(xkey, (2, 3, 32, 32), jnp.float32)

    out = jax.block_until_ready(net_forward(params, x))
    assert out.shape == (2, 10), out.shape

    ref = net_forward_ref(params, x, bf16_faithful=True)
    err = float(jnp.max(jnp.abs(out - ref)))
    assert jnp.allclose(out, ref, atol=1e-2, rtol=1e-2), err

    print("KERNEL_OK")
</pallas_src>

<mosaic_0001>
module attributes {stable_mosaic.version = 11 : i64} {
  func.func @_net_kernel(%arg0: i32, %arg1: memref<16x512xbf16, #tpu.memory_space<vmem>>, %arg2: memref<5x128x280xbf16, #tpu.memory_space<vmem>>, %arg3: memref<5x140x200xbf16, #tpu.memory_space<vmem>>, %arg4: memref<100x600xbf16, #tpu.memory_space<vmem>>, %arg5: memref<120x84xbf16, #tpu.memory_space<vmem>>, %arg6: memref<84x10xbf16, #tpu.memory_space<vmem>>, %arg7: memref<1x140xf32, #tpu.memory_space<vmem>>, %arg8: memref<1x100xf32, #tpu.memory_space<vmem>>, %arg9: memref<1x120xf32, #tpu.memory_space<vmem>>, %arg10: memref<1x84xf32, #tpu.memory_space<vmem>>, %arg11: memref<1x10xf32, #tpu.memory_space<vmem>>, %arg12: memref<16x10xf32, #tpu.memory_space<vmem>>) attributes {dimension_semantics = [#tpu.dimension_semantics<parallel>], iteration_bounds = array<i64: 1>, scalar_prefetch = 0 : i64, scratch_operands = 0 : i64, tpu.core_type = #tpu.core_type<tc>, window_params = [{transform_indices = @transform_0, window_bounds = array<i64: 16, 512>}, {pipeline_mode = #tpu.pipeline_mode<synchronous>, transform_indices = @transform_1, window_bounds = array<i64: 5, 128, 280>}, {pipeline_mode = #tpu.pipeline_mode<synchronous>, transform_indices = @transform_2, window_bounds = array<i64: 5, 140, 200>}, {pipeline_mode = #tpu.pipeline_mode<synchronous>, transform_indices = @transform_3, window_bounds = array<i64: 100, 600>}, {pipeline_mode = #tpu.pipeline_mode<synchronous>, transform_indices = @transform_4, window_bounds = array<i64: 120, 84>}, {pipeline_mode = #tpu.pipeline_mode<synchronous>, transform_indices = @transform_5, window_bounds = array<i64: 84, 10>}, {pipeline_mode = #tpu.pipeline_mode<synchronous>, transform_indices = @transform_6, window_bounds = array<i64: 1, 140>}, {pipeline_mode = #tpu.pipeline_mode<synchronous>, transform_indices = @transform_7, window_bounds = array<i64: 1, 100>}, {pipeline_mode = #tpu.pipeline_mode<synchronous>, transform_indices = @transform_8, window_bounds = array<i64: 1, 120>}, {pipeline_mode = #tpu.pipeline_mode<synchronous>, transform_indices = @transform_9, window_bounds = array<i64: 1, 84>}, {pipeline_mode = #tpu.pipeline_mode<synchronous>, transform_indices = @transform_10, window_bounds = array<i64: 1, 10>}, {transform_indices = @transform_11, window_bounds = array<i64: 16, 10>}]} {
    %c0 = arith.constant 0 : index
    %c0_0 = arith.constant 0 : index
    %0 = vector.load %arg1[%c0, %c0_0] : memref<16x512xbf16, #tpu.memory_space<vmem>>, vector<16x512xbf16>
    %1 = vector.extract_strided_slice %0 {offsets = [0, 0], sizes = [16, 128], strides = [1, 1]} : vector<16x512xbf16> to vector<16x128xbf16>
    %2 = vector.extract_strided_slice %0 {offsets = [0, 128], sizes = [16, 128], strides = [1, 1]} : vector<16x512xbf16> to vector<16x128xbf16>
    %3 = vector.extract_strided_slice %0 {offsets = [0, 256], sizes = [16, 128], strides = [1, 1]} : vector<16x512xbf16> to vector<16x128xbf16>
    %4 = vector.extract_strided_slice %0 {offsets = [0, 384], sizes = [16, 128], strides = [1, 1]} : vector<16x512xbf16> to vector<16x128xbf16>
    %c0_1 = arith.constant 0 : index
    %c0_2 = arith.constant 0 : index
    %5 = vector.load %arg7[%c0_1, %c0_2] : memref<1x140xf32, #tpu.memory_space<vmem>>, vector<1x140xf32>
    %c0_3 = arith.constant 0 : index
    %c0_4 = arith.constant 0 : index
    %c0_5 = arith.constant 0 : index
    %6 = vector.load %arg2[%c0_3, %c0_4, %c0_5] : memref<5x128x280xbf16, #tpu.memory_space<vmem>>, vector<1x128x280xbf16>
    %7 = vector.shape_cast %6 : vector<1x128x280xbf16> to vector<128x280xbf16>
    %cst = arith.constant dense<0.000000e+00> : vector<16x280xf32>
    %8 = tpu.matmul %1, %7, %cst {dimension_numbers = #tpu.dot_dimension_numbers<[1], [0], [0], [1], [0, 0, 1, 1], [], []>} : vector<16x128xbf16>, vector<128x280xbf16>, vector<16x280xf32> -> vector<16x280xf32>
    %c1 = arith.constant 1 : index
    %c0_6 = arith.constant 0 : index
    %c0_7 = arith.constant 0 : index
    %9 = vector.load %arg2[%c1, %c0_6, %c0_7] : memref<5x128x280xbf16, #tpu.memory_space<vmem>>, vector<1x128x280xbf16>
    %10 = vector.shape_cast %9 : vector<1x128x280xbf16> to vector<128x280xbf16>
    %cst_8 = arith.constant dense<0.000000e+00> : vector<16x280xf32>
    %11 = tpu.matmul %2, %10, %cst_8 {dimension_numbers = #tpu.dot_dimension_numbers<[1], [0], [0], [1], [0, 0, 1, 1], [], []>} : vector<16x128xbf16>, vector<128x280xbf16>, vector<16x280xf32> -> vector<16x280xf32>
    %12 = arith.addf %8, %11 : vector<16x280xf32>
    %c2 = arith.constant 2 : index
    %c0_9 = arith.constant 0 : index
    %c0_10 = arith.constant 0 : index
    %13 = vector.load %arg2[%c2, %c0_9, %c0_10] : memref<5x128x280xbf16, #tpu.memory_space<vmem>>, vector<1x128x280xbf16>
    %14 = vector.shape_cast %13 : vector<1x128x280xbf16> to vector<128x280xbf16>
    %cst_11 = arith.constant dense<0.000000e+00> : vector<16x280xf32>
    %15 = tpu.matmul %3, %14, %cst_11 {dimension_numbers = #tpu.dot_dimension_numbers<[1], [0], [0], [1], [0, 0, 1, 1], [], []>} : vector<16x128xbf16>, vector<128x280xbf16>, vector<16x280xf32> -> vector<16x280xf32>
    %16 = arith.addf %12, %15 : vector<16x280xf32>
    %c3 = arith.constant 3 : index
    %c0_12 = arith.constant 0 : index
    %c0_13 = arith.constant 0 : index
    %17 = vector.load %arg2[%c3, %c0_12, %c0_13] : memref<5x128x280xbf16, #tpu.memory_space<vmem>>, vector<1x128x280xbf16>
    %18 = vector.shape_cast %17 : vector<1x128x280xbf16> to vector<128x280xbf16>
    %cst_14 = arith.constant dense<0.000000e+00> : vector<16x280xf32>
    %19 = tpu.matmul %4, %18, %cst_14 {dimension_numbers = #tpu.dot_dimension_numbers<[1], [0], [0], [1], [0, 0, 1, 1], [], []>} : vector<16x128xbf16>, vector<128x280xbf16>, vector<16x280xf32> -> vector<16x280xf32>
    %20 = arith.addf %16, %19 : vector<16x280xf32>
    %21 = vector.extract_strided_slice %1 {offsets = [1, 0], sizes = [15, 128], strides = [1, 1]} : vector<16x128xbf16> to vector<15x128xbf16>
    %22 = vector.extract_strided_slice %1 {offsets = [0, 0], sizes = [1, 128], strides = [1, 1]} : vector<16x128xbf16> to vector<1x128xbf16>
    %23 = tpu.concatenate %21, %22 in 0 : vector<15x128xbf16>, vector<1x128xbf16> -> vector<16x128xbf16>
    %c4 = arith.constant 4 : index
    %c0_15 = arith.constant 0 : index
    %c0_16 = arith.constant 0 : index
    %24 = vector.load %arg2[%c4, %c0_15, %c0_16] : memref<5x128x280xbf16, #tpu.memory_space<vmem>>, vector<1x128x280xbf16>
    %25 = vector.shape_cast %24 : vector<1x128x280xbf16> to vector<128x280xbf16>
    %cst_17 = arith.constant dense<0.000000e+00> : vector<16x280xf32>
    %26 = tpu.matmul %23, %25, %cst_17 {dimension_numbers = #tpu.dot_dimension_numbers<[1], [0], [0], [1], [0, 0, 1, 1], [], []>} : vector<16x128xbf16>, vector<128x280xbf16>, vector<16x280xf32> -> vector<16x280xf32>
    %27 = arith.addf %20, %26 : vector<16x280xf32>
    %c0_18 = arith.constant 0 : index
    %c0_19 = arith.constant 0 : index
    %c0_20 = arith.constant 0 : index
    %28 = vector.load %arg2[%c0_18, %c0_19, %c0_20] : memref<5x128x280xbf16, #tpu.memory_space<vmem>>, vector<1x128x280xbf16>
    %29 = vector.shape_cast %28 : vector<1x128x280xbf16> to vector<128x280xbf16>
    %cst_21 = arith.constant dense<0.000000e+00> : vector<16x280xf32>
    %30 = tpu.matmul %2, %29, %cst_21 {dimension_numbers = #tpu.dot_dimension_numbers<[1], [0], [0], [1], [0, 0, 1, 1], [], []>} : vector<16x128xbf16>, vector<128x280xbf16>, vector<16x280xf32> -> vector<16x280xf32>
    %c1_22 = arith.constant 1 : index
    %c0_23 = arith.constant 0 : index
    %c0_24 = arith.constant 0 : index
    %31 = vector.load %arg2[%c1_22, %c0_23, %c0_24] : memref<5x128x280xbf16, #tpu.memory_space<vmem>>, vector<1x128x280xbf16>
    %32 = vector.shape_cast %31 : vector<1x128x280xbf16> to vector<128x280xbf16>
    %cst_25 = arith.constant dense<0.000000e+00> : vector<16x280xf32>
    %33 = tpu.matmul %3, %32, %cst_25 {dimension_numbers = #tpu.dot_dimension_numbers<[1], [0], [0], [1], [0, 0, 1, 1], [], []>} : vector<16x128xbf16>, vector<128x280xbf16>, vector<16x280xf32> -> vector<16x280xf32>
    %34 = arith.addf %30, %33 : vector<16x280xf32>
    %c2_26 = arith.constant 2 : index
    %c0_27 = arith.constant 0 : index
    %c0_28 = arith.constant 0 : index
    %35 = vector.load %arg2[%c2_26, %c0_27, %c0_28] : memref<5x128x280xbf16, #tpu.memory_space<vmem>>, vector<1x128x280xbf16>
    %36 = vector.shape_cast %35 : vector<1x128x280xbf16> to vector<128x280xbf16>
    %cst_29 = arith.constant dense<0.000000e+00> : vector<16x280xf32>
    %37 = tpu.matmul %4, %36, %cst_29 {dimension_numbers = #tpu.dot_dimension_numbers<[1], [0], [0], [1], [0, 0, 1, 1], [], []>} : vector<16x128xbf16>, vector<128x280xbf16>, vector<16x280xf32> -> vector<16x280xf32>
    %38 = arith.addf %34, %37 : vector<16x280xf32>
    %39 = vector.extract_strided_slice %1 {offsets = [1, 0], sizes = [15, 128], strides = [1, 1]} : vector<16x128xbf16> to vector<15x128xbf16>
    %40 = vector.extract_strided_slice %1 {offsets = [0, 0], sizes = [1, 128], strides = [1, 1]} : vector<16x128xbf16> to vector<1x128xbf16>
    %41 = tpu.concatenate %39, %40 in 0 : vector<15x128xbf16>, vector<1x128xbf16> -> vector<16x128xbf16>
    %c3_30 = arith.constant 3 : index
    %c0_31 = arith.constant 0 : index
    %c0_32 = arith.constant 0 : index
    %42 = vector.load %arg2[%c3_30, %c0_31, %c0_32] : memref<5x128x280xbf16, #tpu.memory_space<vmem>>, vector<1x128x280xbf16>
    %43 = vector.shape_cast %42 : vector<1x128x280xbf16> to vector<128x280xbf16>
    %cst_33 = arith.constant dense<0.000000e+00> : vector<16x280xf32>
    %44 = tpu.matmul %41, %43, %cst_33 {dimension_numbers = #tpu.dot_dimension_numbers<[1], [0], [0], [1], [0, 0, 1, 1], [], []>} : vector<16x128xbf16>, vector<128x280xbf16>, vector<16x280xf32> -> vector<16x280xf32>
    %45 = arith.addf %38, %44 : vector<16x280xf32>
    %46 = vector.extract_strided_slice %2 {offsets = [1, 0], sizes = [15, 128], strides = [1, 1]} : vector<16x128xbf16> to vector<15x128xbf16>
    %47 = vector.extract_strided_slice %2 {offsets = [0, 0], sizes = [1, 128], strides = [1, 1]} : vector<16x128xbf16> to vector<1x128xbf16>
    %48 = tpu.concatenate %46, %47 in 0 : vector<15x128xbf16>, vector<1x128xbf16> -> vector<16x128xbf16>
    %c4_34 = arith.constant 4 : index
    %c0_35 = arith.constant 0 : index
    %c0_36 = arith.constant 0 : index
    %49 = vector.load %arg2[%c4_34, %c0_35, %c0_36] : memref<5x128x280xbf16, #tpu.memory_space<vmem>>, vector<1x128x280xbf16>
    %50 = vector.shape_cast %49 : vector<1x128x280xbf16> to vector<128x280xbf16>
    %cst_37 = arith.constant dense<0.000000e+00> : vector<16x280xf32>
    %51 = tpu.matmul %48, %50, %cst_37 {dimension_numbers = #tpu.dot_dimension_numbers<[1], [0], [0], [1], [0, 0, 1, 1], [], []>} : vector<16x128xbf16>, vector<128x280xbf16>, vector<16x280xf32> -> vector<16x280xf32>
    %52 = arith.addf %45, %51 : vector<16x280xf32>
    %53 = arith.maximumf %27, %52 : vector<16x280xf32>
    %54 = vector.extract_strided_slice %53 {offsets = [0, 0], sizes = [16, 140], strides = [1, 1]} : vector<16x280xf32> to vector<16x140xf32>
    %55 = vector.extract_strided_slice %53 {offsets = [0, 140], sizes = [16, 140], strides = [1, 1]} : vector<16x280xf32> to vector<16x140xf32>
    %56 = arith.maximumf %54, %55 : vector<16x140xf32>
    %57 = vector.broadcast %5 : vector<1x140xf32> to vector<16x140xf32>
    %58 = arith.addf %56, %57 : vector<16x140xf32>
    %cst_38 = arith.constant 0.000000e+00 : f32
    %59 = vector.broadcast %cst_38 : f32 to vector<16x140xf32>
    %60 = arith.maximumf %58, %59 : vector<16x140xf32>
    %61 = arith.truncf %60 : vector<16x140xf32> to vector<16x140xbf16>
    %c0_39 = arith.constant 0 : index
    %c0_40 = arith.constant 0 : index
    %c0_41 = arith.constant 0 : index
    %62 = vector.load %arg2[%c0_39, %c0_40, %c0_41] : memref<5x128x280xbf16, #tpu.memory_space<vmem>>, vector<1x128x280xbf16>
    %63 = vector.shape_cast %62 : vector<1x128x280xbf16> to vector<128x280xbf16>
    %cst_42 = arith.constant dense<0.000000e+00> : vector<16x280xf32>
    %64 = tpu.matmul %3, %63, %cst_42 {dimension_numbers = #tpu.dot_dimension_numbers<[1], [0], [0], [1], [0, 0, 1, 1], [], []>} : vector<16x128xbf16>, vector<128x280xbf16>, vector<16x280xf32> -> vector<16x280xf32>
    %c1_43 = arith.constant 1 : index
    %c0_44 = arith.constant 0 : index
    %c0_45 = arith.constant 0 : index
    %65 = vector.load %arg2[%c1_43, %c0_44, %c0_45] : memref<5x128x280xbf16, #tpu.memory_space<vmem>>, vector<1x128x280xbf16>
    %66 = vector.shape_cast %65 : vector<1x128x280xbf16> to vector<128x280xbf16>
    %cst_46 = arith.constant dense<0.000000e+00> : vector<16x280xf32>
    %67 = tpu.matmul %4, %66, %cst_46 {dimension_numbers = #tpu.dot_dimension_numbers<[1], [0], [0], [1], [0, 0, 1, 1], [], []>} : vector<16x128xbf16>, vector<128x280xbf16>, vector<16x280xf32> -> vector<16x280xf32>
    %68 = arith.addf %64, %67 : vector<16x280xf32>
    %69 = vector.extract_strided_slice %1 {offsets = [1, 0], sizes = [15, 128], strides = [1, 1]} : vector<16x128xbf16> to vector<15x128xbf16>
    %70 = vector.extract_strided_slice %1 {offsets = [0, 0], sizes = [1, 128], strides = [1, 1]} : vector<16x128xbf16> to vector<1x128xbf16>
    %71 = tpu.concatenate %69, %70 in 0 : vector<15x128xbf16>, vector<1x128xbf16> -> vector<16x128xbf16>
    %c2_47 = arith.constant 2 : index
    %c0_48 = arith.constant 0 : index
    %c0_49 = arith.constant 0 : index
    %72 = vector.load %arg2[%c2_47, %c0_48, %c0_49] : memref<5x128x280xbf16, #tpu.memory_space<vmem>>, vector<1x128x280xbf16>
    %73 = vector.shape_cast %72 : vector<1x128x280xbf16> to vector<128x280xbf16>
    %cst_50 = arith.constant dense<0.000000e+00> : vector<16x280xf32>
    %74 = tpu.matmul %71, %73, %cst_50 {dimension_numbers = #tpu.dot_dimension_numbers<[1], [0], [0], [1], [0, 0, 1, 1], [], []>} : vector<16x128xbf16>, vector<128x280xbf16>, vector<16x280xf32> -> vector<16x280xf32>
    %75 = arith.addf %68, %74 : vector<16x280xf32>
    %76 = vector.extract_strided_slice %2 {offsets = [1, 0], sizes = [15, 128], strides = [1, 1]} : vector<16x128xbf16> to vector<15x128xbf16>
    %77 = vector.extract_strided_slice %2 {offsets = [0, 0], sizes = [1, 128], strides = [1, 1]} : vector<16x128xbf16> to vector<1x128xbf16>
    %78 = tpu.concatenate %76, %77 in 0 : vector<15x128xbf16>, vector<1x128xbf16> -> vector<16x128xbf16>
    %c3_51 = arith.constant 3 : index
    %c0_52 = arith.constant 0 : index
    %c0_53 = arith.constant 0 : index
    %79 = vector.load %arg2[%c3_51, %c0_52, %c0_53] : memref<5x128x280xbf16, #tpu.memory_space<vmem>>, vector<1x128x280xbf16>
    %80 = vector.shape_cast %79 : vector<1x128x280xbf16> to vector<128x280xbf16>
    %cst_54 = arith.constant dense<0.000000e+00> : vector<16x280xf32>
    %81 = tpu.matmul %78, %80, %cst_54 {dimension_numbers = #tpu.dot_dimension_numbers<[1], [0], [0], [1], [0, 0, 1, 1], [], []>} : vector<16x128xbf16>, vector<128x280xbf16>, vector<16x280xf32> -> vector<16x280xf32>
    %82 = arith.addf %75, %81 : vector<16x280xf32>
    %83 = vector.extract_strided_slice %3 {offsets = [1, 0], sizes = [15, 128], strides = [1, 1]} : vector<16x128xbf16> to vector<15x128xbf16>
    %84 = vector.extract_strided_slice %3 {offsets = [0, 0], sizes = [1, 128], strides = [1, 1]} : vector<16x128xbf16> to vector<1x128xbf16>
    %85 = tpu.concatenate %83, %84 in 0 : vector<15x128xbf16>, vector<1x128xbf16> -> vector<16x128xbf16>
    %c4_55 = arith.constant 4 : index
    %c0_56 = arith.constant 0 : index
    %c0_57 = arith.constant 0 : index
    %86 = vector.load %arg2[%c4_55, %c0_56, %c0_57] : memref<5x128x280xbf16, #tpu.memory_space<vmem>>, vector<1x128x280xbf16>
    %87 = vector.shape_cast %86 : vector<1x128x280xbf16> to vector<128x280xbf16>
    %cst_58 = arith.constant dense<0.000000e+00> : vector<16x280xf32>
    %88 = tpu.matmul %85, %87, %cst_58 {dimension_numbers = #tpu.dot_dimension_numbers<[1], [0], [0], [1], [0, 0, 1, 1], [], []>} : vector<16x128xbf16>, vector<128x280xbf16>, vector<16x280xf32> -> vector<16x280xf32>
    %89 = arith.addf %82, %88 : vector<16x280xf32>
    %c0_59 = arith.constant 0 : index
    %c0_60 = arith.constant 0 : index
    %c0_61 = arith.constant 0 : index
    %90 = vector.load %arg2[%c0_59, %c0_60, %c0_61] : memref<5x128x280xbf16, #tpu.memory_space<vmem>>, vector<1x128x280xbf16>
    %91 = vector.shape_cast %90 : vector<1x128x280xbf16> to vector<128x280xbf16>
    %cst_62 = arith.constant dense<0.000000e+00> : vector<16x280xf32>
    %92 = tpu.matmul %4, %91, %cst_62 {dimension_numbers = #tpu.dot_dimension_numbers<[1], [0], [0], [1], [0, 0, 1, 1], [], []>} : vector<16x128xbf16>, vector<128x280xbf16>, vector<16x280xf32> -> vector<16x280xf32>
    %93 = vector.extract_strided_slice %1 {offsets = [1, 0], sizes = [15, 128], strides = [1, 1]} : vector<16x128xbf16> to vector<15x128xbf16>
    %94 = vector.extract_strided_slice %1 {offsets = [0, 0], sizes = [1, 128], strides = [1, 1]} : vector<16x128xbf16> to vector<1x128xbf16>
    %95 = tpu.concatenate %93, %94 in 0 : vector<15x128xbf16>, vector<1x128xbf16> -> vector<16x128xbf16>
    %c1_63 = arith.constant 1 : index
    %c0_64 = arith.constant 0 : index
    %c0_65 = arith.constant 0 : index
    %96 = vector.load %arg2[%c1_63, %c0_64, %c0_65] : memref<5x128x280xbf16, #tpu.memory_space<vmem>>, vector<1x128x280xbf16>
    %97 = vector.shape_cast %96 : vector<1x128x280xbf16> to vector<128x280xbf16>
    %cst_66 = arith.constant dense<0.000000e+00> : vector<16x280xf32>
    %98 = tpu.matmul %95, %97, %cst_66 {dimension_numbers = #tpu.dot_dimension_numbers<[1], [0], [0], [1], [0, 0, 1, 1], [], []>} : vector<16x128xbf16>, vector<128x280xbf16>, vector<16x280xf32> -> vector<16x280xf32>
    %99 = arith.addf %92, %98 : vector<16x280xf32>
    %100 = vector.extract_strided_slice %2 {offsets = [1, 0], sizes = [15, 128], strides = [1, 1]} : vector<16x128xbf16> to vector<15x128xbf16>
    %101 = vector.extract_strided_slice %2 {offsets = [0, 0], sizes = [1, 128], strides = [1, 1]} : vector<16x128xbf16> to vector<1x128xbf16>
    %102 = tpu.concatenate %100, %101 in 0 : vector<15x128xbf16>, vector<1x128xbf16> -> vector<16x128xbf16>
    %c2_67 = arith.constant 2 : index
    %c0_68 = arith.constant 0 : index
    %c0_69 = arith.constant 0 : index
    %103 = vector.load %arg2[%c2_67, %c0_68, %c0_69] : memref<5x128x280xbf16, #tpu.memory_space<vmem>>, vector<1x128x280xbf16>
    %104 = vector.shape_cast %103 : vector<1x128x280xbf16> to vector<128x280xbf16>
    %cst_70 = arith.constant dense<0.000000e+00> : vector<16x280xf32>
    %105 = tpu.matmul %102, %104, %cst_70 {dimension_numbers = #tpu.dot_dimension_numbers<[1], [0], [0], [1], [0, 0, 1, 1], [], []>} : vector<16x128xbf16>, vector<128x280xbf16>, vector<16x280xf32> -> vector<16x280xf32>
    %106 = arith.addf %99, %105 : vector<16x280xf32>
    %107 = vector.extract_strided_slice %3 {offsets = [1, 0], sizes = [15, 128], strides = [1, 1]} : vector<16x128xbf16> to vector<15x128xbf16>
    %108 = vector.extract_strided_slice %3 {offsets = [0, 0], sizes = [1, 128], strides = [1, 1]} : vector<16x128xbf16> to vector<1x128xbf16>
    %109 = tpu.concatenate %107, %108 in 0 : vector<15x128xbf16>, vector<1x128xbf16> -> vector<16x128xbf16>
    %c3_71 = arith.constant 3 : index
    %c0_72 = arith.constant 0 : index
    %c0_73 = arith.constant 0 : index
    %110 = vector.load %arg2[%c3_71, %c0_72, %c0_73] : memref<5x128x280xbf16, #tpu.memory_space<vmem>>, vector<1x128x280xbf16>
    %111 = vector.shape_cast %110 : vector<1x128x280xbf16> to vector<128x280xbf16>
    %cst_74 = arith.constant dense<0.000000e+00> : vector<16x280xf32>
    %112 = tpu.matmul %109, %111, %cst_74 {dimension_numbers = #tpu.dot_dimension_numbers<[1], [0], [0], [1], [0, 0, 1, 1], [], []>} : vector<16x128xbf16>, vector<128x280xbf16>, vector<16x280xf32> -> vector<16x280xf32>
    %113 = arith.addf %106, %112 : vector<16x280xf32>
    %114 = vector.extract_strided_slice %4 {offsets = [1, 0], sizes = [15, 128], strides = [1, 1]} : vector<16x128xbf16> to vector<15x128xbf16>
    %115 = vector.extract_strided_slice %4 {offsets = [0, 0], sizes = [1, 128], strides = [1, 1]} : vector<16x128xbf16> to vector<1x128xbf16>
    %116 = tpu.concatenate %114, %115 in 0 : vector<15x128xbf16>, vector<1x128xbf16> -> vector<16x128xbf16>
    %c4_75 = arith.constant 4 : index
    %c0_76 = arith.constant 0 : index
    %c0_77 = arith.constant 0 : index
    %117 = vector.load %arg2[%c4_75, %c0_76, %c0_77] : memref<5x128x280xbf16, #tpu.memory_space<vmem>>, vector<1x128x280xbf16>
    %118 = vector.shape_cast %117 : vector<1x128x280xbf16> to vector<128x280xbf16>
    %cst_78 = arith.constant dense<0.000000e+00> : vector<16x280xf32>
    %119 = tpu.matmul %116, %118, %cst_78 {dimension_numbers = #tpu.dot_dimension_numbers<[1], [0], [0], [1], [0, 0, 1, 1], [], []>} : vector<16x128xbf16>, vector<128x280xbf16>, vector<16x280xf32> -> vector<16x280xf32>
    %120 = arith.addf %113, %119 : vector<16x280xf32>
    %121 = arith.maximumf %89, %120 : vector<16x280xf32>
    %122 = vector.extract_strided_slice %121 {offsets = [0, 0], sizes = [16, 140], strides = [1, 1]} : vector<16x280xf32> to vector<16x140xf32>
    %123 = vector.extract_strided_slice %121 {offsets = [0, 140], sizes = [16, 140], strides = [1, 1]} : vector<16x280xf32> to vector<16x140xf32>
    %124 = arith.maximumf %122, %123 : vector<16x140xf32>
    %125 = vector.broadcast %5 : vector<1x140xf32> to vector<16x140xf32>
    %126 = arith.addf %124, %125 : vector<16x140xf32>
    %cst_79 = arith.constant 0.000000e+00 : f32
    %127 = vector.broadcast %cst_79 : f32 to vector<16x140xf32>
    %128 = arith.maximumf %126, %127 : vector<16x140xf32>
    %129 = arith.truncf %128 : vector<16x140xf32> to vector<16x140xbf16>
    %c0_80 = arith.constant 0 : index
    %c0_81 = arith.constant 0 : index
    %130 = vector.load %arg8[%c0_80, %c0_81] : memref<1x100xf32, #tpu.memory_space<vmem>>, vector<1x100xf32>
    %c0_82 = arith.constant 0 : index
    %c0_83 = arith.constant 0 : index
    %c0_84 = arith.constant 0 : index
    %131 = vector.load %arg3[%c0_82, %c0_83, %c0_84] : memref<5x140x200xbf16, #tpu.memory_space<vmem>>, vector<1x140x200xbf16>
    %132 = vector.shape_cast %131 : vector<1x140x200xbf16> to vector<140x200xbf16>
    %cst_85 = arith.constant dense<0.000000e+00> : vector<16x200xf32>
    %133 = tpu.matmul %61, %132, %cst_85 {dimension_numbers = #tpu.dot_dimension_numbers<[1], [0], [0], [1], [0, 0, 1, 1], [], []>} : vector<16x140xbf16>, vector<140x200xbf16>, vector<16x200xf32> -> vector<16x200xf32>
    %c1_86 = arith.constant 1 : index
    %c0_87 = arith.constant 0 : index
    %c0_88 = arith.constant 0 : index
    %134 = vector.load %arg3[%c1_86, %c0_87, %c0_88] : memref<5x140x200xbf16, #tpu.memory_space<vmem>>, vector<1x140x200xbf16>
    %135 = vector.shape_cast %134 : vector<1x140x200xbf16> to vector<140x200xbf16>
    %cst_89 = arith.constant dense<0.000000e+00> : vector<16x200xf32>
    %136 = tpu.matmul %129, %135, %cst_89 {dimension_numbers = #tpu.dot_dimension_numbers<[1], [0], [0], [1], [0, 0, 1, 1], [], []>} : vector<16x140xbf16>, vector<140x200xbf16>, vector<16x200xf32> -> vector<16x200xf32>
    %137 = arith.addf %133, %136 : vector<16x200xf32>
    %138 = vector.extract_strided_slice %61 {offsets = [1, 0], sizes = [15, 140], strides = [1, 1]} : vector<16x140xbf16> to vector<15x140xbf16>
    %139 = vector.extract_strided_slice %61 {offsets = [0, 0], sizes = [1, 140], strides = [1, 1]} : vector<16x140xbf16> to vector<1x140xbf16>
    %140 = tpu.concatenate %138, %139 in 0 : vector<15x140xbf16>, vector<1x140xbf16> -> vector<16x140xbf16>
    %c2_90 = arith.constant 2 : index
    %c0_91 = arith.constant 0 : index
    %c0_92 = arith.constant 0 : index
    %141 = vector.load %arg3[%c2_90, %c0_91, %c0_92] : memref<5x140x200xbf16, #tpu.memory_space<vmem>>, vector<1x140x200xbf16>
    %142 = vector.shape_cast %141 : vector<1x140x200xbf16> to vector<140x200xbf16>
    %cst_93 = arith.constant dense<0.000000e+00> : vector<16x200xf32>
    %143 = tpu.matmul %140, %142, %cst_93 {dimension_numbers = #tpu.dot_dimension_numbers<[1], [0], [0], [1], [0, 0, 1, 1], [], []>} : vector<16x140xbf16>, vector<140x200xbf16>, vector<16x200xf32> -> vector<16x200xf32>
    %144 = arith.addf %137, %143 : vector<16x200xf32>
    %145 = vector.extract_strided_slice %129 {offsets = [1, 0], sizes = [15, 140], strides = [1, 1]} : vector<16x140xbf16> to vector<15x140xbf16>
    %146 = vector.extract_strided_slice %129 {offsets = [0, 0], sizes = [1, 140], strides = [1, 1]} : vector<16x140xbf16> to vector<1x140xbf16>
    %147 = tpu.concatenate %145, %146 in 0 : vector<15x140xbf16>, vector<1x140xbf16> -> vector<16x140xbf16>
    %c3_94 = arith.constant 3 : index
    %c0_95 = arith.constant 0 : index
    %c0_96 = arith.constant 0 : index
    %148 = vector.load %arg3[%c3_94, %c0_95, %c0_96] : memref<5x140x200xbf16, #tpu.memory_space<vmem>>, vector<1x140x200xbf16>
    %149 = vector.shape_cast %148 : vector<1x140x200xbf16> to vector<140x200xbf16>
    %cst_97 = arith.constant dense<0.000000e+00> : vector<16x200xf32>
    %150 = tpu.matmul %147, %149, %cst_97 {dimension_numbers = #tpu.dot_dimension_numbers<[1], [0], [0], [1], [0, 0, 1, 1], [], []>} : vector<16x140xbf16>, vector<140x200xbf16>, vector<16x200xf32> -> vector<16x200xf32>
    %151 = arith.addf %144, %150 : vector<16x200xf32>
    %152 = vector.extract_strided_slice %61 {offsets = [2, 0], sizes = [14, 140], strides = [1, 1]} : vector<16x140xbf16> to vector<14x140xbf16>
    %153 = vector.extract_strided_slice %61 {offsets = [0, 0], sizes = [2, 140], strides = [1, 1]} : vector<16x140xbf16> to vector<2x140xbf16>
    %154 = tpu.concatenate %152, %153 in 0 : vector<14x140xbf16>, vector<2x140xbf16> -> vector<16x140xbf16>
    %c4_98 = arith.constant 4 : index
    %c0_99 = arith.constant 0 : index
    %c0_100 = arith.constant 0 : index
    %155 = vector.load %arg3[%c4_98, %c0_99, %c0_100] : memref<5x140x200xbf16, #tpu.memory_space<vmem>>, vector<1x140x200xbf16>
    %156 = vector.shape_cast %155 : vector<1x140x200xbf16> to vector<140x200xbf16>
    %cst_101 = arith.constant dense<0.000000e+00> : vector<16x200xf32>
    %157 = tpu.matmul %154, %156, %cst_101 {dimension_numbers = #tpu.dot_dimension_numbers<[1], [0], [0], [1], [0, 0, 1, 1], [], []>} : vector<16x140xbf16>, vector<140x200xbf16>, vector<16x200xf32> -> vector<16x200xf32>
    %158 = arith.addf %151, %157 : vector<16x200xf32>
    %c0_102 = arith.constant 0 : index
    %c0_103 = arith.constant 0 : index
    %c0_104 = arith.constant 0 : index
    %159 = vector.load %arg3[%c0_102, %c0_103, %c0_104] : memref<5x140x200xbf16, #tpu.memory_space<vmem>>, vector<1x140x200xbf16>
    %160 = vector.shape_cast %159 : vector<1x140x200xbf16> to vector<140x200xbf16>
    %cst_105 = arith.constant dense<0.000000e+00> : vector<16x200xf32>
    %161 = tpu.matmul %129, %160, %cst_105 {dimension_numbers = #tpu.dot_dimension_numbers<[1], [0], [0], [1], [0, 0, 1, 1], [], []>} : vector<16x140xbf16>, vector<140x200xbf16>, vector<16x200xf32> -> vector<16x200xf32>
    %162 = vector.extract_strided_slice %61 {offsets = [1, 0], sizes = [15, 140], strides = [1, 1]} : vector<16x140xbf16> to vector<15x140xbf16>
    %163 = vector.extract_strided_slice %61 {offsets = [0, 0], sizes = [1, 140], strides = [1, 1]} : vector<16x140xbf16> to vector<1x140xbf16>
    %164 = tpu.concatenate %162, %163 in 0 : vector<15x140xbf16>, vector<1x140xbf16> -> vector<16x140xbf16>
    %c1_106 = arith.constant 1 : index
    %c0_107 = arith.constant 0 : index
    %c0_108 = arith.constant 0 : index
    %165 = vector.load %arg3[%c1_106, %c0_107, %c0_108] : memref<5x140x200xbf16, #tpu.memory_space<vmem>>, vector<1x140x200xbf16>
    %166 = vector.shape_cast %165 : vector<1x140x200xbf16> to vector<140x200xbf16>
    %cst_109 = arith.constant dense<0.000000e+00> : vector<16x200xf32>
    %167 = tpu.matmul %164, %166, %cst_109 {dimension_numbers = #tpu.dot_dimension_numbers<[1], [0], [0], [1], [0, 0, 1, 1], [], []>} : vector<16x140xbf16>, vector<140x200xbf16>, vector<16x200xf32> -> vector<16x200xf32>
    %168 = arith.addf %161, %167 : vector<16x200xf32>
    %169 = vector.extract_strided_slice %129 {offsets = [1, 0], sizes = [15, 140], strides = [1, 1]} : vector<16x140xbf16> to vector<15x140xbf16>
    %170 = vector.extract_strided_slice %129 {offsets = [0, 0], sizes = [1, 140], strides = [1, 1]} : vector<16x140xbf16> to vector<1x140xbf16>
    %171 = tpu.concatenate %169, %170 in 0 : vector<15x140xbf16>, vector<1x140xbf16> -> vector<16x140xbf16>
    %c2_110 = arith.constant 2 : index
    %c0_111 = arith.constant 0 : index
    %c0_112 = arith.constant 0 : index
    %172 = vector.load %arg3[%c2_110, %c0_111, %c0_112] : memref<5x140x200xbf16, #tpu.memory_space<vmem>>, vector<1x140x200xbf16>
    %173 = vector.shape_cast %172 : vector<1x140x200xbf16> to vector<140x200xbf16>
    %cst_113 = arith.constant dense<0.000000e+00> : vector<16x200xf32>
    %174 = tpu.matmul %171, %173, %cst_113 {dimension_numbers = #tpu.dot_dimension_numbers<[1], [0], [0], [1], [0, 0, 1, 1], [], []>} : vector<16x140xbf16>, vector<140x200xbf16>, vector<16x200xf32> -> vector<16x200xf32>
    %175 = arith.addf %168, %174 : vector<16x200xf32>
    %176 = vector.extract_strided_slice %61 {offsets = [2, 0], sizes = [14, 140], strides = [1, 1]} : vector<16x140xbf16> to vector<14x140xbf16>
    %177 = vector.extract_strided_slice %61 {offsets = [0, 0], sizes = [2, 140], strides = [1, 1]} : vector<16x140xbf16> to vector<2x140xbf16>
    %178 = tpu.concatenate %176, %177 in 0 : vector<14x140xbf16>, vector<2x140xbf16> -> vector<16x140xbf16>
    %c3_114 = arith.constant 3 : index
    %c0_115 = arith.constant 0 : index
    %c0_116 = arith.constant 0 : index
    %179 = vector.load %arg3[%c3_114, %c0_115, %c0_116] : memref<5x140x200xbf16, #tpu.memory_space<vmem>>, vector<1x140x200xbf16>
    %180 = vector.shape_cast %179 : vector<1x140x200xbf16> to vector<140x200xbf16>
    %cst_117 = arith.constant dense<0.000000e+00> : vector<16x200xf32>
    %181 = tpu.matmul %178, %180, %cst_117 {dimension_numbers = #tpu.dot_dimension_numbers<[1], [0], [0], [1], [0, 0, 1, 1], [], []>} : vector<16x140xbf16>, vector<140x200xbf16>, vector<16x200xf32> -> vector<16x200xf32>
    %182 = arith.addf %175, %181 : vector<16x200xf32>
    %183 = vector.extract_strided_slice %129 {offsets = [2, 0], sizes = [14, 140], strides = [1, 1]} : vector<16x140xbf16> to vector<14x140xbf16>
    %184 = vector.extract_strided_slice %129 {offsets = [0, 0], sizes = [2, 140], strides = [1, 1]} : vector<16x140xbf16> to vector<2x140xbf16>
    %185 = tpu.concatenate %183, %184 in 0 : vector<14x140xbf16>, vector<2x140xbf16> -> vector<16x140xbf16>
    %c4_118 = arith.constant 4 : index
    %c0_119 = arith.constant 0 : index
    %c0_120 = arith.constant 0 : index
    %186 = vector.load %arg3[%c4_118, %c0_119, %c0_120] : memref<5x140x200xbf16, #tpu.memory_space<vmem>>, vector<1x140x200xbf16>
    %187 = vector.shape_cast %186 : vector<1x140x200xbf16> to vector<140x200xbf16>
    %cst_121 = arith.constant dense<0.000000e+00> : vector<16x200xf32>
    %188 = tpu.matmul %185, %187, %cst_121 {dimension_numbers = #tpu.dot_dimension_numbers<[1], [0], [0], [1], [0, 0, 1, 1], [], []>} : vector<16x140xbf16>, vector<140x200xbf16>, vector<16x200xf32> -> vector<16x200xf32>
    %189 = arith.addf %182, %188 : vector<16x200xf32>
    %190 = arith.maximumf %158, %189 : vector<16x200xf32>
    %191 = vector.extract_strided_slice %190 {offsets = [0, 0], sizes = [16, 100], strides = [1, 1]} : vector<16x200xf32> to vector<16x100xf32>
    %192 = vector.extract_strided_slice %190 {offsets = [0, 100], sizes = [16, 100], strides = [1, 1]} : vector<16x200xf32> to vector<16x100xf32>
    %193 = arith.maximumf %191, %192 : vector<16x100xf32>
    %194 = vector.broadcast %130 : vector<1x100xf32> to vector<16x100xf32>
    %195 = arith.addf %193, %194 : vector<16x100xf32>
    %cst_122 = arith.constant 0.000000e+00 : f32
    %196 = vector.broadcast %cst_122 : f32 to vector<16x100xf32>
    %197 = arith.maximumf %195, %196 : vector<16x100xf32>
    %198 = arith.truncf %197 : vector<16x100xf32> to vector<16x100xbf16>
    %c0_123 = arith.constant 0 : index
    %c0_124 = arith.constant 0 : index
    %199 = vector.load %arg4[%c0_123, %c0_124] : memref<100x600xbf16, #tpu.memory_space<vmem>>, vector<100x600xbf16>
    %200 = vector.extract_strided_slice %199 {offsets = [0, 0], sizes = [100, 120], strides = [1, 1]} : vector<100x600xbf16> to vector<100x120xbf16>
    %cst_125 = arith.constant dense<0.000000e+00> : vector<16x120xf32>
    %201 = tpu.matmul %198, %200, %cst_125 {dimension_numbers = #tpu.dot_dimension_numbers<[1], [0], [0], [1], [0, 0, 1, 1], [], []>} : vector<16x100xbf16>, vector<100x120xbf16>, vector<16x120xf32> -> vector<16x120xf32>
    %202 = vector.extract_strided_slice %198 {offsets = [1, 0], sizes = [15, 100], strides = [1, 1]} : vector<16x100xbf16> to vector<15x100xbf16>
    %203 = vector.extract_strided_slice %198 {offsets = [0, 0], sizes = [1, 100], strides = [1, 1]} : vector<16x100xbf16> to vector<1x100xbf16>
    %204 = tpu.concatenate %202, %203 in 0 : vector<15x100xbf16>, vector<1x100xbf16> -> vector<16x100xbf16>
    %205 = vector.extract_strided_slice %199 {offsets = [0, 120], sizes = [100, 120], strides = [1, 1]} : vector<100x600xbf16> to vector<100x120xbf16>
    %cst_126 = arith.constant dense<0.000000e+00> : vector<16x120xf32>
    %206 = tpu.matmul %204, %205, %cst_126 {dimension_numbers = #tpu.dot_dimension_numbers<[1], [0], [0], [1], [0, 0, 1, 1], [], []>} : vector<16x100xbf16>, vector<100x120xbf16>, vector<16x120xf32> -> vector<16x120xf32>
    %207 = arith.addf %201, %206 : vector<16x120xf32>
    %208 = vector.extract_strided_slice %198 {offsets = [2, 0], sizes = [14, 100], strides = [1, 1]} : vector<16x100xbf16> to vector<14x100xbf16>
    %209 = vector.extract_strided_slice %198 {offsets = [0, 0], sizes = [2, 100], strides = [1, 1]} : vector<16x100xbf16> to vector<2x100xbf16>
    %210 = tpu.concatenate %208, %209 in 0 : vector<14x100xbf16>, vector<2x100xbf16> -> vector<16x100xbf16>
    %211 = vector.extract_strided_slice %199 {offsets = [0, 240], sizes = [100, 120], strides = [1, 1]} : vector<100x600xbf16> to vector<100x120xbf16>
    %cst_127 = arith.constant dense<0.000000e+00> : vector<16x120xf32>
    %212 = tpu.matmul %210, %211, %cst_127 {dimension_numbers = #tpu.dot_dimension_numbers<[1], [0], [0], [1], [0, 0, 1, 1], [], []>} : vector<16x100xbf16>, vector<100x120xbf16>, vector<16x120xf32> -> vector<16x120xf32>
    %213 = arith.addf %207, %212 : vector<16x120xf32>
    %214 = vector.extract_strided_slice %198 {offsets = [3, 0], sizes = [13, 100], strides = [1, 1]} : vector<16x100xbf16> to vector<13x100xbf16>
    %215 = vector.extract_strided_slice %198 {offsets = [0, 0], sizes = [3, 100], strides = [1, 1]} : vector<16x100xbf16> to vector<3x100xbf16>
    %216 = tpu.concatenate %214, %215 in 0 : vector<13x100xbf16>, vector<3x100xbf16> -> vector<16x100xbf16>
    %217 = vector.extract_strided_slice %199 {offsets = [0, 360], sizes = [100, 120], strides = [1, 1]} : vector<100x600xbf16> to vector<100x120xbf16>
    %cst_128 = arith.constant dense<0.000000e+00> : vector<16x120xf32>
    %218 = tpu.matmul %216, %217, %cst_128 {dimension_numbers = #tpu.dot_dimension_numbers<[1], [0], [0], [1], [0, 0, 1, 1], [], []>} : vector<16x100xbf16>, vector<100x120xbf16>, vector<16x120xf32> -> vector<16x120xf32>
    %219 = arith.addf %213, %218 : vector<16x120xf32>
    %220 = vector.extract_strided_slice %198 {offsets = [4, 0], sizes = [12, 100], strides = [1, 1]} : vector<16x100xbf16> to vector<12x100xbf16>
    %221 = vector.extract_strided_slice %198 {offsets = [0, 0], sizes = [4, 100], strides = [1, 1]} : vector<16x100xbf16> to vector<4x100xbf16>
    %222 = tpu.concatenate %220, %221 in 0 : vector<12x100xbf16>, vector<4x100xbf16> -> vector<16x100xbf16>
    %223 = vector.extract_strided_slice %199 {offsets = [0, 480], sizes = [100, 120], strides = [1, 1]} : vector<100x600xbf16> to vector<100x120xbf16>
    %cst_129 = arith.constant dense<0.000000e+00> : vector<16x120xf32>
    %224 = tpu.matmul %222, %223, %cst_129 {dimension_numbers = #tpu.dot_dimension_numbers<[1], [0], [0], [1], [0, 0, 1, 1], [], []>} : vector<16x100xbf16>, vector<100x120xbf16>, vector<16x120xf32> -> vector<16x120xf32>
    %225 = arith.addf %219, %224 : vector<16x120xf32>
    %c0_130 = arith.constant 0 : index
    %c0_131 = arith.constant 0 : index
    %226 = vector.load %arg9[%c0_130, %c0_131] : memref<1x120xf32, #tpu.memory_space<vmem>>, vector<1x120xf32>
    %227 = vector.broadcast %226 : vector<1x120xf32> to vector<16x120xf32>
    %228 = arith.addf %225, %227 : vector<16x120xf32>
    %cst_132 = arith.constant 0.000000e+00 : f32
    %229 = vector.broadcast %cst_132 : f32 to vector<16x120xf32>
    %230 = arith.maximumf %228, %229 : vector<16x120xf32>
    %231 = arith.truncf %230 : vector<16x120xf32> to vector<16x120xbf16>
    %c0_133 = arith.constant 0 : index
    %c0_134 = arith.constant 0 : index
    %232 = vector.load %arg5[%c0_133, %c0_134] : memref<120x84xbf16, #tpu.memory_space<vmem>>, vector<120x84xbf16>
    %cst_135 = arith.constant dense<0.000000e+00> : vector<16x84xf32>
    %233 = tpu.matmul %231, %232, %cst_135 {dimension_numbers = #tpu.dot_dimension_numbers<[1], [0], [0], [1], [0, 0, 1, 1], [], []>} : vector<16x120xbf16>, vector<120x84xbf16>, vector<16x84xf32> -> vector<16x84xf32>
    %c0_136 = arith.constant 0 : index
    %c0_137 = arith.constant 0 : index
    %234 = vector.load %arg10[%c0_136, %c0_137] : memref<1x84xf32, #tpu.memory_space<vmem>>, vector<1x84xf32>
    %235 = vector.broadcast %234 : vector<1x84xf32> to vector<16x84xf32>
    %236 = arith.addf %233, %235 : vector<16x84xf32>
    %cst_138 = arith.constant 0.000000e+00 : f32
    %237 = vector.broadcast %cst_138 : f32 to vector<16x84xf32>
    %238 = arith.maximumf %236, %237 : vector<16x84xf32>
    %239 = arith.truncf %238 : vector<16x84xf32> to vector<16x84xbf16>
    %c0_139 = arith.constant 0 : index
    %c0_140 = arith.constant 0 : index
    %240 = vector.load %arg6[%c0_139, %c0_140] : memref<84x10xbf16, #tpu.memory_space<vmem>>, vector<84x10xbf16>
    %cst_141 = arith.constant dense<0.000000e+00> : vector<16x10xf32>
    %241 = tpu.matmul %239, %240, %cst_141 {dimension_numbers = #tpu.dot_dimension_numbers<[1], [0], [0], [1], [0, 0, 1, 1], [], []>} : vector<16x84xbf16>, vector<84x10xbf16>, vector<16x10xf32> -> vector<16x10xf32>
    %c0_142 = arith.constant 0 : index
    %c0_143 = arith.constant 0 : index
    %242 = vector.load %arg11[%c0_142, %c0_143] : memref<1x10xf32, #tpu.memory_space<vmem>>, vector<1x10xf32>
    %243 = vector.broadcast %242 : vector<1x10xf32> to vector<16x10xf32>
    %244 = arith.addf %241, %243 : vector<16x10xf32>
    %c0_144 = arith.constant 0 : index
    %c0_145 = arith.constant 0 : index
    %245 = vector.load %arg12[%c0_144, %c0_145] : memref<16x10xf32, #tpu.memory_space<vmem>>, vector<16x10xf32>
    tpu.vector_store %arg12[%c0_144, %c0_145], %244 {strides = array<i32>} : memref<16x10xf32, #tpu.memory_space<vmem>>, vector<16x10xf32>,
    return
  }
  func.func @transform_0(%arg0: i32) -> (i32, i32) {
    %c0_i32 = arith.constant 0 : i32
    %c0_i32_0 = arith.constant 0 : i32
    return %arg0, %c0_i32 : i32, i32
  }
  func.func @transform_1(%arg0: i32) -> (i32, i32, i32) {
    %c0_i32 = arith.constant 0 : i32
    %c0_i32_0 = arith.constant 0 : i32
    %c0_i32_1 = arith.constant 0 : i32
    %c0_i32_2 = arith.constant 0 : i32
    return %c0_i32, %c0_i32_0, %c0_i32_1 : i32, i32, i32
  }
  func.func @transform_2(%arg0: i32) -> (i32, i32, i32) {
    %c0_i32 = arith.constant 0 : i32
    %c0_i32_0 = arith.constant 0 : i32
    %c0_i32_1 = arith.constant 0 : i32
    %c0_i32_2 = arith.constant 0 : i32
    return %c0_i32, %c0_i32_0, %c0_i32_1 : i32, i32, i32
  }
  func.func @transform_3(%arg0: i32) -> (i32, i32) {
    %c0_i32 = arith.constant 0 : i32
    %c0_i32_0 = arith.constant 0 : i32
    %c0_i32_1 = arith.constant 0 : i32
    return %c0_i32, %c0_i32_0 : i32, i32
  }
  func.func @transform_4(%arg0: i32) -> (i32, i32) {
    %c0_i32 = arith.constant 0 : i32
    %c0_i32_0 = arith.constant 0 : i32
    %c0_i32_1 = arith.constant 0 : i32
    return %c0_i32, %c0_i32_0 : i32, i32
  }
  func.func @transform_5(%arg0: i32) -> (i32, i32) {
    %c0_i32 = arith.constant 0 : i32
    %c0_i32_0 = arith.constant 0 : i32
    %c0_i32_1 = arith.constant 0 : i32
    return %c0_i32, %c0_i32_0 : i32, i32
  }
  func.func @transform_6(%arg0: i32) -> (i32, i32) {
    %c0_i32 = arith.constant 0 : i32
    %c0_i32_0 = arith.constant 0 : i32
    %c0_i32_1 = arith.constant 0 : i32
    return %c0_i32, %c0_i32_0 : i32, i32
  }
  func.func @transform_7(%arg0: i32) -> (i32, i32) {
    %c0_i32 = arith.constant 0 : i32
    %c0_i32_0 = arith.constant 0 : i32
    %c0_i32_1 = arith.constant 0 : i32
    return %c0_i32, %c0_i32_0 : i32, i32
  }
  func.func @transform_8(%arg0: i32) -> (i32, i32) {
    %c0_i32 = arith.constant 0 : i32
    %c0_i32_0 = arith.constant 0 : i32
    %c0_i32_1 = arith.constant 0 : i32
    return %c0_i32, %c0_i32_0 : i32, i32
  }
  func.func @transform_9(%arg0: i32) -> (i32, i32) {
    %c0_i32 = arith.constant 0 : i32
    %c0_i32_0 = arith.constant 0 : i32
    %c0_i32_1 = arith.constant 0 : i32
    return %c0_i32, %c0_i32_0 : i32, i32
  }
  func.func @transform_10(%arg0: i32) -> (i32, i32) {
    %c0_i32 = arith.constant 0 : i32
    %c0_i32_0 = arith.constant 0 : i32
    %c0_i32_1 = arith.constant 0 : i32
    return %c0_i32, %c0_i32_0 : i32, i32
  }
  func.func @transform_11(%arg0: i32) -> (i32, i32) {
    %c0_i32 = arith.constant 0 : i32
    %c0_i32_0 = arith.constant 0 : i32
    return %arg0, %c0_i32 : i32, i32
  }
}

</mosaic_0001>

<llo_original>
// kernel: tile.13
$region0: #{tile.13}
  #allocation0 [shape = 's32[1]{0}', space=sflag, size = 0x4, scoped, tag = 'scoped memory for tile.13']
  %s0 = inlined_call_operand.vmem [shape: f32[10], index: 0, kind: input, shape index: {}]
  %s1 = inlined_call_operand.vmem [shape: f32[14,10], index: 1, kind: output, shape index: {}]
  // Predicated region
  $region2: #{tile.13} parent=0 // pred_check
    _
  $region3: #{tile.13} parent=0 // pred_check_branch
    %3 = sbr.rel (0) target = $region5
  $region4: #{tile.13} parent=0 // pred_region
    _
  $region5: #{tile.13} parent=0 // pred_fallthru
    _
  %v4 = vld [vmem:[%s0] ss:$0 sm:$0xff]
  %5 = vst [vmem:[%s1] sm:$0xff] %v4
  %s6 = scalar_lea.vmem %s1, 8
  %7 = vst [vmem:[%s6] sm:$0xff] %v4

// kernel: tile.14
$region0: #{tile.14}
  %s0 = inlined_call_operand.vmem [shape: f32[14,10], index: 0, kind: input, shape index: {}]
  %s1 = inlined_call_operand.vmem [shape: f32[1,140], index: 1, kind: output, shape index: {}]
  $region1: #{tile.14} parent=0
    #allocation0 [shape = 'u8[8192]{0}', space=vmem, size = 0x2000, scoped, tag = 'scoped mem for output reshape']
    %v2 = vld [vmem:[%s0] sm:$0x1]
    %vm3 = vcmask 80896
    %4 = vst.msk [vmem:[#allocation0] sm:$0x1] %vm3, %v2
    %s5 = scalar_lea.vmem %s0, 12
    %v6 = vld [vmem:[%s5] sm:$0x1]
    %s7 = scalar_lea.vmem %s0, 12
    %v8 = vld [vmem:[%s7] sm:$0x1]
    %vm9 = vcmask 64512
    %v10 = vsel %vm9, %v8, %v6
    %11 = vrot.lane.b32.xlu0 %v10, 120
    %v12 = vpop.permute.xlu0 %11
    %vm13 = vcmask 15360
    %s14 = scalar_lea.vmem [#allocation0], 8
    %15 = vst.msk [vmem:[%s14] sm:$0x1] %vm13, %v12
    %vm16 = vcmask 1048512
    %17 = vst.msk [vmem:[#allocation0] sm:$0x1] %vm16, %v12
    %s18 = scalar_lea.vmem %s0, 11
    %v19 = vld [vmem:[%s18] sm:$0x1]
    %20 = vrot.lane.b32.xlu0 %v19, 110
    %v21 = vpop.permute.xlu0 %20
    %vm22 = vcmask 982896
    %23 = vst.msk [vmem:[#allocation0] sm:$0x1] %vm22, %v21
    %s24 = scalar_lea.vmem %s0, 10
    %v25 = vld [vmem:[%s24] sm:$0x1]
    %26 = vrot.lane.b32.xlu0 %v25, 100
    %v27 = vpop.permute.xlu0 %26
    %vm28 = vcmask 900896
    %29 = vst.msk [vmem:[#allocation0] sm:$0x1] %vm28, %v27
    %s30 = scalar_lea.vmem %s0, 9
    %v31 = vld [vmem:[%s30] sm:$0x1]
    %32 = vrot.lane.b32.xlu0 %v31, 90
    %v33 = vpop.permute.xlu0 %32
    %vm34 = vcmask 818896
    %35 = vst.msk [vmem:[#allocation0] sm:$0x1] %vm34, %v33
    %s36 = scalar_lea.vmem %s0, 8
    %v37 = vld [vmem:[%s36] sm:$0x1]
    %38 = vrot.lane.b32.xlu0 %v37, 80
    %v39 = vpop.permute.xlu0 %38
    %vm40 = vcmask 736896
    %41 = vst.msk [vmem:[#allocation0] sm:$0x1] %vm40, %v39
    %s42 = scalar_lea.vmem %s0, 7
    %v43 = vld [vmem:[%s42] sm:$0x1]
    %44 = vrot.lane.b32.xlu0 %v43, 70
    %v45 = vpop.permute.xlu0 %44
    %vm46 = vcmask 654896
    %47 = vst.msk [vmem:[#allocation0] sm:$0x1] %vm46, %v45
    %s48 = scalar_lea.vmem %s0, 6
    %v49 = vld [vmem:[%s48] sm:$0x1]
    %50 = vrot.lane.b32.xlu0 %v49, 60
    %v51 = vpop.permute.xlu0 %50
    %vm52 = vcmask 572896
    %53 = vst.msk [vmem:[#allocation0] sm:$0x1] %vm52, %v51
    %s54 = scalar_lea.vmem %s0, 5
    %v55 = vld [vmem:[%s54] sm:$0x1]
    %56 = vrot.lane.b32.xlu0 %v55, 50
    %v57 = vpop.permute.xlu0 %56
    %vm58 = vcmask 490896
    %59 = vst.msk [vmem:[#allocation0] sm:$0x1] %vm58, %v57
    %s60 = scalar_lea.vmem %s0, 4
    %v61 = vld [vmem:[%s60] sm:$0x1]
    %62 = vrot.lane.b32.xlu0 %v61, 40
    %v63 = vpop.permute.xlu0 %62
    %vm64 = vcmask 408896
    %65 = vst.msk [vmem:[#allocation0] sm:$0x1] %vm64, %v63
    %s66 = scalar_lea.vmem %s0, 3
    %v67 = vld [vmem:[%s66] sm:$0x1]
    %68 = vrot.lane.b32.xlu0 %v67, 30
    %v69 = vpop.permute.xlu0 %68
    %vm70 = vcmask 326896
    %71 = vst.msk [vmem:[#allocation0] sm:$0x1] %vm70, %v69
    %s72 = scalar_lea.vmem %s0, 2
    %v73 = vld [vmem:[%s72] sm:$0x1]
    %74 = vrot.lane.b32.xlu0 %v73, 20
    %v75 = vpop.permute.xlu0 %74
    %vm76 = vcmask 244896
    %77 = vst.msk [vmem:[#allocation0] sm:$0x1] %vm76, %v75
    %s78 = scalar_lea.vmem %s0, 1
    %v79 = vld [vmem:[%s78] sm:$0x1]
    %80 = vrot.lane.b32.xlu0 %v79, 10
    %v81 = vpop.permute.xlu0 %80
    %vm82 = vcmask 162896
    %83 = vst.msk [vmem:[#allocation0] sm:$0x1] %vm82, %v81
    %s84 = scalar_lea.vmem %s0, 13
    %v85 = vld [vmem:[%s84] sm:$0x1]
    %86 = vrot.lane.b32.xlu0 %v85, 2
    %v87 = vpop.permute.xlu0 %86
    %vm88 = vcmask 97296
    %s89 = scalar_lea.vmem [#allocation0], 8
    %90 = vst.msk [vmem:[%s89] sm:$0x1] %vm88, %v87
    %s92 = sshll.u32 1, 1
    %s93 = ssub.s32 %s92, 1
    %v95 = vld [vmem:[#allocation0] sm:%s93]
    %s96 = sshll.u32 1, 1
    %s97 = ssub.s32 %s96, 1
    %98 = vst [vmem:[%s1] sm:%s97] %v95
    %s99 = scalar_lea.vmem [#allocation0], 8
    %v100 = vld [vmem:[%s99] sm:%s93]
    %s101 = sshll.u32 1, 1
    %s102 = ssub.s32 %s101, 1
    %s103 = scalar_lea.vmem %s1, 1
    %104 = vst [vmem:[%s103] sm:%s102] %v100

// kernel: tile.19
$region0: #{tile.19}
  %s0 = inlined_call_operand.vmem [shape: f32[5,20], index: 0, kind: input, shape index: {}]
  %s1 = inlined_call_operand.vmem [shape: f32[1,100], index: 1, kind: output, shape index: {}]
  $region1: #{tile.19} parent=0
    #allocation0 [shape = 'u8[4096]{0}', space=vmem, size = 0x1000, scoped, tag = 'scoped mem for output reshape']
    %v2 = vld [vmem:[%s0] sm:$0x1]
    %vm3 = vcmask 162816
    %4 = vst.msk [vmem:[#allocation0] sm:$0x1] %vm3, %v2
    %s5 = scalar_lea.vmem %s0, 4
    %v6 = vld [vmem:[%s5] sm:$0x1]
    %7 = vrot.lane.b32.xlu0 %v6, 80
    %v8 = vpop.permute.xlu0 %7
    %vm9 = vcmask 818816
    %10 = vst.msk [vmem:[#allocation0] sm:$0x1] %vm9, %v8
    %s11 = scalar_lea.vmem %s0, 3
    %v12 = vld [vmem:[%s11] sm:$0x1]
    %13 = vrot.lane.b32.xlu0 %v12, 60
    %v14 = vpop.permute.xlu0 %13
    %vm15 = vcmask 654816
    %16 = vst.msk [vmem:[#allocation0] sm:$0x1] %vm15, %v14
    %s17 = scalar_lea.vmem %s0, 2
    %v18 = vld [vmem:[%s17] sm:$0x1]
    %19 = vrot.lane.b32.xlu0 %v18, 40
    %v20 = vpop.permute.xlu0 %19
    %vm21 = vcmask 490816
    %22 = vst.msk [vmem:[#allocation0] sm:$0x1] %vm21, %v20
    %s23 = scalar_lea.vmem %s0, 1
    %v24 = vld [vmem:[%s23] sm:$0x1]
    %25 = vrot.lane.b32.xlu0 %v24, 20
    %v26 = vpop.permute.xlu0 %25
    %vm27 = vcmask 326816
    %28 = vst.msk [vmem:[#allocation0] sm:$0x1] %vm27, %v26
    %s30 = sshll.u32 1, 1
    %s31 = ssub.s32 %s30, 1
    %v33 = vld [vmem:[#allocation0] sm:%s31]
    %s34 = sshll.u32 1, 1
    %s35 = ssub.s32 %s34, 1
    %36 = vst [vmem:[%s1] sm:%s35] %v33

// kernel: tile.18
$region0: #{tile.18}
  #allocation0 [shape = 's32[1]{0}', space=sflag, size = 0x4, scoped, tag = 'scoped memory for tile.18']
  %s0 = inlined_call_operand.vmem [shape: f32[20], index: 0, kind: input, shape index: {}]
  %s1 = inlined_call_operand.vmem [shape: f32[5,20], index: 1, kind: output, shape index: {}]
  // Predicated region
  $region2: #{tile.18} parent=0 // pred_check
    _
  $region3: #{tile.18} parent=0 // pred_check_branch
    %3 = sbr.rel (0) target = $region5
  $region4: #{tile.18} parent=0 // pred_region
    _
  $region5: #{tile.18} parent=0 // pred_fallthru
    _
  %v4 = vld [vmem:[%s0] ss:$0 sm:$0xff]
  %5 = vst [vmem:[%s1] sm:$0xff] %v4

// kernel: net_forward.1
$region0: #{net_forward.1}
  #allocation0 [shape = 'u32[]', space=smem, size = 0x4, offset = 0x4, fixed_abs, tag = 'smem constant byte address 0x4 - core index']
  #allocation1 [shape = 'u32[144,128]{1,0:T(1,128)}', space=vmem, size = 0x12000, scoped, tag = 'internal scratch']
  %s0 = inlined_call_operand.vmem [shape: bf16[16,512], index: 0, kind: input, shape index: {}]
  %s1 = inlined_call_operand.vmem [shape: bf16[5,128,280], index: 1, kind: input, shape index: {}]
  %s2 = inlined_call_operand.vmem [shape: bf16[5,140,200], index: 2, kind: input, shape index: {}]
  %s3 = inlined_call_operand.vmem [shape: bf16[100,600], index: 3, kind: input, shape index: {}]
  %s4 = inlined_call_operand.vmem [shape: bf16[120,84], index: 4, kind: input, shape index: {}]
  %s5 = inlined_call_operand.vmem [shape: bf16[84,10], index: 5, kind: input, shape index: {}]
  %s6 = inlined_call_operand.vmem [shape: f32[1,140], index: 6, kind: input, shape index: {}]
  %s7 = inlined_call_operand.vmem [shape: f32[1,100], index: 7, kind: input, shape index: {}]
  %s8 = inlined_call_operand.vmem [shape: f32[1,120], index: 8, kind: input, shape index: {}]
  %s9 = inlined_call_operand.vmem [shape: f32[1,84], index: 9, kind: input, shape index: {}]
  %s10 = inlined_call_operand.vmem [shape: f32[1,10], index: 10, kind: input, shape index: {}]
  %s11 = inlined_call_operand.vmem [shape: f32[16,10], index: 11, kind: output, shape index: {}]
  %s12 = sld [smem:[#allocation0]]
  $region54: #{net_forward.1} parent=0
    _
  %s14 = ssub.s32 1, %s12
  %s15 = scalar_select 0, %s14, %s12
  // Predicated region
  $region2: #{net_forward.1} parent=0 // pred_check
    _
  $region3: #{net_forward.1} parent=0 // pred_check_branch
    %17 = sbr.rel (0) target = $region5
  $region4: #{net_forward.1} parent=0 // pred_region
    _
  $region5: #{net_forward.1} parent=0 // pred_fallthru
    _
  // Predicated region
  $region6: #{net_forward.1} parent=0 // pred_check
    _
  $region7: #{net_forward.1} parent=0 // pred_check_branch
    %19 = sbr.rel (0) target = $region9
  $region8: #{net_forward.1} parent=0 // pred_region
    _
  $region9: #{net_forward.1} parent=0 // pred_fallthru
    _
  // Predicated region
  $region10: #{net_forward.1} parent=0 // pred_check
    _
  $region11: #{net_forward.1} parent=0 // pred_check_branch
    %21 = sbr.rel (0) target = $region13
  $region12: #{net_forward.1} parent=0 // pred_region
    _
  $region13: #{net_forward.1} parent=0 // pred_fallthru
    _
  // Predicated region
  $region14: #{net_forward.1} parent=0 // pred_check
    _
  $region15: #{net_forward.1} parent=0 // pred_check_branch
    %23 = sbr.rel (0) target = $region17
  $region16: #{net_forward.1} parent=0 // pred_region
    _
  $region17: #{net_forward.1} parent=0 // pred_fallthru
    _
  // Predicated region
  $region18: #{net_forward.1} parent=0 // pred_check
    _
  $region19: #{net_forward.1} parent=0 // pred_check_branch
    %25 = sbr.rel (0) target = $region21
  $region20: #{net_forward.1} parent=0 // pred_region
    _
  $region21: #{net_forward.1} parent=0 // pred_fallthru
    _
  // Predicated region
  $region22: #{net_forward.1} parent=0 // pred_check
    _
  $region23: #{net_forward.1} parent=0 // pred_check_branch
    %27 = sbr.rel (0) target = $region25
  $region24: #{net_forward.1} parent=0 // pred_region
    _
  $region25: #{net_forward.1} parent=0 // pred_fallthru
    _
  // Predicated region
  $region26: #{net_forward.1} parent=0 // pred_check
    _
  $region27: #{net_forward.1} parent=0 // pred_check_branch
    %29 = sbr.rel (0) target = $region29
  $region28: #{net_forward.1} parent=0 // pred_region
    _
  $region29: #{net_forward.1} parent=0 // pred_fallthru
    _
  // Predicated region
  $region30: #{net_forward.1} parent=0 // pred_check
    _
  $region31: #{net_forward.1} parent=0 // pred_check_branch
    %31 = sbr.rel (0) target = $region33
  $region32: #{net_forward.1} parent=0 // pred_region
    _
  $region33: #{net_forward.1} parent=0 // pred_fallthru
    _
  // Predicated region
  $region34: #{net_forward.1} parent=0 // pred_check
    _
  $region35: #{net_forward.1} parent=0 // pred_check_branch
    %33 = sbr.rel (0) target = $region37
  $region36: #{net_forward.1} parent=0 // pred_region
    _
  $region37: #{net_forward.1} parent=0 // pred_fallthru
    _
  // Predicated region
  $region38: #{net_forward.1} parent=0 // pred_check
    _
  $region39: #{net_forward.1} parent=0 // pred_check_branch
    %35 = sbr.rel (0) target = $region41
  $region40: #{net_forward.1} parent=0 // pred_region
    _
  $region41: #{net_forward.1} parent=0 // pred_fallthru
    _
  // Predicated region
  $region42: #{net_forward.1} parent=0 // pred_check
    _
  $region43: #{net_forward.1} parent=0 // pred_check_branch
    %37 = sbr.rel (0) target = $region45
  $region44: #{net_forward.1} parent=0 // pred_region
    _
  $region45: #{net_forward.1} parent=0 // pred_fallthru
    _
  %v39 = vld [vmem:[%s0] sm:$0xff]
  %v40 = vld [vmem:[%s0 + $0x8] sm:$0xff]
  %v41 = vld [vmem:[%s0 + $0x10] sm:$0xff]
  %v42 = vld [vmem:[%s0 + $0x18] sm:$0xff]
  %v43 = vld [vmem:[%s6] sm:$0x3]
  %v44 = vld [vmem:[%s1] sm:$0xff]
  %v45 = vld [vmem:[%s1 + $0x8] sm:$0xf]
  %v46 = vld [vmem:[%s1 + $0xc] sm:$0xff]
  %v47 = vld [vmem:[%s1 + $0x14] sm:$0xf]
  %v48 = vld [vmem:[%s1 + $0x18] sm:$0xff]
  %v49 = vld [vmem:[%s1 + $0x20] sm:$0xf]
  %v50 = vld [vmem:[%s1 + $0x24] sm:$0xff]
  %v51 = vld [vmem:[%s1 + $0x2c] sm:$0xf]
  %v52 = vld [vmem:[%s1 + $0x30] sm:$0xff]
  %v53 = vld [vmem:[%s1 + $0x38] sm:$0xf]
  %v54 = vld [vmem:[%s1 + $0x3c] sm:$0xff]
  %v55 = vld [vmem:[%s1 + $0x44] sm:$0xf]
  %v56 = vld [vmem:[%s1 + $0x48] sm:$0xff]
  %v57 = vld [vmem:[%s1 + $0x50] sm:$0xf]
  %v58 = vld [vmem:[%s1 + $0x54] sm:$0xff]
  %v59 = vld [vmem:[%s1 + $0x5c] sm:$0xf]
  %v60 = vld [vmem:[%s1 + $0x60] sm:$0xff]
  %v61 = vld [vmem:[%s1 + $0x68] sm:$0xf]
  %v62 = vld [vmem:[%s1 + $0x6c] sm:$0xff]
  %v63 = vld [vmem:[%s1 + $0x74] sm:$0xf]
  %v64 = vld [vmem:[%s1 + $0x78] sm:$0xff]
  %v65 = vld [vmem:[%s1 + $0x80] sm:$0xf]
  %v66 = vld [vmem:[%s1 + $0x84] sm:$0xff]
  %v67 = vld [vmem:[%s1 + $0x8c] sm:$0xf]
  %v68 = vld [vmem:[%s1 + $0x90] sm:$0xff]
  %v69 = vld [vmem:[%s1 + $0x98] sm:$0xf]
  %v70 = vld [vmem:[%s1 + $0x9c] sm:$0xff]
  %v71 = vld [vmem:[%s1 + $0xa4] sm:$0xf]
  %v72 = vld [vmem:[%s1 + $0xa8] sm:$0xff]
  %v73 = vld [vmem:[%s1 + $0xb0] sm:$0xf]
  %v74 = vld [vmem:[%s1 + $0xb4] sm:$0xff]
  %v75 = vld [vmem:[%s1 + $0xbc] sm:$0xf]
  %s76 = scalar_lea.vmem %s1, 192
  %v77 = vld [vmem:[%s76] sm:$0xff]
  %v78 = vld [vmem:[%s76 + $0x8] sm:$0xf]
  %v79 = vld [vmem:[%s76 + $0xc] sm:$0xff]
  %v80 = vld [vmem:[%s76 + $0x14] sm:$0xf]
  %v81 = vld [vmem:[%s76 + $0x18] sm:$0xff]
  %v82 = vld [vmem:[%s76 + $0x20] sm:$0xf]
  %v83 = vld [vmem:[%s76 + $0x24] sm:$0xff]
  %v84 = vld [vmem:[%s76 + $0x2c] sm:$0xf]
  %v85 = vld [vmem:[%s76 + $0x30] sm:$0xff]
  %v86 = vld [vmem:[%s76 + $0x38] sm:$0xf]
  %v87 = vld [vmem:[%s76 + $0x3c] sm:$0xff]
  %v88 = vld [vmem:[%s76 + $0x44] sm:$0xf]
  %v89 = vld [vmem:[%s76 + $0x48] sm:$0xff]
  %v90 = vld [vmem:[%s76 + $0x50] sm:$0xf]
  %v91 = vld [vmem:[%s76 + $0x54] sm:$0xff]
  %v92 = vld [vmem:[%s76 + $0x5c] sm:$0xf]
  %v93 = vld [vmem:[%s76 + $0x60] sm:$0xff]
  %v94 = vld [vmem:[%s76 + $0x68] sm:$0xf]
  %v95 = vld [vmem:[%s76 + $0x6c] sm:$0xff]
  %v96 = vld [vmem:[%s76 + $0x74] sm:$0xf]
  %v97 = vld [vmem:[%s76 + $0x78] sm:$0xff]
  %v98 = vld [vmem:[%s76 + $0x80] sm:$0xf]
  %v99 = vld [vmem:[%s76 + $0x84] sm:$0xff]
  %v100 = vld [vmem:[%s76 + $0x8c] sm:$0xf]
  %v101 = vld [vmem:[%s76 + $0x90] sm:$0xff]
  %v102 = vld [vmem:[%s76 + $0x98] sm:$0xf]
  %v103 = vld [vmem:[%s76 + $0x9c] sm:$0xff]
  %v104 = vld [vmem:[%s76 + $0xa4] sm:$0xf]
  %v105 = vld [vmem:[%s76 + $0xa8] sm:$0xff]
  %v106 = vld [vmem:[%s76 + $0xb0] sm:$0xf]
  %v107 = vld [vmem:[%s76 + $0xb4] sm:$0xff]
  %v108 = vld [vmem:[%s76 + $0xbc] sm:$0xf]
  %v111 = vunpack.c.h.b16 %v39
  %v112 = vunpack.c.h.b16 %v41
  %v113 = vpack.c.b16 %v112, %v111
  %v147 = vunpack.c.l.b16 %v77
  %v148 = vunpack.c.h.b16 %v77
  %v149 = vunpack.c.l.b16 %v78
  %v150 = vunpack.c.l.b16 %v79
  %v151 = vunpack.c.h.b16 %v79
  %v152 = vunpack.c.l.b16 %v80
  %v153 = vunpack.c.l.b16 %v81
  %v154 = vunpack.c.h.b16 %v81
  %v155 = vunpack.c.l.b16 %v82
  %v156 = vunpack.c.l.b16 %v83
  %v157 = vunpack.c.h.b16 %v83
  %v158 = vunpack.c.l.b16 %v84
  %v159 = vunpack.c.l.b16 %v85
  %v160 = vunpack.c.h.b16 %v85
  %v161 = vunpack.c.l.b16 %v86
  %v162 = vunpack.c.l.b16 %v87
  %v163 = vunpack.c.h.b16 %v87
  %v164 = vunpack.c.l.b16 %v88
  %v165 = vunpack.c.l.b16 %v89
  %v166 = vunpack.c.h.b16 %v89
  %v167 = vunpack.c.l.b16 %v90
  %v168 = vunpack.c.l.b16 %v91
  %v169 = vunpack.c.h.b16 %v91
  %v170 = vunpack.c.l.b16 %v92
  %v171 = vunpack.c.l.b16 %v93
  %v172 = vunpack.c.h.b16 %v93
  %v173 = vunpack.c.l.b16 %v94
  %v174 = vunpack.c.l.b16 %v95
  %v175 = vunpack.c.h.b16 %v95
  %v176 = vunpack.c.l.b16 %v96
  %v177 = vunpack.c.l.b16 %v97
  %v178 = vunpack.c.h.b16 %v97
  %v179 = vunpack.c.l.b16 %v98
  %v180 = vunpack.c.l.b16 %v99
  %v181 = vunpack.c.h.b16 %v99
  %v182 = vunpack.c.l.b16 %v100
  %v183 = vunpack.c.l.b16 %v101
  %v184 = vunpack.c.h.b16 %v101
  %v185 = vunpack.c.l.b16 %v102
  %v186 = vunpack.c.l.b16 %v103
  %v187 = vunpack.c.h.b16 %v103
  %v188 = vunpack.c.l.b16 %v104
  %v189 = vunpack.c.l.b16 %v105
  %v190 = vunpack.c.h.b16 %v105
  %v191 = vunpack.c.l.b16 %v106
  %v192 = vunpack.c.l.b16 %v107
  %v193 = vunpack.c.h.b16 %v107
  %v194 = vunpack.c.l.b16 %v108
  %v195 = vpack.c.b16 %v150, %v147
  %v196 = vpack.c.b16 %v151, %v148
  %v197 = vpack.c.b16 %v152, %v149
  %v198 = vpack.c.b16 %v156, %v153
  %v199 = vpack.c.b16 %v157, %v154
  %v200 = vpack.c.b16 %v158, %v155
  %v201 = vpack.c.b16 %v162, %v159
  %v202 = vpack.c.b16 %v163, %v160
  %v203 = vpack.c.b16 %v164, %v161
  %v204 = vpack.c.b16 %v168, %v165
  %v205 = vpack.c.b16 %v169, %v166
  %v206 = vpack.c.b16 %v170, %v167
  %v207 = vpack.c.b16 %v174, %v171
  %v208 = vpack.c.b16 %v175, %v172
  %v209 = vpack.c.b16 %v176, %v173
  %v210 = vpack.c.b16 %v180, %v177
  %v211 = vpack.c.b16 %v181, %v178
  %v212 = vpack.c.b16 %v182, %v179
  %v213 = vpack.c.b16 %v186, %v183
  %v214 = vpack.c.b16 %v187, %v184
  %v215 = vpack.c.b16 %v188, %v185
  %v216 = vpack.c.b16 %v192, %v189
  %v217 = vpack.c.b16 %v193, %v190
  %v218 = vpack.c.b16 %v194, %v191
  %243 = vmatprep.subr.bf16.mxu0 %v217
  %244 = vmatpush1.bf16.msra.mxu0 %v216
  %245 = vmatprep.subr.bf16.mxu0 %v214
  %246 = vmatpush1.bf16.msra.mxu0 %v213
  %247 = vmatprep.subr.bf16.mxu0 %v211
  %248 = vmatpush1.bf16.msra.mxu0 %v210
  %249 = vmatprep.subr.bf16.mxu0 %v208
  %250 = vmatpush1.bf16.msra.mxu0 %v207
  %251 = vmatprep.subr.bf16.mxu0 %v205
  %252 = vmatpush1.bf16.msra.mxu0 %v204
  %253 = vmatprep.subr.bf16.mxu0 %v202
  %254 = vmatpush1.bf16.msra.mxu0 %v201
  %255 = vmatprep.subr.bf16.mxu0 %v199
  %256 = vmatpush1.bf16.msra.mxu0 %v198
  %257 = vmatprep.subr.bf16.mxu0 %v196
  %258 = vmatpush1.bf16.msra.mxu0 %v195
  %259 = vmatprep.subr.bf16.mxu0 0
  %260 = vmatpush2.bf16.msra.mxu0 0
  %261 = vmatprep.subr.bf16.mxu0 0
  %262 = vmatpush2.bf16.msra.mxu0 0
  %263 = vmatprep.subr.bf16.mxu0 0
  %264 = vmatpush2.bf16.msra.mxu0 0
  %265 = vmatprep.subr.bf16.mxu0 0
  %266 = vmatpush2.bf16.msra.mxu0 0
  %267 = vmatprep.subr.bf16.mxu0 0
  %268 = vmatpush2.bf16.msra.mxu0 0
  %269 = vmatprep.subr.bf16.mxu0 0
  %270 = vmatpush2.bf16.msra.mxu0 0
  %271 = vmatprep.subr.bf16.mxu0 0
  %272 = vmatpush2.bf16.msra.mxu0 0
  %273 = vmatprep.subr.bf16.mxu0 0
  %274 = vmatpush2.bf16.msra.mxu0 0
  %275 = vmatprep.mubr.bf16.mxu0 0
  %276 = vmatmul.mubr.bf16.gmra.mxu0 %v113
  %v277 = vpop.f32.mrf.mxu0
  %v278 = vadd.f32 0.0, %v277
  %v279 = vpop.f32.mrf.mxu0
  %v280 = vadd.f32 0.0, %v279
  %v281 = vpop.f32.mrf.mxu0
  %v282 = vadd.f32 0.0, %v281
  %v283 = vpop.f32.mrf.mxu0
  %v284 = vadd.f32 0.0, %v283
  %285 = vdwg.mxu0
  %286 = vmatprep.subr.bf16.mxu0 0
  %287 = vmatpush1.bf16.msra.mxu0 %v218
  %288 = vmatprep.subr.bf16.mxu0 0
  %289 = vmatpush1.bf16.msra.mxu0 %v215
  %290 = vmatprep.subr.bf16.mxu0 0
  %291 = vmatpush1.bf16.msra.mxu0 %v212
  %292 = vmatprep.subr.bf16.mxu0 0
  %293 = vmatpush1.bf16.msra.mxu0 %v209
  %294 = vmatprep.subr.bf16.mxu0 0
  %295 = vmatpush1.bf16.msra.mxu0 %v206
  %296 = vmatprep.subr.bf16.mxu0 0
  %297 = vmatpush1.bf16.msra.mxu0 %v203
  %298 = vmatprep.subr.bf16.mxu0 0
  %299 = vmatpush1.bf16.msra.mxu0 %v200
  %300 = vmatprep.subr.bf16.mxu0 0
  %301 = vmatpush1.bf16.msra.mxu0 %v197
  %302 = vmatprep.subr.bf16.mxu0 0
  %303 = vmatpush2.bf16.msra.mxu0 0
  %304 = vmatprep.subr.bf16.mxu0 0
  %305 = vmatpush2.bf16.msra.mxu0 0
  %306 = vmatprep.subr.bf16.mxu0 0
  %307 = vmatpush2.bf16.msra.mxu0 0
  %308 = vmatprep.subr.bf16.mxu0 0
  %309 = vmatpush2.bf16.msra.mxu0 0
  %310 = vmatprep.subr.bf16.mxu0 0
  %311 = vmatpush2.bf16.msra.mxu0 0
  %312 = vmatprep.subr.bf16.mxu0 0
  %313 = vmatpush2.bf16.msra.mxu0 0
  %314 = vmatprep.subr.bf16.mxu0 0
  %315 = vmatpush2.bf16.msra.mxu0 0
  %316 = vmatprep.subr.bf16.mxu0 0
  %317 = vmatpush2.bf16.msra.mxu0 0
  %318 = vmatprep.mubr.bf16.mxu0 0
  %319 = vmatmul.mubr.bf16.gmra.mxu0 %v113
  %v320 = vpop.f32.mrf.mxu0
  %v321 = vadd.f32 0.0, %v320
  %v322 = vpop.f32.mrf.mxu0
  %v323 = vpop.f32.mrf.mxu0
  %v324 = vadd.f32 0.0, %v323
  %v325 = vpop.f32.mrf.mxu0
  %326 = vdwg.mxu0
  %v327 = vunpack.c.l.b16 %v39
  %v328 = vunpack.c.l.b16 %v41
  %v329 = vpack.c.b16 %v328, %v327
  %v363 = vunpack.c.l.b16 %v44
  %v364 = vunpack.c.h.b16 %v44
  %v365 = vunpack.c.l.b16 %v45
  %v366 = vunpack.c.l.b16 %v46
  %v367 = vunpack.c.h.b16 %v46
  %v368 = vunpack.c.l.b16 %v47
  %v369 = vunpack.c.l.b16 %v48
  %v370 = vunpack.c.h.b16 %v48
  %v371 = vunpack.c.l.b16 %v49
  %v372 = vunpack.c.l.b16 %v50
  %v373 = vunpack.c.h.b16 %v50
  %v374 = vunpack.c.l.b16 %v51
  %v375 = vunpack.c.l.b16 %v52
  %v376 = vunpack.c.h.b16 %v52
  %v377 = vunpack.c.l.b16 %v53
  %v378 = vunpack.c.l.b16 %v54
  %v379 = vunpack.c.h.b16 %v54
  %v380 = vunpack.c.l.b16 %v55
  %v381 = vunpack.c.l.b16 %v56
  %v382 = vunpack.c.h.b16 %v56
  %v383 = vunpack.c.l.b16 %v57
  %v384 = vunpack.c.l.b16 %v58
  %v385 = vunpack.c.h.b16 %v58
  %v386 = vunpack.c.l.b16 %v59
  %v387 = vunpack.c.l.b16 %v60
  %v388 = vunpack.c.h.b16 %v60
  %v389 = vunpack.c.l.b16 %v61
  %v390 = vunpack.c.l.b16 %v62
  %v391 = vunpack.c.h.b16 %v62
  %v392 = vunpack.c.l.b16 %v63
  %v393 = vunpack.c.l.b16 %v64
  %v394 = vunpack.c.h.b16 %v64
  %v395 = vunpack.c.l.b16 %v65
  %v396 = vunpack.c.l.b16 %v66
  %v397 = vunpack.c.h.b16 %v66
  %v398 = vunpack.c.l.b16 %v67
  %v399 = vunpack.c.l.b16 %v68
  %v400 = vunpack.c.h.b16 %v68
  %v401 = vunpack.c.l.b16 %v69
  %v402 = vunpack.c.l.b16 %v70
  %v403 = vunpack.c.h.b16 %v70
  %v404 = vunpack.c.l.b16 %v71
  %v405 = vunpack.c.l.b16 %v72
  %v406 = vunpack.c.h.b16 %v72
  %v407 = vunpack.c.l.b16 %v73
  %v408 = vunpack.c.l.b16 %v74
  %v409 = vunpack.c.h.b16 %v74
  %v410 = vunpack.c.l.b16 %v75
  %v411 = vpack.c.b16 %v366, %v363
  %v412 = vpack.c.b16 %v367, %v364
  %v413 = vpack.c.b16 %v368, %v365
  %v414 = vpack.c.b16 %v372, %v369
  %v415 = vpack.c.b16 %v373, %v370
  %v416 = vpack.c.b16 %v374, %v371
  %v417 = vpack.c.b16 %v378, %v375
  %v418 = vpack.c.b16 %v379, %v376
  %v419 = vpack.c.b16 %v380, %v377
  %v420 = vpack.c.b16 %v384, %v381
  %v421 = vpack.c.b16 %v385, %v382
  %v422 = vpack.c.b16 %v386, %v383
  %v423 = vpack.c.b16 %v390, %v387
  %v424 = vpack.c.b16 %v391, %v388
  %v425 = vpack.c.b16 %v392, %v389
  %v426 = vpack.c.b16 %v396, %v393
  %v427 = vpack.c.b16 %v397, %v394
  %v428 = vpack.c.b16 %v398, %v395
  %v429 = vpack.c.b16 %v402, %v399
  %v430 = vpack.c.b16 %v403, %v400
  %v431 = vpack.c.b16 %v404, %v401
  %v432 = vpack.c.b16 %v408, %v405
  %v433 = vpack.c.b16 %v409, %v406
  %v434 = vpack.c.b16 %v410, %v407
  %459 = vmatprep.subr.bf16.mxu0 %v433
  %460 = vmatpush1.bf16.msra.mxu0 %v432
  %461 = vmatprep.subr.bf16.mxu0 %v430
  %462 = vmatpush1.bf16.msra.mxu0 %v429
  %463 = vmatprep.subr.bf16.mxu0 %v427
  %464 = vmatpush1.bf16.msra.mxu0 %v426
  %465 = vmatprep.subr.bf16.mxu0 %v424
  %466 = vmatpush1.bf16.msra.mxu0 %v423
  %467 = vmatprep.subr.bf16.mxu0 %v421
  %468 = vmatpush1.bf16.msra.mxu0 %v420
  %469 = vmatprep.subr.bf16.mxu0 %v418
  %470 = vmatpush1.bf16.msra.mxu0 %v417
  %471 = vmatprep.subr.bf16.mxu0 %v415
  %472 = vmatpush1.bf16.msra.mxu0 %v414
  %473 = vmatprep.subr.bf16.mxu0 %v412
  %474 = vmatpush1.bf16.msra.mxu0 %v411
  %475 = vmatprep.subr.bf16.mxu0 0
  %476 = vmatpush2.bf16.msra.mxu0 0
  %477 = vmatprep.subr.bf16.mxu0 0
  %478 = vmatpush2.bf16.msra.mxu0 0
  %479 = vmatprep.subr.bf16.mxu0 0
  %480 = vmatpush2.bf16.msra.mxu0 0
  %481 = vmatprep.subr.bf16.mxu0 0
  %482 = vmatpush2.bf16.msra.mxu0 0
  %483 = vmatprep.subr.bf16.mxu0 0
  %484 = vmatpush2.bf16.msra.mxu0 0
  %485 = vmatprep.subr.bf16.mxu0 0
  %486 = vmatpush2.bf16.msra.mxu0 0
  %487 = vmatprep.subr.bf16.mxu0 0
  %488 = vmatpush2.bf16.msra.mxu0 0
  %489 = vmatprep.subr.bf16.mxu0 0
  %490 = vmatpush2.bf16.msra.mxu0 0
  %491 = vmatprep.mubr.bf16.mxu0 0
  %492 = vmatmul.mubr.bf16.gmra.mxu0 %v329
  %v493 = vpop.f32.mrf.mxu0
  %v494 = vadd.f32 %v278, %v493
  %v495 = vpop.f32.mrf.mxu0
  %v496 = vadd.f32 %v280, %v495
  %v497 = vpop.f32.mrf.mxu0
  %v498 = vadd.f32 %v282, %v497
  %v499 = vpop.f32.mrf.mxu0
  %v500 = vadd.f32 %v284, %v499
  %501 = vdwg.mxu0
  %502 = vmatprep.subr.bf16.mxu0 0
  %503 = vmatpush1.bf16.msra.mxu0 %v434
  %504 = vmatprep.subr.bf16.mxu0 0
  %505 = vmatpush1.bf16.msra.mxu0 %v431
  %506 = vmatprep.subr.bf16.mxu0 0
  %507 = vmatpush1.bf16.msra.mxu0 %v428
  %508 = vmatprep.subr.bf16.mxu0 0
  %509 = vmatpush1.bf16.msra.mxu0 %v425
  %510 = vmatprep.subr.bf16.mxu0 0
  %511 = vmatpush1.bf16.msra.mxu0 %v422
  %512 = vmatprep.subr.bf16.mxu0 0
  %513 = vmatpush1.bf16.msra.mxu0 %v419
  %514 = vmatprep.subr.bf16.mxu0 0
  %515 = vmatpush1.bf16.msra.mxu0 %v416
  %516 = vmatprep.subr.bf16.mxu0 0
  %517 = vmatpush1.bf16.msra.mxu0 %v413
  %518 = vmatprep.subr.bf16.mxu0 0
  %519 = vmatpush2.bf16.msra.mxu0 0
  %520 = vmatprep.subr.bf16.mxu0 0
  %521 = vmatpush2.bf16.msra.mxu0 0
  %522 = vmatprep.subr.bf16.mxu0 0
  %523 = vmatpush2.bf16.msra.mxu0 0
  %524 = vmatprep.subr.bf16.mxu0 0
  %525 = vmatpush2.bf16.msra.mxu0 0
  %526 = vmatprep.subr.bf16.mxu0 0
  %527 = vmatpush2.bf16.msra.mxu0 0
  %528 = vmatprep.subr.bf16.mxu0 0
  %529 = vmatpush2.bf16.msra.mxu0 0
  %530 = vmatprep.subr.bf16.mxu0 0
  %531 = vmatpush2.bf16.msra.mxu0 0
  %532 = vmatprep.subr.bf16.mxu0 0
  %533 = vmatpush2.bf16.msra.mxu0 0
  %534 = vmatprep.mubr.bf16.mxu0 0
  %535 = vmatmul.mubr.bf16.gmra.mxu0 %v329
  %v536 = vpop.f32.mrf.mxu0
  %v537 = vadd.f32 %v321, %v536
  %v538 = vpop.f32.mrf.mxu0
  %v539 = vpop.f32.mrf.mxu0
  %v540 = vadd.f32 %v324, %v539
  %v541 = vpop.f32.mrf.mxu0
  %542 = vdwg.mxu0
  %s543 = scalar_lea.vmem %s1, 384
  %v544 = vld [vmem:[%s543] sm:$0xff]
  %v545 = vld [vmem:[%s543 + $0x8] sm:$0xf]
  %v546 = vld [vmem:[%s543 + $0xc] sm:$0xff]
  %v547 = vld [vmem:[%s543 + $0x14] sm:$0xf]
  %v548 = vld [vmem:[%s543 + $0x18] sm:$0xff]
  %v549 = vld [vmem:[%s543 + $0x20] sm:$0xf]
  %v550 = vld [vmem:[%s543 + $0x24] sm:$0xff]
  %v551 = vld [vmem:[%s543 + $0x2c] sm:$0xf]
  %v552 = vld [vmem:[%s543 + $0x30] sm:$0xff]
  %v553 = vld [vmem:[%s543 + $0x38] sm:$0xf]
  %v554 = vld [vmem:[%s543 + $0x3c] sm:$0xff]
  %v555 = vld [vmem:[%s543 + $0x44] sm:$0xf]
  %v556 = vld [vmem:[%s543 + $0x48] sm:$0xff]
  %v557 = vld [vmem:[%s543 + $0x50] sm:$0xf]
  %v558 = vld [vmem:[%s543 + $0x54] sm:$0xff]
  %v559 = vld [vmem:[%s543 + $0x5c] sm:$0xf]
  %v560 = vld [vmem:[%s543 + $0x60] sm:$0xff]
  %v561 = vld [vmem:[%s543 + $0x68] sm:$0xf]
  %v562 = vld [vmem:[%s543 + $0x6c] sm:$0xff]
  %v563 = vld [vmem:[%s543 + $0x74] sm:$0xf]
  %v564 = vld [vmem:[%s543 + $0x78] sm:$0xff]
  %v565 = vld [vmem:[%s543 + $0x80] sm:$0xf]
  %v566 = vld [vmem:[%s543 + $0x84] sm:$0xff]
  %v567 = vld [vmem:[%s543 + $0x8c] sm:$0xf]
  %v568 = vld [vmem:[%s543 + $0x90] sm:$0xff]
  %v569 = vld [vmem:[%s543 + $0x98] sm:$0xf]
  %v570 = vld [vmem:[%s543 + $0x9c] sm:$0xff]
  %v571 = vld [vmem:[%s543 + $0xa4] sm:$0xf]
  %v572 = vld [vmem:[%s543 + $0xa8] sm:$0xff]
  %v573 = vld [vmem:[%s543 + $0xb0] sm:$0xf]
  %v574 = vld [vmem:[%s543 + $0xb4] sm:$0xff]
  %v575 = vld [vmem:[%s543 + $0xbc] sm:$0xf]
  %v578 = vunpack.c.l.b16 %v40
  %v579 = vunpack.c.l.b16 %v42
  %v580 = vpack.c.b16 %v579, %v578
  %v614 = vunpack.c.l.b16 %v544
  %v615 = vunpack.c.h.b16 %v544
  %v616 = vunpack.c.l.b16 %v545
  %v617 = vunpack.c.l.b16 %v546
  %v618 = vunpack.c.h.b16 %v546
  %v619 = vunpack.c.l.b16 %v547
  %v620 = vunpack.c.l.b16 %v548
  %v621 = vunpack.c.h.b16 %v548
  %v622 = vunpack.c.l.b16 %v549
  %v623 = vunpack.c.l.b16 %v550
  %v624 = vunpack.c.h.b16 %v550
  %v625 = vunpack.c.l.b16 %v551
  %v626 = vunpack.c.l.b16 %v552
  %v627 = vunpack.c.h.b16 %v552
  %v628 = vunpack.c.l.b16 %v553
  %v629 = vunpack.c.l.b16 %v554
  %v630 = vunpack.c.h.b16 %v554
  %v631 = vunpack.c.l.b16 %v555
  %v632 = vunpack.c.l.b16 %v556
  %v633 = vunpack.c.h.b16 %v556
  %v634 = vunpack.c.l.b16 %v557
  %v635 = vunpack.c.l.b16 %v558
  %v636 = vunpack.c.h.b16 %v558
  %v637 = vunpack.c.l.b16 %v559
  %v638 = vunpack.c.l.b16 %v560
  %v639 = vunpack.c.h.b16 %v560
  %v640 = vunpack.c.l.b16 %v561
  %v641 = vunpack.c.l.b16 %v562
  %v642 = vunpack.c.h.b16 %v562
  %v643 = vunpack.c.l.b16 %v563
  %v644 = vunpack.c.l.b16 %v564
  %v645 = vunpack.c.h.b16 %v564
  %v646 = vunpack.c.l.b16 %v565
  %v647 = vunpack.c.l.b16 %v566
  %v648 = vunpack.c.h.b16 %v566
  %v649 = vunpack.c.l.b16 %v567
  %v650 = vunpack.c.l.b16 %v568
  %v651 = vunpack.c.h.b16 %v568
  %v652 = vunpack.c.l.b16 %v569
  %v653 = vunpack.c.l.b16 %v570
  %v654 = vunpack.c.h.b16 %v570
  %v655 = vunpack.c.l.b16 %v571
  %v656 = vunpack.c.l.b16 %v572
  %v657 = vunpack.c.h.b16 %v572
  %v658 = vunpack.c.l.b16 %v573
  %v659 = vunpack.c.l.b16 %v574
  %v660 = vunpack.c.h.b16 %v574
  %v661 = vunpack.c.l.b16 %v575
  %v662 = vpack.c.b16 %v617, %v614
  %v663 = vpack.c.b16 %v618, %v615
  %v664 = vpack.c.b16 %v619, %v616
  %v665 = vpack.c.b16 %v623, %v620
  %v666 = vpack.c.b16 %v624, %v621
  %v667 = vpack.c.b16 %v625, %v622
  %v668 = vpack.c.b16 %v629, %v626
  %v669 = vpack.c.b16 %v630, %v627
  %v670 = vpack.c.b16 %v631, %v628
  %v671 = vpack.c.b16 %v635, %v632
  %v672 = vpack.c.b16 %v636, %v633
  %v673 = vpack.c.b16 %v637, %v634
  %v674 = vpack.c.b16 %v641, %v638
  %v675 = vpack.c.b16 %v642, %v639
  %v676 = vpack.c.b16 %v643, %v640
  %v677 = vpack.c.b16 %v647, %v644
  %v678 = vpack.c.b16 %v648, %v645
  %v679 = vpack.c.b16 %v649, %v646
  %v680 = vpack.c.b16 %v653, %v650
  %v681 = vpack.c.b16 %v654, %v651
  %v682 = vpack.c.b16 %v655, %v652
  %v683 = vpack.c.b16 %v659, %v656
  %v684 = vpack.c.b16 %v660, %v657
  %v685 = vpack.c.b16 %v661, %v658
  %710 = vmatprep.subr.bf16.mxu0 %v684
  %711 = vmatpush1.bf16.msra.mxu0 %v683
  %712 = vmatprep.subr.bf16.mxu0 %v681
  %713 = vmatpush1.bf16.msra.mxu0 %v680
  %714 = vmatprep.subr.bf16.mxu0 %v678
  %715 = vmatpush1.bf16.msra.mxu0 %v677
  %716 = vmatprep.subr.bf16.mxu0 %v675
  %717 = vmatpush1.bf16.msra.mxu0 %v674
  %718 = vmatprep.subr.bf16.mxu0 %v672
  %719 = vmatpush1.bf16.msra.mxu0 %v671
  %720 = vmatprep.subr.bf16.mxu0 %v669
  %721 = vmatpush1.bf16.msra.mxu0 %v668
  %722 = vmatprep.subr.bf16.mxu0 %v666
  %723 = vmatpush1.bf16.msra.mxu0 %v665
  %724 = vmatprep.subr.bf16.mxu0 %v663
  %725 = vmatpush1.bf16.msra.mxu0 %v662
  %726 = vmatprep.subr.bf16.mxu0 0
  %727 = vmatpush2.bf16.msra.mxu0 0
  %728 = vmatprep.subr.bf16.mxu0 0
  %729 = vmatpush2.bf16.msra.mxu0 0
  %730 = vmatprep.subr.bf16.mxu0 0
  %731 = vmatpush2.bf16.msra.mxu0 0
  %732 = vmatprep.subr.bf16.mxu0 0
  %733 = vmatpush2.bf16.msra.mxu0 0
  %734 = vmatprep.subr.bf16.mxu0 0
  %735 = vmatpush2.bf16.msra.mxu0 0
  %736 = vmatprep.subr.bf16.mxu0 0
  %737 = vmatpush2.bf16.msra.mxu0 0
  %738 = vmatprep.subr.bf16.mxu0 0
  %739 = vmatpush2.bf16.msra.mxu0 0
  %740 = vmatprep.subr.bf16.mxu0 0
  %741 = vmatpush2.bf16.msra.mxu0 0
  %742 = vmatprep.mubr.bf16.mxu0 0
  %743 = vmatmul.mubr.bf16.gmra.mxu0 %v580
  %v744 = vpop.f32.mrf.mxu0
  %v745 = vadd.f32 0.0, %v744
  %v746 = vpop.f32.mrf.mxu0
  %v747 = vadd.f32 0.0, %v746
  %v748 = vpop.f32.mrf.mxu0
  %v749 = vadd.f32 0.0, %v748
  %v750 = vpop.f32.mrf.mxu0
  %v751 = vadd.f32 0.0, %v750
  %752 = vdwg.mxu0
  %753 = vmatprep.subr.bf16.mxu0 0
  %754 = vmatpush1.bf16.msra.mxu0 %v685
  %755 = vmatprep.subr.bf16.mxu0 0
  %756 = vmatpush1.bf16.msra.mxu0 %v682
  %757 = vmatprep.subr.bf16.mxu0 0
  %758 = vmatpush1.bf16.msra.mxu0 %v679
  %759 = vmatprep.subr.bf16.mxu0 0
  %760 = vmatpush1.bf16.msra.mxu0 %v676
  %761 = vmatprep.subr.bf16.mxu0 0
  %762 = vmatpush1.bf16.msra.mxu0 %v673
  %763 = vmatprep.subr.bf16.mxu0 0
  %764 = vmatpush1.bf16.msra.mxu0 %v670
  %765 = vmatprep.subr.bf16.mxu0 0
  %766 = vmatpush1.bf16.msra.mxu0 %v667
  %767 = vmatprep.subr.bf16.mxu0 0
  %768 = vmatpush1.bf16.msra.mxu0 %v664
  %769 = vmatprep.subr.bf16.mxu0 0
  %770 = vmatpush2.bf16.msra.mxu0 0
  %771 = vmatprep.subr.bf16.mxu0 0
  %772 = vmatpush2.bf16.msra.mxu0 0
  %773 = vmatprep.subr.bf16.mxu0 0
  %774 = vmatpush2.bf16.msra.mxu0 0
  %775 = vmatprep.subr.bf16.mxu0 0
  %776 = vmatpush2.bf16.msra.mxu0 0
  %777 = vmatprep.subr.bf16.mxu0 0
  %778 = vmatpush2.bf16.msra.mxu0 0
  %779 = vmatprep.subr.bf16.mxu0 0
  %780 = vmatpush2.bf16.msra.mxu0 0
  %781 = vmatprep.subr.bf16.mxu0 0
  %782 = vmatpush2.bf16.msra.mxu0 0
  %783 = vmatprep.subr.bf16.mxu0 0
  %784 = vmatpush2.bf16.msra.mxu0 0
  %785 = vmatprep.mubr.bf16.mxu0 0
  %786 = vmatmul.mubr.bf16.gmra.mxu0 %v580
  %v787 = vpop.f32.mrf.mxu0
  %v788 = vadd.f32 0.0, %v787
  %v789 = vpop.f32.mrf.mxu0
  %v790 = vpop.f32.mrf.mxu0
  %v791 = vadd.f32 0.0, %v790
  %v792 = vpop.f32.mrf.mxu0
  %793 = vdwg.mxu0
  %v794 = vadd.f32 %v494, %v745
  %v795 = vadd.f32 %v496, %v747
  %v796 = vadd.f32 %v537, %v788
  %v797 = vadd.f32 %v498, %v749
  %v798 = vadd.f32 %v500, %v751
  %v799 = vadd.f32 %v540, %v791
  %s800 = scalar_lea.vmem %s1, 576
  %v801 = vld [vmem:[%s800] sm:$0xff]
  %v802 = vld [vmem:[%s800 + $0x8] sm:$0xf]
  %v803 = vld [vmem:[%s800 + $0xc] sm:$0xff]
  %v804 = vld [vmem:[%s800 + $0x14] sm:$0xf]
  %v805 = vld [vmem:[%s800 + $0x18] sm:$0xff]
  %v806 = vld [vmem:[%s800 + $0x20] sm:$0xf]
  %v807 = vld [vmem:[%s800 + $0x24] sm:$0xff]
  %v808 = vld [vmem:[%s800 + $0x2c] sm:$0xf]
  %v809 = vld [vmem:[%s800 + $0x30] sm:$0xff]
  %v810 = vld [vmem:[%s800 + $0x38] sm:$0xf]
  %v811 = vld [vmem:[%s800 + $0x3c] sm:$0xff]
  %v812 = vld [vmem:[%s800 + $0x44] sm:$0xf]
  %v813 = vld [vmem:[%s800 + $0x48] sm:$0xff]
  %v814 = vld [vmem:[%s800 + $0x50] sm:$0xf]
  %v815 = vld [vmem:[%s800 + $0x54] sm:$0xff]
  %v816 = vld [vmem:[%s800 + $0x5c] sm:$0xf]
  %v817 = vld [vmem:[%s800 + $0x60] sm:$0xff]
  %v818 = vld [vmem:[%s800 + $0x68] sm:$0xf]
  %v819 = vld [vmem:[%s800 + $0x6c] sm:$0xff]
  %v820 = vld [vmem:[%s800 + $0x74] sm:$0xf]
  %v821 = vld [vmem:[%s800 + $0x78] sm:$0xff]
  %v822 = vld [vmem:[%s800 + $0x80] sm:$0xf]
  %v823 = vld [vmem:[%s800 + $0x84] sm:$0xff]
  %v824 = vld [vmem:[%s800 + $0x8c] sm:$0xf]
  %v825 = vld [vmem:[%s800 + $0x90] sm:$0xff]
  %v826 = vld [vmem:[%s800 + $0x98] sm:$0xf]
  %v827 = vld [vmem:[%s800 + $0x9c] sm:$0xff]
  %v828 = vld [vmem:[%s800 + $0xa4] sm:$0xf]
  %v829 = vld [vmem:[%s800 + $0xa8] sm:$0xff]
  %v830 = vld [vmem:[%s800 + $0xb0] sm:$0xf]
  %v831 = vld [vmem:[%s800 + $0xb4] sm:$0xff]
  %v832 = vld [vmem:[%s800 + $0xbc] sm:$0xf]
  %v833 = vunpack.c.h.b16 %v40
  %v834 = vunpack.c.h.b16 %v42
  %v835 = vpack.c.b16 %v834, %v833
  %v869 = vunpack.c.l.b16 %v801
  %v870 = vunpack.c.h.b16 %v801
  %v871 = vunpack.c.l.b16 %v802
  %v872 = vunpack.c.l.b16 %v803
  %v873 = vunpack.c.h.b16 %v803
  %v874 = vunpack.c.l.b16 %v804
  %v875 = vunpack.c.l.b16 %v805
  %v876 = vunpack.c.h.b16 %v805
  %v877 = vunpack.c.l.b16 %v806
  %v878 = vunpack.c.l.b16 %v807
  %v879 = vunpack.c.h.b16 %v807
  %v880 = vunpack.c.l.b16 %v808
  %v881 = vunpack.c.l.b16 %v809
  %v882 = vunpack.c.h.b16 %v809
  %v883 = vunpack.c.l.b16 %v810
  %v884 = vunpack.c.l.b16 %v811
  %v885 = vunpack.c.h.b16 %v811
  %v886 = vunpack.c.l.b16 %v812
  %v887 = vunpack.c.l.b16 %v813
  %v888 = vunpack.c.h.b16 %v813
  %v889 = vunpack.c.l.b16 %v814
  %v890 = vunpack.c.l.b16 %v815
  %v891 = vunpack.c.h.b16 %v815
  %v892 = vunpack.c.l.b16 %v816
  %v893 = vunpack.c.l.b16 %v817
  %v894 = vunpack.c.h.b16 %v817
  %v895 = vunpack.c.l.b16 %v818
  %v896 = vunpack.c.l.b16 %v819
  %v897 = vunpack.c.h.b16 %v819
  %v898 = vunpack.c.l.b16 %v820
  %v899 = vunpack.c.l.b16 %v821
  %v900 = vunpack.c.h.b16 %v821
  %v901 = vunpack.c.l.b16 %v822
  %v902 = vunpack.c.l.b16 %v823
  %v903 = vunpack.c.h.b16 %v823
  %v904 = vunpack.c.l.b16 %v824
  %v905 = vunpack.c.l.b16 %v825
  %v906 = vunpack.c.h.b16 %v825
  %v907 = vunpack.c.l.b16 %v826
  %v908 = vunpack.c.l.b16 %v827
  %v909 = vunpack.c.h.b16 %v827
  %v910 = vunpack.c.l.b16 %v828
  %v911 = vunpack.c.l.b16 %v829
  %v912 = vunpack.c.h.b16 %v829
  %v913 = vunpack.c.l.b16 %v830
  %v914 = vunpack.c.l.b16 %v831
  %v915 = vunpack.c.h.b16 %v831
  %v916 = vunpack.c.l.b16 %v832
  %v917 = vpack.c.b16 %v872, %v869
  %v918 = vpack.c.b16 %v873, %v870
  %v919 = vpack.c.b16 %v874, %v871
  %v920 = vpack.c.b16 %v878, %v875
  %v921 = vpack.c.b16 %v879, %v876
  %v922 = vpack.c.b16 %v880, %v877
  %v923 = vpack.c.b16 %v884, %v881
  %v924 = vpack.c.b16 %v885, %v882
  %v925 = vpack.c.b16 %v886, %v883
  %v926 = vpack.c.b16 %v890, %v887
  %v927 = vpack.c.b16 %v891, %v888
  %v928 = vpack.c.b16 %v892, %v889
  %v929 = vpack.c.b16 %v896, %v893
  %v930 = vpack.c.b16 %v897, %v894
  %v931 = vpack.c.b16 %v898, %v895
  %v932 = vpack.c.b16 %v902, %v899
  %v933 = vpack.c.b16 %v903, %v900
  %v934 = vpack.c.b16 %v904, %v901
  %v935 = vpack.c.b16 %v908, %v905
  %v936 = vpack.c.b16 %v909, %v906
  %v937 = vpack.c.b16 %v910, %v907
  %v938 = vpack.c.b16 %v914, %v911
  %v939 = vpack.c.b16 %v915, %v912
  %v940 = vpack.c.b16 %v916, %v913
  %965 = vmatprep.subr.bf16.mxu0 %v939
  %966 = vmatpush1.bf16.msra.mxu0 %v938
  %967 = vmatprep.subr.bf16.mxu0 %v936
  %968 = vmatpush1.bf16.msra.mxu0 %v935
  %969 = vmatprep.subr.bf16.mxu0 %v933
  %970 = vmatpush1.bf16.msra.mxu0 %v932
  %971 = vmatprep.subr.bf16.mxu0 %v930
  %972 = vmatpush1.bf16.msra.mxu0 %v929
  %973 = vmatprep.subr.bf16.mxu0 %v927
  %974 = vmatpush1.bf16.msra.mxu0 %v926
  %975 = vmatprep.subr.bf16.mxu0 %v924
  %976 = vmatpush1.bf16.msra.mxu0 %v923
  %977 = vmatprep.subr.bf16.mxu0 %v921
  %978 = vmatpush1.bf16.msra.mxu0 %v920
  %979 = vmatprep.subr.bf16.mxu0 %v918
  %980 = vmatpush1.bf16.msra.mxu0 %v917
  %981 = vmatprep.subr.bf16.mxu0 0
  %982 = vmatpush2.bf16.msra.mxu0 0
  %983 = vmatprep.subr.bf16.mxu0 0
  %984 = vmatpush2.bf16.msra.mxu0 0
  %985 = vmatprep.subr.bf16.mxu0 0
  %986 = vmatpush2.bf16.msra.mxu0 0
  %987 = vmatprep.subr.bf16.mxu0 0
  %988 = vmatpush2.bf16.msra.mxu0 0
  %989 = vmatprep.subr.bf16.mxu0 0
  %990 = vmatpush2.bf16.msra.mxu0 0
  %991 = vmatprep.subr.bf16.mxu0 0
  %992 = vmatpush2.bf16.msra.mxu0 0
  %993 = vmatprep.subr.bf16.mxu0 0
  %994 = vmatpush2.bf16.msra.mxu0 0
  %995 = vmatprep.subr.bf16.mxu0 0
  %996 = vmatpush2.bf16.msra.mxu0 0
  %997 = vmatprep.mubr.bf16.mxu0 0
  %998 = vmatmul.mubr.bf16.gmra.mxu0 %v835
  %v999 = vpop.f32.mrf.mxu0
  %v1000 = vadd.f32 0.0, %v999
  %v1001 = vpop.f32.mrf.mxu0
  %v1002 = vadd.f32 0.0, %v1001
  %v1003 = vpop.f32.mrf.mxu0
  %v1004 = vadd.f32 0.0, %v1003
  %v1005 = vpop.f32.mrf.mxu0
  %v1006 = vadd.f32 0.0, %v1005
  %1007 = vdwg.mxu0
  %1008 = vmatprep.subr.bf16.mxu0 0
  %1009 = vmatpush1.bf16.msra.mxu0 %v940
  %1010 = vmatprep.subr.bf16.mxu0 0
  %1011 = vmatpush1.bf16.msra.mxu0 %v937
  %1012 = vmatprep.subr.bf16.mxu0 0
  %1013 = vmatpush1.bf16.msra.mxu0 %v934
  %1014 = vmatprep.subr.bf16.mxu0 0
  %1015 = vmatpush1.bf16.msra.mxu0 %v931
  %1016 = vmatprep.subr.bf16.mxu0 0
  %1017 = vmatpush1.bf16.msra.mxu0 %v928
  %1018 = vmatprep.subr.bf16.mxu0 0
  %1019 = vmatpush1.bf16.msra.mxu0 %v925
  %1020 = vmatprep.subr.bf16.mxu0 0
  %1021 = vmatpush1.bf16.msra.mxu0 %v922
  %1022 = vmatprep.subr.bf16.mxu0 0
  %1023 = vmatpush1.bf16.msra.mxu0 %v919
  %1024 = vmatprep.subr.bf16.mxu0 0
  %1025 = vmatpush2.bf16.msra.mxu0 0
  %1026 = vmatprep.subr.bf16.mxu0 0
  %1027 = vmatpush2.bf16.msra.mxu0 0
  %1028 = vmatprep.subr.bf16.mxu0 0
  %1029 = vmatpush2.bf16.msra.mxu0 0
  %1030 = vmatprep.subr.bf16.mxu0 0
  %1031 = vmatpush2.bf16.msra.mxu0 0
  %1032 = vmatprep.subr.bf16.mxu0 0
  %1033 = vmatpush2.bf16.msra.mxu0 0
  %1034 = vmatprep.subr.bf16.mxu0 0
  %1035 = vmatpush2.bf16.msra.mxu0 0
  %1036 = vmatprep.subr.bf16.mxu0 0
  %1037 = vmatpush2.bf16.msra.mxu0 0
  %1038 = vmatprep.subr.bf16.mxu0 0
  %1039 = vmatpush2.bf16.msra.mxu0 0
  %1040 = vmatprep.mubr.bf16.mxu0 0
  %1041 = vmatmul.mubr.bf16.gmra.mxu0 %v835
  %v1042 = vpop.f32.mrf.mxu0
  %v1043 = vadd.f32 0.0, %v1042
  %v1044 = vpop.f32.mrf.mxu0
  %v1045 = vpop.f32.mrf.mxu0
  %v1046 = vadd.f32 0.0, %v1045
  %v1047 = vpop.f32.mrf.mxu0
  %1048 = vdwg.mxu0
  %v1049 = vadd.f32 %v794, %v1000
  %v1050 = vadd.f32 %v795, %v1002
  %v1051 = vadd.f32 %v796, %v1043
  %v1052 = vadd.f32 %v797, %v1004
  %v1053 = vadd.f32 %v798, %v1006
  %v1054 = vadd.f32 %v799, %v1046
  %v1056 = vshrl.u32 %v329, 16
  %v1058 = vshll.u32 %v329, 16
  %v1060 = vrot.slane %v1058, 1
  %v1061 = vor.u32 %v1056, %v1060
  %v1063 = vpack.c.b16 %v327, %v327
  %v1065 = vshll.u32 %v1063, 16
  %v1067 = vrot.slane %v1065, 1
  %vm1069 = vcmask 1047552
  %vm1070 = vsmask.f32 7424
  %vm1071 = vmand %vm1069, %vm1070
  %v1072 = vsel %vm1071, %v1061, %v1067
  %s1073 = scalar_lea.vmem %s1, 768
  %v1074 = vld [vmem:[%s1073] sm:$0xff]
  %v1075 = vld [vmem:[%s1073 + $0x8] sm:$0xf]
  %v1076 = vld [vmem:[%s1073 + $0xc] sm:$0xff]
  %v1077 = vld [vmem:[%s1073 + $0x14] sm:$0xf]
  %v1078 = vld [vmem:[%s1073 + $0x18] sm:$0xff]
  %v1079 = vld [vmem:[%s1073 + $0x20] sm:$0xf]
  %v1080 = vld [vmem:[%s1073 + $0x24] sm:$0xff]
  %v1081 = vld [vmem:[%s1073 + $0x2c] sm:$0xf]
  %v1082 = vld [vmem:[%s1073 + $0x30] sm:$0xff]
  %v1083 = vld [vmem:[%s1073 + $0x38] sm:$0xf]
  %v1084 = vld [vmem:[%s1073 + $0x3c] sm:$0xff]
  %v1085 = vld [vmem:[%s1073 + $0x44] sm:$0xf]
  %v1086 = vld [vmem:[%s1073 + $0x48] sm:$0xff]
  %v1087 = vld [vmem:[%s1073 + $0x50] sm:$0xf]
  %v1088 = vld [vmem:[%s1073 + $0x54] sm:$0xff]
  %v1089 = vld [vmem:[%s1073 + $0x5c] sm:$0xf]
  %v1090 = vld [vmem:[%s1073 + $0x60] sm:$0xff]
  %v1091 = vld [vmem:[%s1073 + $0x68] sm:$0xf]
  %v1092 = vld [vmem:[%s1073 + $0x6c] sm:$0xff]
  %v1093 = vld [vmem:[%s1073 + $0x74] sm:$0xf]
  %v1094 = vld [vmem:[%s1073 + $0x78] sm:$0xff]
  %v1095 = vld [vmem:[%s1073 + $0x80] sm:$0xf]
  %v1096 = vld [vmem:[%s1073 + $0x84] sm:$0xff]
  %v1097 = vld [vmem:[%s1073 + $0x8c] sm:$0xf]
  %v1098 = vld [vmem:[%s1073 + $0x90] sm:$0xff]
  %v1099 = vld [vmem:[%s1073 + $0x98] sm:$0xf]
  %v1100 = vld [vmem:[%s1073 + $0x9c] sm:$0xff]
  %v1101 = vld [vmem:[%s1073 + $0xa4] sm:$0xf]
  %v1102 = vld [vmem:[%s1073 + $0xa8] sm:$0xff]
  %v1103 = vld [vmem:[%s1073 + $0xb0] sm:$0xf]
  %v1104 = vld [vmem:[%s1073 + $0xb4] sm:$0xff]
  %v1105 = vld [vmem:[%s1073 + $0xbc] sm:$0xf]
  %v1138 = vunpack.c.l.b16 %v1074
  %v1139 = vunpack.c.h.b16 %v1074
  %v1140 = vunpack.c.l.b16 %v1075
  %v1141 = vunpack.c.l.b16 %v1076
  %v1142 = vunpack.c.h.b16 %v1076
  %v1143 = vunpack.c.l.b16 %v1077
  %v1144 = vunpack.c.l.b16 %v1078
  %v1145 = vunpack.c.h.b16 %v1078
  %v1146 = vunpack.c.l.b16 %v1079
  %v1147 = vunpack.c.l.b16 %v1080
  %v1148 = vunpack.c.h.b16 %v1080
  %v1149 = vunpack.c.l.b16 %v1081
  %v1150 = vunpack.c.l.b16 %v1082
  %v1151 = vunpack.c.h.b16 %v1082
  %v1152 = vunpack.c.l.b16 %v1083
  %v1153 = vunpack.c.l.b16 %v1084
  %v1154 = vunpack.c.h.b16 %v1084
  %v1155 = vunpack.c.l.b16 %v1085
  %v1156 = vunpack.c.l.b16 %v1086
  %v1157 = vunpack.c.h.b16 %v1086
  %v1158 = vunpack.c.l.b16 %v1087
  %v1159 = vunpack.c.l.b16 %v1088
  %v1160 = vunpack.c.h.b16 %v1088
  %v1161 = vunpack.c.l.b16 %v1089
  %v1162 = vunpack.c.l.b16 %v1090
  %v1163 = vunpack.c.h.b16 %v1090
  %v1164 = vunpack.c.l.b16 %v1091
  %v1165 = vunpack.c.l.b16 %v1092
  %v1166 = vunpack.c.h.b16 %v1092
  %v1167 = vunpack.c.l.b16 %v1093
  %v1168 = vunpack.c.l.b16 %v1094
  %v1169 = vunpack.c.h.b16 %v1094
  %v1170 = vunpack.c.l.b16 %v1095
  %v1171 = vunpack.c.l.b16 %v1096
  %v1172 = vunpack.c.h.b16 %v1096
  %v1173 = vunpack.c.l.b16 %v1097
  %v1174 = vunpack.c.l.b16 %v1098
  %v1175 = vunpack.c.h.b16 %v1098
  %v1176 = vunpack.c.l.b16 %v1099
  %v1177 = vunpack.c.l.b16 %v1100
  %v1178 = vunpack.c.h.b16 %v1100
  %v1179 = vunpack.c.l.b16 %v1101
  %v1180 = vunpack.c.l.b16 %v1102
  %v1181 = vunpack.c.h.b16 %v1102
  %v1182 = vunpack.c.l.b16 %v1103
  %v1183 = vunpack.c.l.b16 %v1104
  %v1184 = vunpack.c.h.b16 %v1104
  %v1185 = vunpack.c.l.b16 %v1105
  %v1186 = vpack.c.b16 %v1141, %v1138
  %v1187 = vpack.c.b16 %v1142, %v1139
  %v1188 = vpack.c.b16 %v1143, %v1140
  %v1189 = vpack.c.b16 %v1147, %v1144
  %v1190 = vpack.c.b16 %v1148, %v1145
  %v1191 = vpack.c.b16 %v1149, %v1146
  %v1192 = vpack.c.b16 %v1153, %v1150
  %v1193 = vpack.c.b16 %v1154, %v1151
  %v1194 = vpack.c.b16 %v1155, %v1152
  %v1195 = vpack.c.b16 %v1159, %v1156
  %v1196 = vpack.c.b16 %v1160, %v1157
  %v1197 = vpack.c.b16 %v1161, %v1158
  %v1198 = vpack.c.b16 %v1165, %v1162
  %v1199 = vpack.c.b16 %v1166, %v1163
  %v1200 = vpack.c.b16 %v1167, %v1164
  %v1201 = vpack.c.b16 %v1171, %v1168
  %v1202 = vpack.c.b16 %v1172, %v1169
  %v1203 = vpack.c.b16 %v1173, %v1170
  %v1204 = vpack.c.b16 %v1177, %v1174
  %v1205 = vpack.c.b16 %v1178, %v1175
  %v1206 = vpack.c.b16 %v1179, %v1176
  %v1207 = vpack.c.b16 %v1183, %v1180
  %v1208 = vpack.c.b16 %v1184, %v1181
  %v1209 = vpack.c.b16 %v1185, %v1182
  %1234 = vmatprep.subr.bf16.mxu0 %v1208
  %1235 = vmatpush1.bf16.msra.mxu0 %v1207
  %1236 = vmatprep.subr.bf16.mxu0 %v1205
  %1237 = vmatpush1.bf16.msra.mxu0 %v1204
  %1238 = vmatprep.subr.bf16.mxu0 %v1202
  %1239 = vmatpush1.bf16.msra.mxu0 %v1201
  %1240 = vmatprep.subr.bf16.mxu0 %v1199
  %1241 = vmatpush1.bf16.msra.mxu0 %v1198
  %1242 = vmatprep.subr.bf16.mxu0 %v1196
  %1243 = vmatpush1.bf16.msra.mxu0 %v1195
  %1244 = vmatprep.subr.bf16.mxu0 %v1193
  %1245 = vmatpush1.bf16.msra.mxu0 %v1192
  %1246 = vmatprep.subr.bf16.mxu0 %v1190
  %1247 = vmatpush1.bf16.msra.mxu0 %v1189
  %1248 = vmatprep.subr.bf16.mxu0 %v1187
  %1249 = vmatpush1.bf16.msra.mxu0 %v1186
  %1250 = vmatprep.subr.bf16.mxu0 0
  %1251 = vmatpush2.bf16.msra.mxu0 0
  %1252 = vmatprep.subr.bf16.mxu0 0
  %1253 = vmatpush2.bf16.msra.mxu0 0
  %1254 = vmatprep.subr.bf16.mxu0 0
  %1255 = vmatpush2.bf16.msra.mxu0 0
  %1256 = vmatprep.subr.bf16.mxu0 0
  %1257 = vmatpush2.bf16.msra.mxu0 0
  %1258 = vmatprep.subr.bf16.mxu0 0
  %1259 = vmatpush2.bf16.msra.mxu0 0
  %1260 = vmatprep.subr.bf16.mxu0 0
  %1261 = vmatpush2.bf16.msra.mxu0 0
  %1262 = vmatprep.subr.bf16.mxu0 0
  %1263 = vmatpush2.bf16.msra.mxu0 0
  %1264 = vmatprep.subr.bf16.mxu0 0
  %1265 = vmatpush2.bf16.msra.mxu0 0
  %1266 = vmatprep.mubr.bf16.mxu0 0
  %1267 = vmatmul.mubr.bf16.gmra.mxu0 %v1072
  %v1268 = vpop.f32.mrf.mxu0
  %v1269 = vadd.f32 0.0, %v1268
  %v1270 = vpop.f32.mrf.mxu0
  %v1271 = vadd.f32 0.0, %v1270
  %v1272 = vpop.f32.mrf.mxu0
  %v1273 = vadd.f32 0.0, %v1272
  %v1274 = vpop.f32.mrf.mxu0
  %v1275 = vadd.f32 0.0, %v1274
  %1276 = vdwg.mxu0
  %1277 = vmatprep.subr.bf16.mxu0 0
  %1278 = vmatpush1.bf16.msra.mxu0 %v1209
  %1279 = vmatprep.subr.bf16.mxu0 0
  %1280 = vmatpush1.bf16.msra.mxu0 %v1206
  %1281 = vmatprep.subr.bf16.mxu0 0
  %1282 = vmatpush1.bf16.msra.mxu0 %v1203
  %1283 = vmatprep.subr.bf16.mxu0 0
  %1284 = vmatpush1.bf16.msra.mxu0 %v1200
  %1285 = vmatprep.subr.bf16.mxu0 0
  %1286 = vmatpush1.bf16.msra.mxu0 %v1197
  %1287 = vmatprep.subr.bf16.mxu0 0
  %1288 = vmatpush1.bf16.msra.mxu0 %v1194
  %1289 = vmatprep.subr.bf16.mxu0 0
  %1290 = vmatpush1.bf16.msra.mxu0 %v1191
  %1291 = vmatprep.subr.bf16.mxu0 0
  %1292 = vmatpush1.bf16.msra.mxu0 %v1188
  %1293 = vmatprep.subr.bf16.mxu0 0
  %1294 = vmatpush2.bf16.msra.mxu0 0
  %1295 = vmatprep.subr.bf16.mxu0 0
  %1296 = vmatpush2.bf16.msra.mxu0 0
  %1297 = vmatprep.subr.bf16.mxu0 0
  %1298 = vmatpush2.bf16.msra.mxu0 0
  %1299 = vmatprep.subr.bf16.mxu0 0
  %1300 = vmatpush2.bf16.msra.mxu0 0
  %1301 = vmatprep.subr.bf16.mxu0 0
  %1302 = vmatpush2.bf16.msra.mxu0 0
  %1303 = vmatprep.subr.bf16.mxu0 0
  %1304 = vmatpush2.bf16.msra.mxu0 0
  %1305 = vmatprep.subr.bf16.mxu0 0
  %1306 = vmatpush2.bf16.msra.mxu0 0
  %1307 = vmatprep.subr.bf16.mxu0 0
  %1308 = vmatpush2.bf16.msra.mxu0 0
  %1309 = vmatprep.mubr.bf16.mxu0 0
  %1310 = vmatmul.mubr.bf16.gmra.mxu0 %v1072
  %v1311 = vpop.f32.mrf.mxu0
  %v1312 = vadd.f32 0.0, %v1311
  %v1313 = vpop.f32.mrf.mxu0
  %v1314 = vpop.f32.mrf.mxu0
  %v1315 = vadd.f32 0.0, %v1314
  %v1316 = vpop.f32.mrf.mxu0
  %1317 = vdwg.mxu0
  %v1318 = vadd.f32 %v1049, %v1269
  %v1319 = vadd.f32 %v1050, %v1271
  %v1320 = vadd.f32 %v1051, %v1312
  %v1321 = vadd.f32 %v1052, %v1273
  %v1322 = vadd.f32 %v1053, %v1275
  %v1323 = vadd.f32 %v1054, %v1315
  %1324 = vmatprep.subr.bf16.mxu0 %v217
  %1325 = vmatpush1.bf16.msra.mxu0 %v216
  %1326 = vmatprep.subr.bf16.mxu0 %v214
  %1327 = vmatpush1.bf16.msra.mxu0 %v213
  %1328 = vmatprep.subr.bf16.mxu0 %v211
  %1329 = vmatpush1.bf16.msra.mxu0 %v210
  %1330 = vmatprep.subr.bf16.mxu0 %v208
  %1331 = vmatpush1.bf16.msra.mxu0 %v207
  %1332 = vmatprep.subr.bf16.mxu0 %v205
  %1333 = vmatpush1.bf16.msra.mxu0 %v204
  %1334 = vmatprep.subr.bf16.mxu0 %v202
  %1335 = vmatpush1.bf16.msra.mxu0 %v201
  %1336 = vmatprep.subr.bf16.mxu0 %v199
  %1337 = vmatpush1.bf16.msra.mxu0 %v198
  %1338 = vmatprep.subr.bf16.mxu0 %v196
  %1339 = vmatpush1.bf16.msra.mxu0 %v195
  %1340 = vmatprep.subr.bf16.mxu0 0
  %1341 = vmatpush2.bf16.msra.mxu0 0
  %1342 = vmatprep.subr.bf16.mxu0 0
  %1343 = vmatpush2.bf16.msra.mxu0 0
  %1344 = vmatprep.subr.bf16.mxu0 0
  %1345 = vmatpush2.bf16.msra.mxu0 0
  %1346 = vmatprep.subr.bf16.mxu0 0
  %1347 = vmatpush2.bf16.msra.mxu0 0
  %1348 = vmatprep.subr.bf16.mxu0 0
  %1349 = vmatpush2.bf16.msra.mxu0 0
  %1350 = vmatprep.subr.bf16.mxu0 0
  %1351 = vmatpush2.bf16.msra.mxu0 0
  %1352 = vmatprep.subr.bf16.mxu0 0
  %1353 = vmatpush2.bf16.msra.mxu0 0
  %1354 = vmatprep.subr.bf16.mxu0 0
  %1355 = vmatpush2.bf16.msra.mxu0 0
  %1356 = vmatprep.mubr.bf16.mxu0 0
  %1357 = vmatmul.mubr.bf16.gmra.mxu0 %v580
  %v1358 = vpop.f32.mrf.mxu0
  %v1359 = vadd.f32 0.0, %v1358
  %v1360 = vpop.f32.mrf.mxu0
  %v1361 = vadd.f32 0.0, %v1360
  %v1362 = vpop.f32.mrf.mxu0
  %v1363 = vadd.f32 0.0, %v1362
  %v1364 = vpop.f32.mrf.mxu0
  %v1365 = vadd.f32 0.0, %v1364
  %1366 = vdwg.mxu0
  %1367 = vmatprep.subr.bf16.mxu0 0
  %1368 = vmatpush1.bf16.msra.mxu0 %v218
  %1369 = vmatprep.subr.bf16.mxu0 0
  %1370 = vmatpush1.bf16.msra.mxu0 %v215
  %1371 = vmatprep.subr.bf16.mxu0 0
  %1372 = vmatpush1.bf16.msra.mxu0 %v212
  %1373 = vmatprep.subr.bf16.mxu0 0
  %1374 = vmatpush1.bf16.msra.mxu0 %v209
  %1375 = vmatprep.subr.bf16.mxu0 0
  %1376 = vmatpush1.bf16.msra.mxu0 %v206
  %1377 = vmatprep.subr.bf16.mxu0 0
  %1378 = vmatpush1.bf16.msra.mxu0 %v203
  %1379 = vmatprep.subr.bf16.mxu0 0
  %1380 = vmatpush1.bf16.msra.mxu0 %v200
  %1381 = vmatprep.subr.bf16.mxu0 0
  %1382 = vmatpush1.bf16.msra.mxu0 %v197
  %1383 = vmatprep.subr.bf16.mxu0 0
  %1384 = vmatpush2.bf16.msra.mxu0 0
  %1385 = vmatprep.subr.bf16.mxu0 0
  %1386 = vmatpush2.bf16.msra.mxu0 0
  %1387 = vmatprep.subr.bf16.mxu0 0
  %1388 = vmatpush2.bf16.msra.mxu0 0
  %1389 = vmatprep.subr.bf16.mxu0 0
  %1390 = vmatpush2.bf16.msra.mxu0 0
  %1391 = vmatprep.subr.bf16.mxu0 0
  %1392 = vmatpush2.bf16.msra.mxu0 0
  %1393 = vmatprep.subr.bf16.mxu0 0
  %1394 = vmatpush2.bf16.msra.mxu0 0
  %1395 = vmatprep.subr.bf16.mxu0 0
  %1396 = vmatpush2.bf16.msra.mxu0 0
  %1397 = vmatprep.subr.bf16.mxu0 0
  %1398 = vmatpush2.bf16.msra.mxu0 0
  %1399 = vmatprep.mubr.bf16.mxu0 0
  %1400 = vmatmul.mubr.bf16.gmra.mxu0 %v580
  %v1401 = vpop.f32.mrf.mxu0
  %v1402 = vadd.f32 0.0, %v1401
  %v1403 = vpop.f32.mrf.mxu0
  %v1404 = vpop.f32.mrf.mxu0
  %v1405 = vadd.f32 0.0, %v1404
  %v1406 = vpop.f32.mrf.mxu0
  %1407 = vdwg.mxu0
  %1408 = vmatprep.subr.bf16.mxu0 %v433
  %1409 = vmatpush1.bf16.msra.mxu0 %v432
  %1410 = vmatprep.subr.bf16.mxu0 %v430
  %1411 = vmatpush1.bf16.msra.mxu0 %v429
  %1412 = vmatprep.subr.bf16.mxu0 %v427
  %1413 = vmatpush1.bf16.msra.mxu0 %v426
  %1414 = vmatprep.subr.bf16.mxu0 %v424
  %1415 = vmatpush1.bf16.msra.mxu0 %v423
  %1416 = vmatprep.subr.bf16.mxu0 %v421
  %1417 = vmatpush1.bf16.msra.mxu0 %v420
  %1418 = vmatprep.subr.bf16.mxu0 %v418
  %1419 = vmatpush1.bf16.msra.mxu0 %v417
  %1420 = vmatprep.subr.bf16.mxu0 %v415
  %1421 = vmatpush1.bf16.msra.mxu0 %v414
  %1422 = vmatprep.subr.bf16.mxu0 %v412
  %1423 = vmatpush1.bf16.msra.mxu0 %v411
  %1424 = vmatprep.subr.bf16.mxu0 0
  %1425 = vmatpush2.bf16.msra.mxu0 0
  %1426 = vmatprep.subr.bf16.mxu0 0
  %1427 = vmatpush2.bf16.msra.mxu0 0
  %1428 = vmatprep.subr.bf16.mxu0 0
  %1429 = vmatpush2.bf16.msra.mxu0 0
  %1430 = vmatprep.subr.bf16.mxu0 0
  %1431 = vmatpush2.bf16.msra.mxu0 0
  %1432 = vmatprep.subr.bf16.mxu0 0
  %1433 = vmatpush2.bf16.msra.mxu0 0
  %1434 = vmatprep.subr.bf16.mxu0 0
  %1435 = vmatpush2.bf16.msra.mxu0 0
  %1436 = vmatprep.subr.bf16.mxu0 0
  %1437 = vmatpush2.bf16.msra.mxu0 0
  %1438 = vmatprep.subr.bf16.mxu0 0
  %1439 = vmatpush2.bf16.msra.mxu0 0
  %1440 = vmatprep.mubr.bf16.mxu0 0
  %1441 = vmatmul.mubr.bf16.gmra.mxu0 %v113
  %v1442 = vpop.f32.mrf.mxu0
  %v1443 = vadd.f32 %v1359, %v1442
  %v1444 = vpop.f32.mrf.mxu0
  %v1445 = vadd.f32 %v1361, %v1444
  %v1446 = vpop.f32.mrf.mxu0
  %v1447 = vadd.f32 %v1363, %v1446
  %v1448 = vpop.f32.mrf.mxu0
  %v1449 = vadd.f32 %v1365, %v1448
  %1450 = vdwg.mxu0
  %1451 = vmatprep.subr.bf16.mxu0 0
  %1452 = vmatpush1.bf16.msra.mxu0 %v434
  %1453 = vmatprep.subr.bf16.mxu0 0
  %1454 = vmatpush1.bf16.msra.mxu0 %v431
  %1455 = vmatprep.subr.bf16.mxu0 0
  %1456 = vmatpush1.bf16.msra.mxu0 %v428
  %1457 = vmatprep.subr.bf16.mxu0 0
  %1458 = vmatpush1.bf16.msra.mxu0 %v425
  %1459 = vmatprep.subr.bf16.mxu0 0
  %1460 = vmatpush1.bf16.msra.mxu0 %v422
  %1461 = vmatprep.subr.bf16.mxu0 0
  %1462 = vmatpush1.bf16.msra.mxu0 %v419
  %1463 = vmatprep.subr.bf16.mxu0 0
  %1464 = vmatpush1.bf16.msra.mxu0 %v416
  %1465 = vmatprep.subr.bf16.mxu0 0
  %1466 = vmatpush1.bf16.msra.mxu0 %v413
  %1467 = vmatprep.subr.bf16.mxu0 0
  %1468 = vmatpush2.bf16.msra.mxu0 0
  %1469 = vmatprep.subr.bf16.mxu0 0
  %1470 = vmatpush2.bf16.msra.mxu0 0
  %1471 = vmatprep.subr.bf16.mxu0 0
  %1472 = vmatpush2.bf16.msra.mxu0 0
  %1473 = vmatprep.subr.bf16.mxu0 0
  %1474 = vmatpush2.bf16.msra.mxu0 0
  %1475 = vmatprep.subr.bf16.mxu0 0
  %1476 = vmatpush2.bf16.msra.mxu0 0
  %1477 = vmatprep.subr.bf16.mxu0 0
  %1478 = vmatpush2.bf16.msra.mxu0 0
  %1479 = vmatprep.subr.bf16.mxu0 0
  %1480 = vmatpush2.bf16.msra.mxu0 0
  %1481 = vmatprep.subr.bf16.mxu0 0
  %1482 = vmatpush2.bf16.msra.mxu0 0
  %1483 = vmatprep.mubr.bf16.mxu0 0
  %1484 = vmatmul.mubr.bf16.gmra.mxu0 %v113
  %v1485 = vpop.f32.mrf.mxu0
  %v1486 = vadd.f32 %v1402, %v1485
  %v1487 = vpop.f32.mrf.mxu0
  %v1488 = vpop.f32.mrf.mxu0
  %v1489 = vadd.f32 %v1405, %v1488
  %v1490 = vpop.f32.mrf.mxu0
  %1491 = vdwg.mxu0
  %1492 = vmatprep.subr.bf16.mxu0 %v684
  %1493 = vmatpush1.bf16.msra.mxu0 %v683
  %1494 = vmatprep.subr.bf16.mxu0 %v681
  %1495 = vmatpush1.bf16.msra.mxu0 %v680
  %1496 = vmatprep.subr.bf16.mxu0 %v678
  %1497 = vmatpush1.bf16.msra.mxu0 %v677
  %1498 = vmatprep.subr.bf16.mxu0 %v675
  %1499 = vmatpush1.bf16.msra.mxu0 %v674
  %1500 = vmatprep.subr.bf16.mxu0 %v672
  %1501 = vmatpush1.bf16.msra.mxu0 %v671
  %1502 = vmatprep.subr.bf16.mxu0 %v669
  %1503 = vmatpush1.bf16.msra.mxu0 %v668
  %1504 = vmatprep.subr.bf16.mxu0 %v666
  %1505 = vmatpush1.bf16.msra.mxu0 %v665
  %1506 = vmatprep.subr.bf16.mxu0 %v663
  %1507 = vmatpush1.bf16.msra.mxu0 %v662
  %1508 = vmatprep.subr.bf16.mxu0 0
  %1509 = vmatpush2.bf16.msra.mxu0 0
  %1510 = vmatprep.subr.bf16.mxu0 0
  %1511 = vmatpush2.bf16.msra.mxu0 0
  %1512 = vmatprep.subr.bf16.mxu0 0
  %1513 = vmatpush2.bf16.msra.mxu0 0
  %1514 = vmatprep.subr.bf16.mxu0 0
  %1515 = vmatpush2.bf16.msra.mxu0 0
  %1516 = vmatprep.subr.bf16.mxu0 0
  %1517 = vmatpush2.bf16.msra.mxu0 0
  %1518 = vmatprep.subr.bf16.mxu0 0
  %1519 = vmatpush2.bf16.msra.mxu0 0
  %1520 = vmatprep.subr.bf16.mxu0 0
  %1521 = vmatpush2.bf16.msra.mxu0 0
  %1522 = vmatprep.subr.bf16.mxu0 0
  %1523 = vmatpush2.bf16.msra.mxu0 0
  %1524 = vmatprep.mubr.bf16.mxu0 0
  %1525 = vmatmul.mubr.bf16.gmra.mxu0 %v835
  %v1526 = vpop.f32.mrf.mxu0
  %v1527 = vadd.f32 0.0, %v1526
  %v1528 = vpop.f32.mrf.mxu0
  %v1529 = vadd.f32 0.0, %v1528
  %v1530 = vpop.f32.mrf.mxu0
  %v1531 = vadd.f32 0.0, %v1530
  %v1532 = vpop.f32.mrf.mxu0
  %v1533 = vadd.f32 0.0, %v1532
  %1534 = vdwg.mxu0
  %1535 = vmatprep.subr.bf16.mxu0 0
  %1536 = vmatpush1.bf16.msra.mxu0 %v685
  %1537 = vmatprep.subr.bf16.mxu0 0
  %1538 = vmatpush1.bf16.msra.mxu0 %v682
  %1539 = vmatprep.subr.bf16.mxu0 0
  %1540 = vmatpush1.bf16.msra.mxu0 %v679
  %1541 = vmatprep.subr.bf16.mxu0 0
  %1542 = vmatpush1.bf16.msra.mxu0 %v676
  %1543 = vmatprep.subr.bf16.mxu0 0
  %1544 = vmatpush1.bf16.msra.mxu0 %v673
  %1545 = vmatprep.subr.bf16.mxu0 0
  %1546 = vmatpush1.bf16.msra.mxu0 %v670
  %1547 = vmatprep.subr.bf16.mxu0 0
  %1548 = vmatpush1.bf16.msra.mxu0 %v667
  %1549 = vmatprep.subr.bf16.mxu0 0
  %1550 = vmatpush1.bf16.msra.mxu0 %v664
  %1551 = vmatprep.subr.bf16.mxu0 0
  %1552 = vmatpush2.bf16.msra.mxu0 0
  %1553 = vmatprep.subr.bf16.mxu0 0
  %1554 = vmatpush2.bf16.msra.mxu0 0
  %1555 = vmatprep.subr.bf16.mxu0 0
  %1556 = vmatpush2.bf16.msra.mxu0 0
  %1557 = vmatprep.subr.bf16.mxu0 0
  %1558 = vmatpush2.bf16.msra.mxu0 0
  %1559 = vmatprep.subr.bf16.mxu0 0
  %1560 = vmatpush2.bf16.msra.mxu0 0
  %1561 = vmatprep.subr.bf16.mxu0 0
  %1562 = vmatpush2.bf16.msra.mxu0 0
  %1563 = vmatprep.subr.bf16.mxu0 0
  %1564 = vmatpush2.bf16.msra.mxu0 0
  %1565 = vmatprep.subr.bf16.mxu0 0
  %1566 = vmatpush2.bf16.msra.mxu0 0
  %1567 = vmatprep.mubr.bf16.mxu0 0
  %1568 = vmatmul.mubr.bf16.gmra.mxu0 %v835
  %v1569 = vpop.f32.mrf.mxu0
  %v1570 = vadd.f32 0.0, %v1569
  %v1571 = vpop.f32.mrf.mxu0
  %v1572 = vpop.f32.mrf.mxu0
  %v1573 = vadd.f32 0.0, %v1572
  %v1574 = vpop.f32.mrf.mxu0
  %1575 = vdwg.mxu0
  %v1576 = vadd.f32 %v1443, %v1527
  %v1577 = vadd.f32 %v1445, %v1529
  %v1578 = vadd.f32 %v1486, %v1570
  %v1579 = vadd.f32 %v1447, %v1531
  %v1580 = vadd.f32 %v1449, %v1533
  %v1581 = vadd.f32 %v1489, %v1573
  %1582 = vmatprep.subr.bf16.mxu0 %v939
  %1583 = vmatpush1.bf16.msra.mxu0 %v938
  %1584 = vmatprep.subr.bf16.mxu0 %v936
  %1585 = vmatpush1.bf16.msra.mxu0 %v935
  %1586 = vmatprep.subr.bf16.mxu0 %v933
  %1587 = vmatpush1.bf16.msra.mxu0 %v932
  %1588 = vmatprep.subr.bf16.mxu0 %v930
  %1589 = vmatpush1.bf16.msra.mxu0 %v929
  %1590 = vmatprep.subr.bf16.mxu0 %v927
  %1591 = vmatpush1.bf16.msra.mxu0 %v926
  %1592 = vmatprep.subr.bf16.mxu0 %v924
  %1593 = vmatpush1.bf16.msra.mxu0 %v923
  %1594 = vmatprep.subr.bf16.mxu0 %v921
  %1595 = vmatpush1.bf16.msra.mxu0 %v920
  %1596 = vmatprep.subr.bf16.mxu0 %v918
  %1597 = vmatpush1.bf16.msra.mxu0 %v917
  %1598 = vmatprep.subr.bf16.mxu0 0
  %1599 = vmatpush2.bf16.msra.mxu0 0
  %1600 = vmatprep.subr.bf16.mxu0 0
  %1601 = vmatpush2.bf16.msra.mxu0 0
  %1602 = vmatprep.subr.bf16.mxu0 0
  %1603 = vmatpush2.bf16.msra.mxu0 0
  %1604 = vmatprep.subr.bf16.mxu0 0
  %1605 = vmatpush2.bf16.msra.mxu0 0
  %1606 = vmatprep.subr.bf16.mxu0 0
  %1607 = vmatpush2.bf16.msra.mxu0 0
  %1608 = vmatprep.subr.bf16.mxu0 0
  %1609 = vmatpush2.bf16.msra.mxu0 0
  %1610 = vmatprep.subr.bf16.mxu0 0
  %1611 = vmatpush2.bf16.msra.mxu0 0
  %1612 = vmatprep.subr.bf16.mxu0 0
  %1613 = vmatpush2.bf16.msra.mxu0 0
  %1614 = vmatprep.mubr.bf16.mxu0 0
  %1615 = vmatmul.mubr.bf16.gmra.mxu0 %v1072
  %v1616 = vpop.f32.mrf.mxu0
  %v1617 = vadd.f32 0.0, %v1616
  %v1618 = vpop.f32.mrf.mxu0
  %v1619 = vadd.f32 0.0, %v1618
  %v1620 = vpop.f32.mrf.mxu0
  %v1621 = vadd.f32 0.0, %v1620
  %v1622 = vpop.f32.mrf.mxu0
  %v1623 = vadd.f32 0.0, %v1622
  %1624 = vdwg.mxu0
  %1625 = vmatprep.subr.bf16.mxu0 0
  %1626 = vmatpush1.bf16.msra.mxu0 %v940
  %1627 = vmatprep.subr.bf16.mxu0 0
  %1628 = vmatpush1.bf16.msra.mxu0 %v937
  %1629 = vmatprep.subr.bf16.mxu0 0
  %1630 = vmatpush1.bf16.msra.mxu0 %v934
  %1631 = vmatprep.subr.bf16.mxu0 0
  %1632 = vmatpush1.bf16.msra.mxu0 %v931
  %1633 = vmatprep.subr.bf16.mxu0 0
  %1634 = vmatpush1.bf16.msra.mxu0 %v928
  %1635 = vmatprep.subr.bf16.mxu0 0
  %1636 = vmatpush1.bf16.msra.mxu0 %v925
  %1637 = vmatprep.subr.bf16.mxu0 0
  %1638 = vmatpush1.bf16.msra.mxu0 %v922
  %1639 = vmatprep.subr.bf16.mxu0 0
  %1640 = vmatpush1.bf16.msra.mxu0 %v919
  %1641 = vmatprep.subr.bf16.mxu0 0
  %1642 = vmatpush2.bf16.msra.mxu0 0
  %1643 = vmatprep.subr.bf16.mxu0 0
  %1644 = vmatpush2.bf16.msra.mxu0 0
  %1645 = vmatprep.subr.bf16.mxu0 0
  %1646 = vmatpush2.bf16.msra.mxu0 0
  %1647 = vmatprep.subr.bf16.mxu0 0
  %1648 = vmatpush2.bf16.msra.mxu0 0
  %1649 = vmatprep.subr.bf16.mxu0 0
  %1650 = vmatpush2.bf16.msra.mxu0 0
  %1651 = vmatprep.subr.bf16.mxu0 0
  %1652 = vmatpush2.bf16.msra.mxu0 0
  %1653 = vmatprep.subr.bf16.mxu0 0
  %1654 = vmatpush2.bf16.msra.mxu0 0
  %1655 = vmatprep.subr.bf16.mxu0 0
  %1656 = vmatpush2.bf16.msra.mxu0 0
  %1657 = vmatprep.mubr.bf16.mxu0 0
  %1658 = vmatmul.mubr.bf16.gmra.mxu0 %v1072
  %v1659 = vpop.f32.mrf.mxu0
  %v1660 = vadd.f32 0.0, %v1659
  %v1661 = vpop.f32.mrf.mxu0
  %v1662 = vpop.f32.mrf.mxu0
  %v1663 = vadd.f32 0.0, %v1662
  %v1664 = vpop.f32.mrf.mxu0
  %1665 = vdwg.mxu0
  %v1666 = vadd.f32 %v1576, %v1617
  %v1667 = vadd.f32 %v1577, %v1619
  %v1668 = vadd.f32 %v1578, %v1660
  %v1669 = vadd.f32 %v1579, %v1621
  %v1670 = vadd.f32 %v1580, %v1623
  %v1671 = vadd.f32 %v1581, %v1663
  %v1673 = vshrl.u32 %v113, 16
  %v1675 = vshll.u32 %v113, 16
  %v1677 = vrot.slane %v1675, 1
  %v1678 = vor.u32 %v1673, %v1677
  %v1680 = vpack.c.b16 %v111, %v111
  %v1682 = vshll.u32 %v1680, 16
  %v1684 = vrot.slane %v1682, 1
  %v1686 = vsel %vm1071, %v1678, %v1684
  %1687 = vmatprep.subr.bf16.mxu0 %v1208
  %1688 = vmatpush1.bf16.msra.mxu0 %v1207
  %1689 = vmatprep.subr.bf16.mxu0 %v1205
  %1690 = vmatpush1.bf16.msra.mxu0 %v1204
  %1691 = vmatprep.subr.bf16.mxu0 %v1202
  %1692 = vmatpush1.bf16.msra.mxu0 %v1201
  %1693 = vmatprep.subr.bf16.mxu0 %v1199
  %1694 = vmatpush1.bf16.msra.mxu0 %v1198
  %1695 = vmatprep.subr.bf16.mxu0 %v1196
  %1696 = vmatpush1.bf16.msra.mxu0 %v1195
  %1697 = vmatprep.subr.bf16.mxu0 %v1193
  %1698 = vmatpush1.bf16.msra.mxu0 %v1192
  %1699 = vmatprep.subr.bf16.mxu0 %v1190
  %1700 = vmatpush1.bf16.msra.mxu0 %v1189
  %1701 = vmatprep.subr.bf16.mxu0 %v1187
  %1702 = vmatpush1.bf16.msra.mxu0 %v1186
  %1703 = vmatprep.subr.bf16.mxu0 0
  %1704 = vmatpush2.bf16.msra.mxu0 0
  %1705 = vmatprep.subr.bf16.mxu0 0
  %1706 = vmatpush2.bf16.msra.mxu0 0
  %1707 = vmatprep.subr.bf16.mxu0 0
  %1708 = vmatpush2.bf16.msra.mxu0 0
  %1709 = vmatprep.subr.bf16.mxu0 0
  %1710 = vmatpush2.bf16.msra.mxu0 0
  %1711 = vmatprep.subr.bf16.mxu0 0
  %1712 = vmatpush2.bf16.msra.mxu0 0
  %1713 = vmatprep.subr.bf16.mxu0 0
  %1714 = vmatpush2.bf16.msra.mxu0 0
  %1715 = vmatprep.subr.bf16.mxu0 0
  %1716 = vmatpush2.bf16.msra.mxu0 0
  %1717 = vmatprep.subr.bf16.mxu0 0
  %1718 = vmatpush2.bf16.msra.mxu0 0
  %1719 = vmatprep.mubr.bf16.mxu0 0
  %1720 = vmatmul.mubr.bf16.gmra.mxu0 %v1686
  %v1721 = vpop.f32.mrf.mxu0
  %v1722 = vadd.f32 0.0, %v1721
  %v1723 = vpop.f32.mrf.mxu0
  %v1724 = vadd.f32 0.0, %v1723
  %v1725 = vpop.f32.mrf.mxu0
  %v1726 = vadd.f32 0.0, %v1725
  %v1727 = vpop.f32.mrf.mxu0
  %v1728 = vadd.f32 0.0, %v1727
  %1729 = vdwg.mxu0
  %1730 = vmatprep.subr.bf16.mxu0 0
  %1731 = vmatpush1.bf16.msra.mxu0 %v1209
  %1732 = vmatprep.subr.bf16.mxu0 0
  %1733 = vmatpush1.bf16.msra.mxu0 %v1206
  %1734 = vmatprep.subr.bf16.mxu0 0
  %1735 = vmatpush1.bf16.msra.mxu0 %v1203
  %1736 = vmatprep.subr.bf16.mxu0 0
  %1737 = vmatpush1.bf16.msra.mxu0 %v1200
  %1738 = vmatprep.subr.bf16.mxu0 0
  %1739 = vmatpush1.bf16.msra.mxu0 %v1197
  %1740 = vmatprep.subr.bf16.mxu0 0
  %1741 = vmatpush1.bf16.msra.mxu0 %v1194
  %1742 = vmatprep.subr.bf16.mxu0 0
  %1743 = vmatpush1.bf16.msra.mxu0 %v1191
  %1744 = vmatprep.subr.bf16.mxu0 0
  %1745 = vmatpush1.bf16.msra.mxu0 %v1188
  %1746 = vmatprep.subr.bf16.mxu0 0
  %1747 = vmatpush2.bf16.msra.mxu0 0
  %1748 = vmatprep.subr.bf16.mxu0 0
  %1749 = vmatpush2.bf16.msra.mxu0 0
  %1750 = vmatprep.subr.bf16.mxu0 0
  %1751 = vmatpush2.bf16.msra.mxu0 0
  %1752 = vmatprep.subr.bf16.mxu0 0
  %1753 = vmatpush2.bf16.msra.mxu0 0
  %1754 = vmatprep.subr.bf16.mxu0 0
  %1755 = vmatpush2.bf16.msra.mxu0 0
  %1756 = vmatprep.subr.bf16.mxu0 0
  %1757 = vmatpush2.bf16.msra.mxu0 0
  %1758 = vmatprep.subr.bf16.mxu0 0
  %1759 = vmatpush2.bf16.msra.mxu0 0
  %1760 = vmatprep.subr.bf16.mxu0 0
  %1761 = vmatpush2.bf16.msra.mxu0 0
  %1762 = vmatprep.mubr.bf16.mxu0 0
  %1763 = vmatmul.mubr.bf16.gmra.mxu0 %v1686
  %v1764 = vpop.f32.mrf.mxu0
  %v1765 = vadd.f32 0.0, %v1764
  %v1766 = vpop.f32.mrf.mxu0
  %v1767 = vpop.f32.mrf.mxu0
  %v1768 = vadd.f32 0.0, %v1767
  %v1769 = vpop.f32.mrf.mxu0
  %1770 = vdwg.mxu0
  %v1771 = vadd.f32 %v1666, %v1722
  %v1772 = vadd.f32 %v1667, %v1724
  %v1773 = vadd.f32 %v1668, %v1765
  %v1774 = vadd.f32 %v1669, %v1726
  %v1775 = vadd.f32 %v1670, %v1728
  %v1776 = vadd.f32 %v1671, %v1768
  %v1777 = vmax.f32 %v1318, %v1771
  %v1778 = vmax.f32 %v1319, %v1772
  %v1779 = vmax.f32 %v1320, %v1773
  %v1780 = vmax.f32 %v1321, %v1774
  %v1781 = vmax.f32 %v1322, %v1775
  %v1782 = vmax.f32 %v1323, %v1776
  %1787 = vrot.lane.b32.xlu0 %v1778, 116
  %v1788 = vpop.permute.xlu0 %1787
  %1789 = vrot.lane.b32.xlu0 %v1779, 116
  %v1790 = vpop.permute.xlu0 %1789
  %1791 = vrot.lane.b32.xlu0 %v1781, 116
  %v1792 = vpop.permute.xlu0 %1791
  %1793 = vrot.lane.b32.xlu0 %v1782, 116
  %v1794 = vpop.permute.xlu0 %1793
  %vm1795 = vcmask 949248
  %v1796 = vsel %vm1795, %v1788, %v1790
  %v1797 = vsel %vm1795, %v1792, %v1794
  %v1802 = vmax.f32 %v1777, %v1796
  %v1803 = vmax.f32 %v1778, %v1790
  %v1804 = vmax.f32 %v1780, %v1797
  %v1805 = vmax.f32 %v1781, %v1794
  %v1807 = vlaneseq
  %v1808 = vshrl.u32 %v1807, 7
  %v1809 = vsub.s32 0, %v1808
  %v1810 = vrot.slane %v43, %v1809
  %v1811 = vlaneseq
  %v1812 = vshrl.u32 %v1811, 7
  %v1813 = vsub.s32 1, %v1812
  %v1814 = vrot.slane %v43, %v1813
  %v1817 = vadd.f32 %v1802, %v1810
  %v1818 = vadd.f32 %v1803, %v1814
  %v1819 = vadd.f32 %v1804, %v1810
  %v1820 = vadd.f32 %v1805, %v1814
  %v1821 = vmax.f32 %v1817, 0.0
  %v1822 = vmax.f32 %v1818, 0.0
  %v1823 = vmax.f32 %v1819, 0.0
  %v1824 = vmax.f32 %v1820, 0.0
  %v1825 = vpack.c.bf16 %v1823, %v1821
  %v1826 = vpack.c.bf16 %v1824, %v1822
  %1827 = vmatprep.subr.bf16.mxu0 %v217
  %1828 = vmatpush1.bf16.msra.mxu0 %v216
  %1829 = vmatprep.subr.bf16.mxu0 %v214
  %1830 = vmatpush1.bf16.msra.mxu0 %v213
  %1831 = vmatprep.subr.bf16.mxu0 %v211
  %1832 = vmatpush1.bf16.msra.mxu0 %v210
  %1833 = vmatprep.subr.bf16.mxu0 %v208
  %1834 = vmatpush1.bf16.msra.mxu0 %v207
  %1835 = vmatprep.subr.bf16.mxu0 %v205
  %1836 = vmatpush1.bf16.msra.mxu0 %v204
  %1837 = vmatprep.subr.bf16.mxu0 %v202
  %1838 = vmatpush1.bf16.msra.mxu0 %v201
  %1839 = vmatprep.subr.bf16.mxu0 %v199
  %1840 = vmatpush1.bf16.msra.mxu0 %v198
  %1841 = vmatprep.subr.bf16.mxu0 %v196
  %1842 = vmatpush1.bf16.msra.mxu0 %v195
  %1843 = vmatprep.subr.bf16.mxu0 0
  %1844 = vmatpush2.bf16.msra.mxu0 0
  %1845 = vmatprep.subr.bf16.mxu0 0
  %1846 = vmatpush2.bf16.msra.mxu0 0
  %1847 = vmatprep.subr.bf16.mxu0 0
  %1848 = vmatpush2.bf16.msra.mxu0 0
  %1849 = vmatprep.subr.bf16.mxu0 0
  %1850 = vmatpush2.bf16.msra.mxu0 0
  %1851 = vmatprep.subr.bf16.mxu0 0
  %1852 = vmatpush2.bf16.msra.mxu0 0
  %1853 = vmatprep.subr.bf16.mxu0 0
  %1854 = vmatpush2.bf16.msra.mxu0 0
  %1855 = vmatprep.subr.bf16.mxu0 0
  %1856 = vmatpush2.bf16.msra.mxu0 0
  %1857 = vmatprep.subr.bf16.mxu0 0
  %1858 = vmatpush2.bf16.msra.mxu0 0
  %1859 = vmatprep.mubr.bf16.mxu0 0
  %1860 = vmatmul.mubr.bf16.gmra.mxu0 %v835
  %v1861 = vpop.f32.mrf.mxu0
  %v1862 = vadd.f32 0.0, %v1861
  %v1863 = vpop.f32.mrf.mxu0
  %v1864 = vadd.f32 0.0, %v1863
  %v1865 = vpop.f32.mrf.mxu0
  %v1866 = vadd.f32 0.0, %v1865
  %v1867 = vpop.f32.mrf.mxu0
  %v1868 = vadd.f32 0.0, %v1867
  %1869 = vdwg.mxu0
  %1870 = vmatprep.subr.bf16.mxu0 0
  %1871 = vmatpush1.bf16.msra.mxu0 %v218
  %1872 = vmatprep.subr.bf16.mxu0 0
  %1873 = vmatpush1.bf16.msra.mxu0 %v215
  %1874 = vmatprep.subr.bf16.mxu0 0
  %1875 = vmatpush1.bf16.msra.mxu0 %v212
  %1876 = vmatprep.subr.bf16.mxu0 0
  %1877 = vmatpush1.bf16.msra.mxu0 %v209
  %1878 = vmatprep.subr.bf16.mxu0 0
  %1879 = vmatpush1.bf16.msra.mxu0 %v206
  %1880 = vmatprep.subr.bf16.mxu0 0
  %1881 = vmatpush1.bf16.msra.mxu0 %v203
  %1882 = vmatprep.subr.bf16.mxu0 0
  %1883 = vmatpush1.bf16.msra.mxu0 %v200
  %1884 = vmatprep.subr.bf16.mxu0 0
  %1885 = vmatpush1.bf16.msra.mxu0 %v197
  %1886 = vmatprep.subr.bf16.mxu0 0
  %1887 = vmatpush2.bf16.msra.mxu0 0
  %1888 = vmatprep.subr.bf16.mxu0 0
  %1889 = vmatpush2.bf16.msra.mxu0 0
  %1890 = vmatprep.subr.bf16.mxu0 0
  %1891 = vmatpush2.bf16.msra.mxu0 0
  %1892 = vmatprep.subr.bf16.mxu0 0
  %1893 = vmatpush2.bf16.msra.mxu0 0
  %1894 = vmatprep.subr.bf16.mxu0 0
  %1895 = vmatpush2.bf16.msra.mxu0 0
  %1896 = vmatprep.subr.bf16.mxu0 0
  %1897 = vmatpush2.bf16.msra.mxu0 0
  %1898 = vmatprep.subr.bf16.mxu0 0
  %1899 = vmatpush2.bf16.msra.mxu0 0
  %1900 = vmatprep.subr.bf16.mxu0 0
  %1901 = vmatpush2.bf16.msra.mxu0 0
  %1902 = vmatprep.mubr.bf16.mxu0 0
  %1903 = vmatmul.mubr.bf16.gmra.mxu0 %v835
  %v1904 = vpop.f32.mrf.mxu0
  %v1905 = vadd.f32 0.0, %v1904
  %v1906 = vpop.f32.mrf.mxu0
  %v1907 = vpop.f32.mrf.mxu0
  %v1908 = vadd.f32 0.0, %v1907
  %v1909 = vpop.f32.mrf.mxu0
  %1910 = vdwg.mxu0
  %1911 = vmatprep.subr.bf16.mxu0 %v433
  %1912 = vmatpush1.bf16.msra.mxu0 %v432
  %1913 = vmatprep.subr.bf16.mxu0 %v430
  %1914 = vmatpush1.bf16.msra.mxu0 %v429
  %1915 = vmatprep.subr.bf16.mxu0 %v427
  %1916 = vmatpush1.bf16.msra.mxu0 %v426
  %1917 = vmatprep.subr.bf16.mxu0 %v424
  %1918 = vmatpush1.bf16.msra.mxu0 %v423
  %1919 = vmatprep.subr.bf16.mxu0 %v421
  %1920 = vmatpush1.bf16.msra.mxu0 %v420
  %1921 = vmatprep.subr.bf16.mxu0 %v418
  %1922 = vmatpush1.bf16.msra.mxu0 %v417
  %1923 = vmatprep.subr.bf16.mxu0 %v415
  %1924 = vmatpush1.bf16.msra.mxu0 %v414
  %1925 = vmatprep.subr.bf16.mxu0 %v412
  %1926 = vmatpush1.bf16.msra.mxu0 %v411
  %1927 = vmatprep.subr.bf16.mxu0 0
  %1928 = vmatpush2.bf16.msra.mxu0 0
  %1929 = vmatprep.subr.bf16.mxu0 0
  %1930 = vmatpush2.bf16.msra.mxu0 0
  %1931 = vmatprep.subr.bf16.mxu0 0
  %1932 = vmatpush2.bf16.msra.mxu0 0
  %1933 = vmatprep.subr.bf16.mxu0 0
  %1934 = vmatpush2.bf16.msra.mxu0 0
  %1935 = vmatprep.subr.bf16.mxu0 0
  %1936 = vmatpush2.bf16.msra.mxu0 0
  %1937 = vmatprep.subr.bf16.mxu0 0
  %1938 = vmatpush2.bf16.msra.mxu0 0
  %1939 = vmatprep.subr.bf16.mxu0 0
  %1940 = vmatpush2.bf16.msra.mxu0 0
  %1941 = vmatprep.subr.bf16.mxu0 0
  %1942 = vmatpush2.bf16.msra.mxu0 0
  %1943 = vmatprep.mubr.bf16.mxu0 0
  %1944 = vmatmul.mubr.bf16.gmra.mxu0 %v580
  %v1945 = vpop.f32.mrf.mxu0
  %v1946 = vadd.f32 %v1862, %v1945
  %v1947 = vpop.f32.mrf.mxu0
  %v1948 = vadd.f32 %v1864, %v1947
  %v1949 = vpop.f32.mrf.mxu0
  %v1950 = vadd.f32 %v1866, %v1949
  %v1951 = vpop.f32.mrf.mxu0
  %v1952 = vadd.f32 %v1868, %v1951
  %1953 = vdwg.mxu0
  %1954 = vmatprep.subr.bf16.mxu0 0
  %1955 = vmatpush1.bf16.msra.mxu0 %v434
  %1956 = vmatprep.subr.bf16.mxu0 0
  %1957 = vmatpush1.bf16.msra.mxu0 %v431
  %1958 = vmatprep.subr.bf16.mxu0 0
  %1959 = vmatpush1.bf16.msra.mxu0 %v428
  %1960 = vmatprep.subr.bf16.mxu0 0
  %1961 = vmatpush1.bf16.msra.mxu0 %v425
  %1962 = vmatprep.subr.bf16.mxu0 0
  %1963 = vmatpush1.bf16.msra.mxu0 %v422
  %1964 = vmatprep.subr.bf16.mxu0 0
  %1965 = vmatpush1.bf16.msra.mxu0 %v419
  %1966 = vmatprep.subr.bf16.mxu0 0
  %1967 = vmatpush1.bf16.msra.mxu0 %v416
  %1968 = vmatprep.subr.bf16.mxu0 0
  %1969 = vmatpush1.bf16.msra.mxu0 %v413
  %1970 = vmatprep.subr.bf16.mxu0 0
  %1971 = vmatpush2.bf16.msra.mxu0 0
  %1972 = vmatprep.subr.bf16.mxu0 0
  %1973 = vmatpush2.bf16.msra.mxu0 0
  %1974 = vmatprep.subr.bf16.mxu0 0
  %1975 = vmatpush2.bf16.msra.mxu0 0
  %1976 = vmatprep.subr.bf16.mxu0 0
  %1977 = vmatpush2.bf16.msra.mxu0 0
  %1978 = vmatprep.subr.bf16.mxu0 0
  %1979 = vmatpush2.bf16.msra.mxu0 0
  %1980 = vmatprep.subr.bf16.mxu0 0
  %1981 = vmatpush2.bf16.msra.mxu0 0
  %1982 = vmatprep.subr.bf16.mxu0 0
  %1983 = vmatpush2.bf16.msra.mxu0 0
  %1984 = vmatprep.subr.bf16.mxu0 0
  %1985 = vmatpush2.bf16.msra.mxu0 0
  %1986 = vmatprep.mubr.bf16.mxu0 0
  %1987 = vmatmul.mubr.bf16.gmra.mxu0 %v580
  %v1988 = vpop.f32.mrf.mxu0
  %v1989 = vadd.f32 %v1905, %v1988
  %v1990 = vpop.f32.mrf.mxu0
  %v1991 = vpop.f32.mrf.mxu0
  %v1992 = vadd.f32 %v1908, %v1991
  %v1993 = vpop.f32.mrf.mxu0
  %1994 = vdwg.mxu0
  %1995 = vmatprep.subr.bf16.mxu0 %v684
  %1996 = vmatpush1.bf16.msra.mxu0 %v683
  %1997 = vmatprep.subr.bf16.mxu0 %v681
  %1998 = vmatpush1.bf16.msra.mxu0 %v680
  %1999 = vmatprep.subr.bf16.mxu0 %v678
  %2000 = vmatpush1.bf16.msra.mxu0 %v677
  %2001 = vmatprep.subr.bf16.mxu0 %v675
  %2002 = vmatpush1.bf16.msra.mxu0 %v674
  %2003 = vmatprep.subr.bf16.mxu0 %v672
  %2004 = vmatpush1.bf16.msra.mxu0 %v671
  %2005 = vmatprep.subr.bf16.mxu0 %v669
  %2006 = vmatpush1.bf16.msra.mxu0 %v668
  %2007 = vmatprep.subr.bf16.mxu0 %v666
  %2008 = vmatpush1.bf16.msra.mxu0 %v665
  %2009 = vmatprep.subr.bf16.mxu0 %v663
  %2010 = vmatpush1.bf16.msra.mxu0 %v662
  %2011 = vmatprep.subr.bf16.mxu0 0
  %2012 = vmatpush2.bf16.msra.mxu0 0
  %2013 = vmatprep.subr.bf16.mxu0 0
  %2014 = vmatpush2.bf16.msra.mxu0 0
  %2015 = vmatprep.subr.bf16.mxu0 0
  %2016 = vmatpush2.bf16.msra.mxu0 0
  %2017 = vmatprep.subr.bf16.mxu0 0
  %2018 = vmatpush2.bf16.msra.mxu0 0
  %2019 = vmatprep.subr.bf16.mxu0 0
  %2020 = vmatpush2.bf16.msra.mxu0 0
  %2021 = vmatprep.subr.bf16.mxu0 0
  %2022 = vmatpush2.bf16.msra.mxu0 0
  %2023 = vmatprep.subr.bf16.mxu0 0
  %2024 = vmatpush2.bf16.msra.mxu0 0
  %2025 = vmatprep.subr.bf16.mxu0 0
  %2026 = vmatpush2.bf16.msra.mxu0 0
  %2027 = vmatprep.mubr.bf16.mxu0 0
  %2028 = vmatmul.mubr.bf16.gmra.mxu0 %v1072
  %v2029 = vpop.f32.mrf.mxu0
  %v2030 = vadd.f32 0.0, %v2029
  %v2031 = vpop.f32.mrf.mxu0
  %v2032 = vadd.f32 0.0, %v2031
  %v2033 = vpop.f32.mrf.mxu0
  %v2034 = vadd.f32 0.0, %v2033
  %v2035 = vpop.f32.mrf.mxu0
  %v2036 = vadd.f32 0.0, %v2035
  %2037 = vdwg.mxu0
  %2038 = vmatprep.subr.bf16.mxu0 0
  %2039 = vmatpush1.bf16.msra.mxu0 %v685
  %2040 = vmatprep.subr.bf16.mxu0 0
  %2041 = vmatpush1.bf16.msra.mxu0 %v682
  %2042 = vmatprep.subr.bf16.mxu0 0
  %2043 = vmatpush1.bf16.msra.mxu0 %v679
  %2044 = vmatprep.subr.bf16.mxu0 0
  %2045 = vmatpush1.bf16.msra.mxu0 %v676
  %2046 = vmatprep.subr.bf16.mxu0 0
  %2047 = vmatpush1.bf16.msra.mxu0 %v673
  %2048 = vmatprep.subr.bf16.mxu0 0
  %2049 = vmatpush1.bf16.msra.mxu0 %v670
  %2050 = vmatprep.subr.bf16.mxu0 0
  %2051 = vmatpush1.bf16.msra.mxu0 %v667
  %2052 = vmatprep.subr.bf16.mxu0 0
  %2053 = vmatpush1.bf16.msra.mxu0 %v664
  %2054 = vmatprep.subr.bf16.mxu0 0
  %2055 = vmatpush2.bf16.msra.mxu0 0
  %2056 = vmatprep.subr.bf16.mxu0 0
  %2057 = vmatpush2.bf16.msra.mxu0 0
  %2058 = vmatprep.subr.bf16.mxu0 0
  %2059 = vmatpush2.bf16.msra.mxu0 0
  %2060 = vmatprep.subr.bf16.mxu0 0
  %2061 = vmatpush2.bf16.msra.mxu0 0
  %2062 = vmatprep.subr.bf16.mxu0 0
  %2063 = vmatpush2.bf16.msra.mxu0 0
  %2064 = vmatprep.subr.bf16.mxu0 0
  %2065 = vmatpush2.bf16.msra.mxu0 0
  %2066 = vmatprep.subr.bf16.mxu0 0
  %2067 = vmatpush2.bf16.msra.mxu0 0
  %2068 = vmatprep.subr.bf16.mxu0 0
  %2069 = vmatpush2.bf16.msra.mxu0 0
  %2070 = vmatprep.mubr.bf16.mxu0 0
  %2071 = vmatmul.mubr.bf16.gmra.mxu0 %v1072
  %v2072 = vpop.f32.mrf.mxu0
  %v2073 = vadd.f32 0.0, %v2072
  %v2074 = vpop.f32.mrf.mxu0
  %v2075 = vpop.f32.mrf.mxu0
  %v2076 = vadd.f32 0.0, %v2075
  %v2077 = vpop.f32.mrf.mxu0
  %2078 = vdwg.mxu0
  %v2079 = vadd.f32 %v1946, %v2030
  %v2080 = vadd.f32 %v1948, %v2032
  %v2081 = vadd.f32 %v1989, %v2073
  %v2082 = vadd.f32 %v1950, %v2034
  %v2083 = vadd.f32 %v1952, %v2036
  %v2084 = vadd.f32 %v1992, %v2076
  %2085 = vmatprep.subr.bf16.mxu0 %v939
  %2086 = vmatpush1.bf16.msra.mxu0 %v938
  %2087 = vmatprep.subr.bf16.mxu0 %v936
  %2088 = vmatpush1.bf16.msra.mxu0 %v935
  %2089 = vmatprep.subr.bf16.mxu0 %v933
  %2090 = vmatpush1.bf16.msra.mxu0 %v932
  %2091 = vmatprep.subr.bf16.mxu0 %v930
  %2092 = vmatpush1.bf16.msra.mxu0 %v929
  %2093 = vmatprep.subr.bf16.mxu0 %v927
  %2094 = vmatpush1.bf16.msra.mxu0 %v926
  %2095 = vmatprep.subr.bf16.mxu0 %v924
  %2096 = vmatpush1.bf16.msra.mxu0 %v923
  %2097 = vmatprep.subr.bf16.mxu0 %v921
  %2098 = vmatpush1.bf16.msra.mxu0 %v920
  %2099 = vmatprep.subr.bf16.mxu0 %v918
  %2100 = vmatpush1.bf16.msra.mxu0 %v917
  %2101 = vmatprep.subr.bf16.mxu0 0
  %2102 = vmatpush2.bf16.msra.mxu0 0
  %2103 = vmatprep.subr.bf16.mxu0 0
  %2104 = vmatpush2.bf16.msra.mxu0 0
  %2105 = vmatprep.subr.bf16.mxu0 0
  %2106 = vmatpush2.bf16.msra.mxu0 0
  %2107 = vmatprep.subr.bf16.mxu0 0
  %2108 = vmatpush2.bf16.msra.mxu0 0
  %2109 = vmatprep.subr.bf16.mxu0 0
  %2110 = vmatpush2.bf16.msra.mxu0 0
  %2111 = vmatprep.subr.bf16.mxu0 0
  %2112 = vmatpush2.bf16.msra.mxu0 0
  %2113 = vmatprep.subr.bf16.mxu0 0
  %2114 = vmatpush2.bf16.msra.mxu0 0
  %2115 = vmatprep.subr.bf16.mxu0 0
  %2116 = vmatpush2.bf16.msra.mxu0 0
  %2117 = vmatprep.mubr.bf16.mxu0 0
  %2118 = vmatmul.mubr.bf16.gmra.mxu0 %v1686
  %v2119 = vpop.f32.mrf.mxu0
  %v2120 = vadd.f32 0.0, %v2119
  %v2121 = vpop.f32.mrf.mxu0
  %v2122 = vadd.f32 0.0, %v2121
  %v2123 = vpop.f32.mrf.mxu0
  %v2124 = vadd.f32 0.0, %v2123
  %v2125 = vpop.f32.mrf.mxu0
  %v2126 = vadd.f32 0.0, %v2125
  %2127 = vdwg.mxu0
  %2128 = vmatprep.subr.bf16.mxu0 0
  %2129 = vmatpush1.bf16.msra.mxu0 %v940
  %2130 = vmatprep.subr.bf16.mxu0 0
  %2131 = vmatpush1.bf16.msra.mxu0 %v937
  %2132 = vmatprep.subr.bf16.mxu0 0
  %2133 = vmatpush1.bf16.msra.mxu0 %v934
  %2134 = vmatprep.subr.bf16.mxu0 0
  %2135 = vmatpush1.bf16.msra.mxu0 %v931
  %2136 = vmatprep.subr.bf16.mxu0 0
  %2137 = vmatpush1.bf16.msra.mxu0 %v928
  %2138 = vmatprep.subr.bf16.mxu0 0
  %2139 = vmatpush1.bf16.msra.mxu0 %v925
  %2140 = vmatprep.subr.bf16.mxu0 0
  %2141 = vmatpush1.bf16.msra.mxu0 %v922
  %2142 = vmatprep.subr.bf16.mxu0 0
  %2143 = vmatpush1.bf16.msra.mxu0 %v919
  %2144 = vmatprep.subr.bf16.mxu0 0
  %2145 = vmatpush2.bf16.msra.mxu0 0
  %2146 = vmatprep.subr.bf16.mxu0 0
  %2147 = vmatpush2.bf16.msra.mxu0 0
  %2148 = vmatprep.subr.bf16.mxu0 0
  %2149 = vmatpush2.bf16.msra.mxu0 0
  %2150 = vmatprep.subr.bf16.mxu0 0
  %2151 = vmatpush2.bf16.msra.mxu0 0
  %2152 = vmatprep.subr.bf16.mxu0 0
  %2153 = vmatpush2.bf16.msra.mxu0 0
  %2154 = vmatprep.subr.bf16.mxu0 0
  %2155 = vmatpush2.bf16.msra.mxu0 0
  %2156 = vmatprep.subr.bf16.mxu0 0
  %2157 = vmatpush2.bf16.msra.mxu0 0
  %2158 = vmatprep.subr.bf16.mxu0 0
  %2159 = vmatpush2.bf16.msra.mxu0 0
  %2160 = vmatprep.mubr.bf16.mxu0 0
  %2161 = vmatmul.mubr.bf16.gmra.mxu0 %v1686
  %v2162 = vpop.f32.mrf.mxu0
  %v2163 = vadd.f32 0.0, %v2162
  %v2164 = vpop.f32.mrf.mxu0
  %v2165 = vpop.f32.mrf.mxu0
  %v2166 = vadd.f32 0.0, %v2165
  %v2167 = vpop.f32.mrf.mxu0
  %2168 = vdwg.mxu0
  %v2169 = vadd.f32 %v2079, %v2120
  %v2170 = vadd.f32 %v2080, %v2122
  %v2171 = vadd.f32 %v2081, %v2163
  %v2172 = vadd.f32 %v2082, %v2124
  %v2173 = vadd.f32 %v2083, %v2126
  %v2174 = vadd.f32 %v2084, %v2166
  %v2176 = vshrl.u32 %v580, 16
  %v2178 = vshll.u32 %v580, 16
  %v2180 = vrot.slane %v2178, 1
  %v2181 = vor.u32 %v2176, %v2180
  %v2183 = vpack.c.b16 %v578, %v578
  %v2185 = vshll.u32 %v2183, 16
  %v2187 = vrot.slane %v2185, 1
  %v2189 = vsel %vm1071, %v2181, %v2187
  %2190 = vmatprep.subr.bf16.mxu0 %v1208
  %2191 = vmatpush1.bf16.msra.mxu0 %v1207
  %2192 = vmatprep.subr.bf16.mxu0 %v1205
  %2193 = vmatpush1.bf16.msra.mxu0 %v1204
  %2194 = vmatprep.subr.bf16.mxu0 %v1202
  %2195 = vmatpush1.bf16.msra.mxu0 %v1201
  %2196 = vmatprep.subr.bf16.mxu0 %v1199
  %2197 = vmatpush1.bf16.msra.mxu0 %v1198
  %2198 = vmatprep.subr.bf16.mxu0 %v1196
  %2199 = vmatpush1.bf16.msra.mxu0 %v1195
  %2200 = vmatprep.subr.bf16.mxu0 %v1193
  %2201 = vmatpush1.bf16.msra.mxu0 %v1192
  %2202 = vmatprep.subr.bf16.mxu0 %v1190
  %2203 = vmatpush1.bf16.msra.mxu0 %v1189
  %2204 = vmatprep.subr.bf16.mxu0 %v1187
  %2205 = vmatpush1.bf16.msra.mxu0 %v1186
  %2206 = vmatprep.subr.bf16.mxu0 0
  %2207 = vmatpush2.bf16.msra.mxu0 0
  %2208 = vmatprep.subr.bf16.mxu0 0
  %2209 = vmatpush2.bf16.msra.mxu0 0
  %2210 = vmatprep.subr.bf16.mxu0 0
  %2211 = vmatpush2.bf16.msra.mxu0 0
  %2212 = vmatprep.subr.bf16.mxu0 0
  %2213 = vmatpush2.bf16.msra.mxu0 0
  %2214 = vmatprep.subr.bf16.mxu0 0
  %2215 = vmatpush2.bf16.msra.mxu0 0
  %2216 = vmatprep.subr.bf16.mxu0 0
  %2217 = vmatpush2.bf16.msra.mxu0 0
  %2218 = vmatprep.subr.bf16.mxu0 0
  %2219 = vmatpush2.bf16.msra.mxu0 0
  %2220 = vmatprep.subr.bf16.mxu0 0
  %2221 = vmatpush2.bf16.msra.mxu0 0
  %2222 = vmatprep.mubr.bf16.mxu0 0
  %2223 = vmatmul.mubr.bf16.gmra.mxu0 %v2189
  %v2224 = vpop.f32.mrf.mxu0
  %v2225 = vadd.f32 0.0, %v2224
  %v2226 = vpop.f32.mrf.mxu0
  %v2227 = vadd.f32 0.0, %v2226
  %v2228 = vpop.f32.mrf.mxu0
  %v2229 = vadd.f32 0.0, %v2228
  %v2230 = vpop.f32.mrf.mxu0
  %v2231 = vadd.f32 0.0, %v2230
  %2232 = vdwg.mxu0
  %2233 = vmatprep.subr.bf16.mxu0 0
  %2234 = vmatpush1.bf16.msra.mxu0 %v1209
  %2235 = vmatprep.subr.bf16.mxu0 0
  %2236 = vmatpush1.bf16.msra.mxu0 %v1206
  %2237 = vmatprep.subr.bf16.mxu0 0
  %2238 = vmatpush1.bf16.msra.mxu0 %v1203
  %2239 = vmatprep.subr.bf16.mxu0 0
  %2240 = vmatpush1.bf16.msra.mxu0 %v1200
  %2241 = vmatprep.subr.bf16.mxu0 0
  %2242 = vmatpush1.bf16.msra.mxu0 %v1197
  %2243 = vmatprep.subr.bf16.mxu0 0
  %2244 = vmatpush1.bf16.msra.mxu0 %v1194
  %2245 = vmatprep.subr.bf16.mxu0 0
  %2246 = vmatpush1.bf16.msra.mxu0 %v1191
  %2247 = vmatprep.subr.bf16.mxu0 0
  %2248 = vmatpush1.bf16.msra.mxu0 %v1188
  %2249 = vmatprep.subr.bf16.mxu0 0
  %2250 = vmatpush2.bf16.msra.mxu0 0
  %2251 = vmatprep.subr.bf16.mxu0 0
  %2252 = vmatpush2.bf16.msra.mxu0 0
  %2253 = vmatprep.subr.bf16.mxu0 0
  %2254 = vmatpush2.bf16.msra.mxu0 0
  %2255 = vmatprep.subr.bf16.mxu0 0
  %2256 = vmatpush2.bf16.msra.mxu0 0
  %2257 = vmatprep.subr.bf16.mxu0 0
  %2258 = vmatpush2.bf16.msra.mxu0 0
  %2259 = vmatprep.subr.bf16.mxu0 0
  %2260 = vmatpush2.bf16.msra.mxu0 0
  %2261 = vmatprep.subr.bf16.mxu0 0
  %2262 = vmatpush2.bf16.msra.mxu0 0
  %2263 = vmatprep.subr.bf16.mxu0 0
  %2264 = vmatpush2.bf16.msra.mxu0 0
  %2265 = vmatprep.mubr.bf16.mxu0 0
  %2266 = vmatmul.mubr.bf16.gmra.mxu0 %v2189
  %v2267 = vpop.f32.mrf.mxu0
  %v2268 = vadd.f32 0.0, %v2267
  %v2269 = vpop.f32.mrf.mxu0
  %v2270 = vpop.f32.mrf.mxu0
  %v2271 = vadd.f32 0.0, %v2270
  %v2272 = vpop.f32.mrf.mxu0
  %2273 = vdwg.mxu0
  %v2274 = vadd.f32 %v2169, %v2225
  %v2275 = vadd.f32 %v2170, %v2227
  %v2276 = vadd.f32 %v2171, %v2268
  %v2277 = vadd.f32 %v2172, %v2229
  %v2278 = vadd.f32 %v2173, %v2231
  %v2279 = vadd.f32 %v2174, %v2271
  %2280 = vmatprep.subr.bf16.mxu0 %v217
  %2281 = vmatpush1.bf16.msra.mxu0 %v216
  %2282 = vmatprep.subr.bf16.mxu0 %v214
  %2283 = vmatpush1.bf16.msra.mxu0 %v213
  %2284 = vmatprep.subr.bf16.mxu0 %v211
  %2285 = vmatpush1.bf16.msra.mxu0 %v210
  %2286 = vmatprep.subr.bf16.mxu0 %v208
  %2287 = vmatpush1.bf16.msra.mxu0 %v207
  %2288 = vmatprep.subr.bf16.mxu0 %v205
  %2289 = vmatpush1.bf16.msra.mxu0 %v204
  %2290 = vmatprep.subr.bf16.mxu0 %v202
  %2291 = vmatpush1.bf16.msra.mxu0 %v201
  %2292 = vmatprep.subr.bf16.mxu0 %v199
  %2293 = vmatpush1.bf16.msra.mxu0 %v198
  %2294 = vmatprep.subr.bf16.mxu0 %v196
  %2295 = vmatpush1.bf16.msra.mxu0 %v195
  %2296 = vmatprep.subr.bf16.mxu0 0
  %2297 = vmatpush2.bf16.msra.mxu0 0
  %2298 = vmatprep.subr.bf16.mxu0 0
  %2299 = vmatpush2.bf16.msra.mxu0 0
  %2300 = vmatprep.subr.bf16.mxu0 0
  %2301 = vmatpush2.bf16.msra.mxu0 0
  %2302 = vmatprep.subr.bf16.mxu0 0
  %2303 = vmatpush2.bf16.msra.mxu0 0
  %2304 = vmatprep.subr.bf16.mxu0 0
  %2305 = vmatpush2.bf16.msra.mxu0 0
  %2306 = vmatprep.subr.bf16.mxu0 0
  %2307 = vmatpush2.bf16.msra.mxu0 0
  %2308 = vmatprep.subr.bf16.mxu0 0
  %2309 = vmatpush2.bf16.msra.mxu0 0
  %2310 = vmatprep.subr.bf16.mxu0 0
  %2311 = vmatpush2.bf16.msra.mxu0 0
  %2312 = vmatprep.mubr.bf16.mxu0 0
  %2313 = vmatmul.mubr.bf16.gmra.mxu0 %v1072
  %v2314 = vpop.f32.mrf.mxu0
  %v2315 = vadd.f32 0.0, %v2314
  %v2316 = vpop.f32.mrf.mxu0
  %v2317 = vadd.f32 0.0, %v2316
  %v2318 = vpop.f32.mrf.mxu0
  %v2319 = vadd.f32 0.0, %v2318
  %v2320 = vpop.f32.mrf.mxu0
  %v2321 = vadd.f32 0.0, %v2320
  %2322 = vdwg.mxu0
  %2323 = vmatprep.subr.bf16.mxu0 0
  %2324 = vmatpush1.bf16.msra.mxu0 %v218
  %2325 = vmatprep.subr.bf16.mxu0 0
  %2326 = vmatpush1.bf16.msra.mxu0 %v215
  %2327 = vmatprep.subr.bf16.mxu0 0
  %2328 = vmatpush1.bf16.msra.mxu0 %v212
  %2329 = vmatprep.subr.bf16.mxu0 0
  %2330 = vmatpush1.bf16.msra.mxu0 %v209
  %2331 = vmatprep.subr.bf16.mxu0 0
  %2332 = vmatpush1.bf16.msra.mxu0 %v206
  %2333 = vmatprep.subr.bf16.mxu0 0
  %2334 = vmatpush1.bf16.msra.mxu0 %v203
  %2335 = vmatprep.subr.bf16.mxu0 0
  %2336 = vmatpush1.bf16.msra.mxu0 %v200
  %2337 = vmatprep.subr.bf16.mxu0 0
  %2338 = vmatpush1.bf16.msra.mxu0 %v197
  %2339 = vmatprep.subr.bf16.mxu0 0
  %2340 = vmatpush2.bf16.msra.mxu0 0
  %2341 = vmatprep.subr.bf16.mxu0 0
  %2342 = vmatpush2.bf16.msra.mxu0 0
  %2343 = vmatprep.subr.bf16.mxu0 0
  %2344 = vmatpush2.bf16.msra.mxu0 0
  %2345 = vmatprep.subr.bf16.mxu0 0
  %2346 = vmatpush2.bf16.msra.mxu0 0
  %2347 = vmatprep.subr.bf16.mxu0 0
  %2348 = vmatpush2.bf16.msra.mxu0 0
  %2349 = vmatprep.subr.bf16.mxu0 0
  %2350 = vmatpush2.bf16.msra.mxu0 0
  %2351 = vmatprep.subr.bf16.mxu0 0
  %2352 = vmatpush2.bf16.msra.mxu0 0
  %2353 = vmatprep.subr.bf16.mxu0 0
  %2354 = vmatpush2.bf16.msra.mxu0 0
  %2355 = vmatprep.mubr.bf16.mxu0 0
  %2356 = vmatmul.mubr.bf16.gmra.mxu0 %v1072
  %v2357 = vpop.f32.mrf.mxu0
  %v2358 = vadd.f32 0.0, %v2357
  %v2359 = vpop.f32.mrf.mxu0
  %v2360 = vpop.f32.mrf.mxu0
  %v2361 = vadd.f32 0.0, %v2360
  %v2362 = vpop.f32.mrf.mxu0
  %2363 = vdwg.mxu0
  %2364 = vmatprep.subr.bf16.mxu0 %v433
  %2365 = vmatpush1.bf16.msra.mxu0 %v432
  %2366 = vmatprep.subr.bf16.mxu0 %v430
  %2367 = vmatpush1.bf16.msra.mxu0 %v429
  %2368 = vmatprep.subr.bf16.mxu0 %v427
  %2369 = vmatpush1.bf16.msra.mxu0 %v426
  %2370 = vmatprep.subr.bf16.mxu0 %v424
  %2371 = vmatpush1.bf16.msra.mxu0 %v423
  %2372 = vmatprep.subr.bf16.mxu0 %v421
  %2373 = vmatpush1.bf16.msra.mxu0 %v420
  %2374 = vmatprep.subr.bf16.mxu0 %v418
  %2375 = vmatpush1.bf16.msra.mxu0 %v417
  %2376 = vmatprep.subr.bf16.mxu0 %v415
  %2377 = vmatpush1.bf16.msra.mxu0 %v414
  %2378 = vmatprep.subr.bf16.mxu0 %v412
  %2379 = vmatpush1.bf16.msra.mxu0 %v411
  %2380 = vmatprep.subr.bf16.mxu0 0
  %2381 = vmatpush2.bf16.msra.mxu0 0
  %2382 = vmatprep.subr.bf16.mxu0 0
  %2383 = vmatpush2.bf16.msra.mxu0 0
  %2384 = vmatprep.subr.bf16.mxu0 0
  %2385 = vmatpush2.bf16.msra.mxu0 0
  %2386 = vmatprep.subr.bf16.mxu0 0
  %2387 = vmatpush2.bf16.msra.mxu0 0
  %2388 = vmatprep.subr.bf16.mxu0 0
  %2389 = vmatpush2.bf16.msra.mxu0 0
  %2390 = vmatprep.subr.bf16.mxu0 0
  %2391 = vmatpush2.bf16.msra.mxu0 0
  %2392 = vmatprep.subr.bf16.mxu0 0
  %2393 = vmatpush2.bf16.msra.mxu0 0
  %2394 = vmatprep.subr.bf16.mxu0 0
  %2395 = vmatpush2.bf16.msra.mxu0 0
  %2396 = vmatprep.mubr.bf16.mxu0 0
  %2397 = vmatmul.mubr.bf16.gmra.mxu0 %v835
  %v2398 = vpop.f32.mrf.mxu0
  %v2399 = vadd.f32 %v2315, %v2398
  %v2400 = vpop.f32.mrf.mxu0
  %v2401 = vadd.f32 %v2317, %v2400
  %v2402 = vpop.f32.mrf.mxu0
  %v2403 = vadd.f32 %v2319, %v2402
  %v2404 = vpop.f32.mrf.mxu0
  %v2405 = vadd.f32 %v2321, %v2404
  %2406 = vdwg.mxu0
  %2407 = vmatprep.subr.bf16.mxu0 0
  %2408 = vmatpush1.bf16.msra.mxu0 %v434
  %2409 = vmatprep.subr.bf16.mxu0 0
  %2410 = vmatpush1.bf16.msra.mxu0 %v431
  %2411 = vmatprep.subr.bf16.mxu0 0
  %2412 = vmatpush1.bf16.msra.mxu0 %v428
  %2413 = vmatprep.subr.bf16.mxu0 0
  %2414 = vmatpush1.bf16.msra.mxu0 %v425
  %2415 = vmatprep.subr.bf16.mxu0 0
  %2416 = vmatpush1.bf16.msra.mxu0 %v422
  %2417 = vmatprep.subr.bf16.mxu0 0
  %2418 = vmatpush1.bf16.msra.mxu0 %v419
  %2419 = vmatprep.subr.bf16.mxu0 0
  %2420 = vmatpush1.bf16.msra.mxu0 %v416
  %2421 = vmatprep.subr.bf16.mxu0 0
  %2422 = vmatpush1.bf16.msra.mxu0 %v413
  %2423 = vmatprep.subr.bf16.mxu0 0
  %2424 = vmatpush2.bf16.msra.mxu0 0
  %2425 = vmatprep.subr.bf16.mxu0 0
  %2426 = vmatpush2.bf16.msra.mxu0 0
  %2427 = vmatprep.subr.bf16.mxu0 0
  %2428 = vmatpush2.bf16.msra.mxu0 0
  %2429 = vmatprep.subr.bf16.mxu0 0
  %2430 = vmatpush2.bf16.msra.mxu0 0
  %2431 = vmatprep.subr.bf16.mxu0 0
  %2432 = vmatpush2.bf16.msra.mxu0 0
  %2433 = vmatprep.subr.bf16.mxu0 0
  %2434 = vmatpush2.bf16.msra.mxu0 0
  %2435 = vmatprep.subr.bf16.mxu0 0
  %2436 = vmatpush2.bf16.msra.mxu0 0
  %2437 = vmatprep.subr.bf16.mxu0 0
  %2438 = vmatpush2.bf16.msra.mxu0 0
  %2439 = vmatprep.mubr.bf16.mxu0 0
  %2440 = vmatmul.mubr.bf16.gmra.mxu0 %v835
  %v2441 = vpop.f32.mrf.mxu0
  %v2442 = vadd.f32 %v2358, %v2441
  %v2443 = vpop.f32.mrf.mxu0
  %v2444 = vpop.f32.mrf.mxu0
  %v2445 = vadd.f32 %v2361, %v2444
  %v2446 = vpop.f32.mrf.mxu0
  %2447 = vdwg.mxu0
  %2448 = vmatprep.subr.bf16.mxu0 %v684
  %2449 = vmatpush1.bf16.msra.mxu0 %v683
  %2450 = vmatprep.subr.bf16.mxu0 %v681
  %2451 = vmatpush1.bf16.msra.mxu0 %v680
  %2452 = vmatprep.subr.bf16.mxu0 %v678
  %2453 = vmatpush1.bf16.msra.mxu0 %v677
  %2454 = vmatprep.subr.bf16.mxu0 %v675
  %2455 = vmatpush1.bf16.msra.mxu0 %v674
  %2456 = vmatprep.subr.bf16.mxu0 %v672
  %2457 = vmatpush1.bf16.msra.mxu0 %v671
  %2458 = vmatprep.subr.bf16.mxu0 %v669
  %2459 = vmatpush1.bf16.msra.mxu0 %v668
  %2460 = vmatprep.subr.bf16.mxu0 %v666
  %2461 = vmatpush1.bf16.msra.mxu0 %v665
  %2462 = vmatprep.subr.bf16.mxu0 %v663
  %2463 = vmatpush1.bf16.msra.mxu0 %v662
  %2464 = vmatprep.subr.bf16.mxu0 0
  %2465 = vmatpush2.bf16.msra.mxu0 0
  %2466 = vmatprep.subr.bf16.mxu0 0
  %2467 = vmatpush2.bf16.msra.mxu0 0
  %2468 = vmatprep.subr.bf16.mxu0 0
  %2469 = vmatpush2.bf16.msra.mxu0 0
  %2470 = vmatprep.subr.bf16.mxu0 0
  %2471 = vmatpush2.bf16.msra.mxu0 0
  %2472 = vmatprep.subr.bf16.mxu0 0
  %2473 = vmatpush2.bf16.msra.mxu0 0
  %2474 = vmatprep.subr.bf16.mxu0 0
  %2475 = vmatpush2.bf16.msra.mxu0 0
  %2476 = vmatprep.subr.bf16.mxu0 0
  %2477 = vmatpush2.bf16.msra.mxu0 0
  %2478 = vmatprep.subr.bf16.mxu0 0
  %2479 = vmatpush2.bf16.msra.mxu0 0
  %2480 = vmatprep.mubr.bf16.mxu0 0
  %2481 = vmatmul.mubr.bf16.gmra.mxu0 %v1686
  %v2482 = vpop.f32.mrf.mxu0
  %v2483 = vadd.f32 0.0, %v2482
  %v2484 = vpop.f32.mrf.mxu0
  %v2485 = vadd.f32 0.0, %v2484
  %v2486 = vpop.f32.mrf.mxu0
  %v2487 = vadd.f32 0.0, %v2486
  %v2488 = vpop.f32.mrf.mxu0
  %v2489 = vadd.f32 0.0, %v2488
  %2490 = vdwg.mxu0
  %2491 = vmatprep.subr.bf16.mxu0 0
  %2492 = vmatpush1.bf16.msra.mxu0 %v685
  %2493 = vmatprep.subr.bf16.mxu0 0
  %2494 = vmatpush1.bf16.msra.mxu0 %v682
  %2495 = vmatprep.subr.bf16.mxu0 0
  %2496 = vmatpush1.bf16.msra.mxu0 %v679
  %2497 = vmatprep.subr.bf16.mxu0 0
  %2498 = vmatpush1.bf16.msra.mxu0 %v676
  %2499 = vmatprep.subr.bf16.mxu0 0
  %2500 = vmatpush1.bf16.msra.mxu0 %v673
  %2501 = vmatprep.subr.bf16.mxu0 0
  %2502 = vmatpush1.bf16.msra.mxu0 %v670
  %2503 = vmatprep.subr.bf16.mxu0 0
  %2504 = vmatpush1.bf16.msra.mxu0 %v667
  %2505 = vmatprep.subr.bf16.mxu0 0
  %2506 = vmatpush1.bf16.msra.mxu0 %v664
  %2507 = vmatprep.subr.bf16.mxu0 0
  %2508 = vmatpush2.bf16.msra.mxu0 0
  %2509 = vmatprep.subr.bf16.mxu0 0
  %2510 = vmatpush2.bf16.msra.mxu0 0
  %2511 = vmatprep.subr.bf16.mxu0 0
  %2512 = vmatpush2.bf16.msra.mxu0 0
  %2513 = vmatprep.subr.bf16.mxu0 0
  %2514 = vmatpush2.bf16.msra.mxu0 0
  %2515 = vmatprep.subr.bf16.mxu0 0
  %2516 = vmatpush2.bf16.msra.mxu0 0
  %2517 = vmatprep.subr.bf16.mxu0 0
  %2518 = vmatpush2.bf16.msra.mxu0 0
  %2519 = vmatprep.subr.bf16.mxu0 0
  %2520 = vmatpush2.bf16.msra.mxu0 0
  %2521 = vmatprep.subr.bf16.mxu0 0
  %2522 = vmatpush2.bf16.msra.mxu0 0
  %2523 = vmatprep.mubr.bf16.mxu0 0
  %2524 = vmatmul.mubr.bf16.gmra.mxu0 %v1686
  %v2525 = vpop.f32.mrf.mxu0
  %v2526 = vadd.f32 0.0, %v2525
  %v2527 = vpop.f32.mrf.mxu0
  %v2528 = vpop.f32.mrf.mxu0
  %v2529 = vadd.f32 0.0, %v2528
  %v2530 = vpop.f32.mrf.mxu0
  %2531 = vdwg.mxu0
  %v2532 = vadd.f32 %v2399, %v2483
  %v2533 = vadd.f32 %v2401, %v2485
  %v2534 = vadd.f32 %v2442, %v2526
  %v2535 = vadd.f32 %v2403, %v2487
  %v2536 = vadd.f32 %v2405, %v2489
  %v2537 = vadd.f32 %v2445, %v2529
  %2538 = vmatprep.subr.bf16.mxu0 %v939
  %2539 = vmatpush1.bf16.msra.mxu0 %v938
  %2540 = vmatprep.subr.bf16.mxu0 %v936
  %2541 = vmatpush1.bf16.msra.mxu0 %v935
  %2542 = vmatprep.subr.bf16.mxu0 %v933
  %2543 = vmatpush1.bf16.msra.mxu0 %v932
  %2544 = vmatprep.subr.bf16.mxu0 %v930
  %2545 = vmatpush1.bf16.msra.mxu0 %v929
  %2546 = vmatprep.subr.bf16.mxu0 %v927
  %2547 = vmatpush1.bf16.msra.mxu0 %v926
  %2548 = vmatprep.subr.bf16.mxu0 %v924
  %2549 = vmatpush1.bf16.msra.mxu0 %v923
  %2550 = vmatprep.subr.bf16.mxu0 %v921
  %2551 = vmatpush1.bf16.msra.mxu0 %v920
  %2552 = vmatprep.subr.bf16.mxu0 %v918
  %2553 = vmatpush1.bf16.msra.mxu0 %v917
  %2554 = vmatprep.subr.bf16.mxu0 0
  %2555 = vmatpush2.bf16.msra.mxu0 0
  %2556 = vmatprep.subr.bf16.mxu0 0
  %2557 = vmatpush2.bf16.msra.mxu0 0
  %2558 = vmatprep.subr.bf16.mxu0 0
  %2559 = vmatpush2.bf16.msra.mxu0 0
  %2560 = vmatprep.subr.bf16.mxu0 0
  %2561 = vmatpush2.bf16.msra.mxu0 0
  %2562 = vmatprep.subr.bf16.mxu0 0
  %2563 = vmatpush2.bf16.msra.mxu0 0
  %2564 = vmatprep.subr.bf16.mxu0 0
  %2565 = vmatpush2.bf16.msra.mxu0 0
  %2566 = vmatprep.subr.bf16.mxu0 0
  %2567 = vmatpush2.bf16.msra.mxu0 0
  %2568 = vmatprep.subr.bf16.mxu0 0
  %2569 = vmatpush2.bf16.msra.mxu0 0
  %2570 = vmatprep.mubr.bf16.mxu0 0
  %2571 = vmatmul.mubr.bf16.gmra.mxu0 %v2189
  %v2572 = vpop.f32.mrf.mxu0
  %v2573 = vadd.f32 0.0, %v2572
  %v2574 = vpop.f32.mrf.mxu0
  %v2575 = vadd.f32 0.0, %v2574
  %v2576 = vpop.f32.mrf.mxu0
  %v2577 = vadd.f32 0.0, %v2576
  %v2578 = vpop.f32.mrf.mxu0
  %v2579 = vadd.f32 0.0, %v2578
  %2580 = vdwg.mxu0
  %2581 = vmatprep.subr.bf16.mxu0 0
  %2582 = vmatpush1.bf16.msra.mxu0 %v940
  %2583 = vmatprep.subr.bf16.mxu0 0
  %2584 = vmatpush1.bf16.msra.mxu0 %v937
  %2585 = vmatprep.subr.bf16.mxu0 0
  %2586 = vmatpush1.bf16.msra.mxu0 %v934
  %2587 = vmatprep.subr.bf16.mxu0 0
  %2588 = vmatpush1.bf16.msra.mxu0 %v931
  %2589 = vmatprep.subr.bf16.mxu0 0
  %2590 = vmatpush1.bf16.msra.mxu0 %v928
  %2591 = vmatprep.subr.bf16.mxu0 0
  %2592 = vmatpush1.bf16.msra.mxu0 %v925
  %2593 = vmatprep.subr.bf16.mxu0 0
  %2594 = vmatpush1.bf16.msra.mxu0 %v922
  %2595 = vmatprep.subr.bf16.mxu0 0
  %2596 = vmatpush1.bf16.msra.mxu0 %v919
  %2597 = vmatprep.subr.bf16.mxu0 0
  %2598 = vmatpush2.bf16.msra.mxu0 0
  %2599 = vmatprep.subr.bf16.mxu0 0
  %2600 = vmatpush2.bf16.msra.mxu0 0
  %2601 = vmatprep.subr.bf16.mxu0 0
  %2602 = vmatpush2.bf16.msra.mxu0 0
  %2603 = vmatprep.subr.bf16.mxu0 0
  %2604 = vmatpush2.bf16.msra.mxu0 0
  %2605 = vmatprep.subr.bf16.mxu0 0
  %2606 = vmatpush2.bf16.msra.mxu0 0
  %2607 = vmatprep.subr.bf16.mxu0 0
  %2608 = vmatpush2.bf16.msra.mxu0 0
  %2609 = vmatprep.subr.bf16.mxu0 0
  %2610 = vmatpush2.bf16.msra.mxu0 0
  %2611 = vmatprep.subr.bf16.mxu0 0
  %2612 = vmatpush2.bf16.msra.mxu0 0
  %2613 = vmatprep.mubr.bf16.mxu0 0
  %2614 = vmatmul.mubr.bf16.gmra.mxu0 %v2189
  %v2615 = vpop.f32.mrf.mxu0
  %v2616 = vadd.f32 0.0, %v2615
  %v2617 = vpop.f32.mrf.mxu0
  %v2618 = vpop.f32.mrf.mxu0
  %v2619 = vadd.f32 0.0, %v2618
  %v2620 = vpop.f32.mrf.mxu0
  %2621 = vdwg.mxu0
  %v2622 = vadd.f32 %v2532, %v2573
  %v2623 = vadd.f32 %v2533, %v2575
  %v2624 = vadd.f32 %v2534, %v2616
  %v2625 = vadd.f32 %v2535, %v2577
  %v2626 = vadd.f32 %v2536, %v2579
  %v2627 = vadd.f32 %v2537, %v2619
  %v2629 = vshrl.u32 %v835, 16
  %v2631 = vshll.u32 %v835, 16
  %v2633 = vrot.slane %v2631, 1
  %v2634 = vor.u32 %v2629, %v2633
  %v2636 = vpack.c.b16 %v833, %v833
  %v2638 = vshll.u32 %v2636, 16
  %v2640 = vrot.slane %v2638, 1
  %v2642 = vsel %vm1071, %v2634, %v2640
  %2643 = vmatprep.subr.bf16.mxu0 %v1208
  %2644 = vmatpush1.bf16.msra.mxu0 %v1207
  %2645 = vmatprep.subr.bf16.mxu0 %v1205
  %2646 = vmatpush1.bf16.msra.mxu0 %v1204
  %2647 = vmatprep.subr.bf16.mxu0 %v1202
  %2648 = vmatpush1.bf16.msra.mxu0 %v1201
  %2649 = vmatprep.subr.bf16.mxu0 %v1199
  %2650 = vmatpush1.bf16.msra.mxu0 %v1198
  %2651 = vmatprep.subr.bf16.mxu0 %v1196
  %2652 = vmatpush1.bf16.msra.mxu0 %v1195
  %2653 = vmatprep.subr.bf16.mxu0 %v1193
  %2654 = vmatpush1.bf16.msra.mxu0 %v1192
  %2655 = vmatprep.subr.bf16.mxu0 %v1190
  %2656 = vmatpush1.bf16.msra.mxu0 %v1189
  %2657 = vmatprep.subr.bf16.mxu0 %v1187
  %2658 = vmatpush1.bf16.msra.mxu0 %v1186
  %2659 = vmatprep.subr.bf16.mxu0 0
  %2660 = vmatpush2.bf16.msra.mxu0 0
  %2661 = vmatprep.subr.bf16.mxu0 0
  %2662 = vmatpush2.bf16.msra.mxu0 0
  %2663 = vmatprep.subr.bf16.mxu0 0
  %2664 = vmatpush2.bf16.msra.mxu0 0
  %2665 = vmatprep.subr.bf16.mxu0 0
  %2666 = vmatpush2.bf16.msra.mxu0 0
  %2667 = vmatprep.subr.bf16.mxu0 0
  %2668 = vmatpush2.bf16.msra.mxu0 0
  %2669 = vmatprep.subr.bf16.mxu0 0
  %2670 = vmatpush2.bf16.msra.mxu0 0
  %2671 = vmatprep.subr.bf16.mxu0 0
  %2672 = vmatpush2.bf16.msra.mxu0 0
  %2673 = vmatprep.subr.bf16.mxu0 0
  %2674 = vmatpush2.bf16.msra.mxu0 0
  %2675 = vmatprep.mubr.bf16.mxu0 0
  %2676 = vmatmul.mubr.bf16.gmra.mxu0 %v2642
  %v2677 = vpop.f32.mrf.mxu0
  %v2678 = vadd.f32 0.0, %v2677
  %v2679 = vpop.f32.mrf.mxu0
  %v2680 = vadd.f32 0.0, %v2679
  %v2681 = vpop.f32.mrf.mxu0
  %v2682 = vadd.f32 0.0, %v2681
  %v2683 = vpop.f32.mrf.mxu0
  %v2684 = vadd.f32 0.0, %v2683
  %2685 = vdwg.mxu0
  %2686 = vmatprep.subr.bf16.mxu0 0
  %2687 = vmatpush1.bf16.msra.mxu0 %v1209
  %2688 = vmatprep.subr.bf16.mxu0 0
  %2689 = vmatpush1.bf16.msra.mxu0 %v1206
  %2690 = vmatprep.subr.bf16.mxu0 0
  %2691 = vmatpush1.bf16.msra.mxu0 %v1203
  %2692 = vmatprep.subr.bf16.mxu0 0
  %2693 = vmatpush1.bf16.msra.mxu0 %v1200
  %2694 = vmatprep.subr.bf16.mxu0 0
  %2695 = vmatpush1.bf16.msra.mxu0 %v1197
  %2696 = vmatprep.subr.bf16.mxu0 0
  %2697 = vmatpush1.bf16.msra.mxu0 %v1194
  %2698 = vmatprep.subr.bf16.mxu0 0
  %2699 = vmatpush1.bf16.msra.mxu0 %v1191
  %2700 = vmatprep.subr.bf16.mxu0 0
  %2701 = vmatpush1.bf16.msra.mxu0 %v1188
  %2702 = vmatprep.subr.bf16.mxu0 0
  %2703 = vmatpush2.bf16.msra.mxu0 0
  %2704 = vmatprep.subr.bf16.mxu0 0
  %2705 = vmatpush2.bf16.msra.mxu0 0
  %2706 = vmatprep.subr.bf16.mxu0 0
  %2707 = vmatpush2.bf16.msra.mxu0 0
  %2708 = vmatprep.subr.bf16.mxu0 0
  %2709 = vmatpush2.bf16.msra.mxu0 0
  %2710 = vmatprep.subr.bf16.mxu0 0
  %2711 = vmatpush2.bf16.msra.mxu0 0
  %2712 = vmatprep.subr.bf16.mxu0 0
  %2713 = vmatpush2.bf16.msra.mxu0 0
  %2714 = vmatprep.subr.bf16.mxu0 0
  %2715 = vmatpush2.bf16.msra.mxu0 0
  %2716 = vmatprep.subr.bf16.mxu0 0
  %2717 = vmatpush2.bf16.msra.mxu0 0
  %2718 = vmatprep.mubr.bf16.mxu0 0
  %2719 = vmatmul.mubr.bf16.gmra.mxu0 %v2642
  %v2720 = vpop.f32.mrf.mxu0
  %v2721 = vadd.f32 0.0, %v2720
  %v2722 = vpop.f32.mrf.mxu0
  %v2723 = vpop.f32.mrf.mxu0
  %v2724 = vadd.f32 0.0, %v2723
  %v2725 = vpop.f32.mrf.mxu0
  %2726 = vdwg.mxu0
  %v2727 = vadd.f32 %v2622, %v2678
  %v2728 = vadd.f32 %v2623, %v2680
  %v2729 = vadd.f32 %v2624, %v2721
  %v2730 = vadd.f32 %v2625, %v2682
  %v2731 = vadd.f32 %v2626, %v2684
  %v2732 = vadd.f32 %v2627, %v2724
  %v2733 = vmax.f32 %v2274, %v2727
  %v2734 = vmax.f32 %v2275, %v2728
  %v2735 = vmax.f32 %v2276, %v2729
  %v2736 = vmax.f32 %v2277, %v2730
  %v2737 = vmax.f32 %v2278, %v2731
  %v2738 = vmax.f32 %v2279, %v2732
  %2743 = vrot.lane.b32.xlu0 %v2734, 116
  %v2744 = vpop.permute.xlu0 %2743
  %2745 = vrot.lane.b32.xlu0 %v2735, 116
  %v2746 = vpop.permute.xlu0 %2745
  %2747 = vrot.lane.b32.xlu0 %v2737, 116
  %v2748 = vpop.permute.xlu0 %2747
  %2749 = vrot.lane.b32.xlu0 %v2738, 116
  %v2750 = vpop.permute.xlu0 %2749
  %v2751 = vsel %vm1795, %v2744, %v2746
  %v2752 = vsel %vm1795, %v2748, %v2750
  %v2757 = vmax.f32 %v2733, %v2751
  %v2758 = vmax.f32 %v2734, %v2746
  %v2759 = vmax.f32 %v2736, %v2752
  %v2760 = vmax.f32 %v2737, %v2750
  %v2761 = vadd.f32 %v2757, %v1810
  %v2762 = vadd.f32 %v2758, %v1814
  %v2763 = vadd.f32 %v2759, %v1810
  %v2764 = vadd.f32 %v2760, %v1814
  %v2765 = vmax.f32 %v2761, 0.0
  %v2766 = vmax.f32 %v2762, 0.0
  %v2767 = vmax.f32 %v2763, 0.0
  %v2768 = vmax.f32 %v2764, 0.0
  %v2769 = vpack.c.bf16 %v2767, %v2765
  %v2770 = vpack.c.bf16 %v2768, %v2766
  %v2771 = vld [vmem:[%s7] sm:$0x1]
  %v2772 = vld [vmem:[%s2] sm:$0xff]
  %v2773 = vld [vmem:[%s2 + $0x8] sm:$0xff]
  %v2774 = vld [vmem:[%s2 + $0x10] sm:$0xff]
  %v2775 = vld [vmem:[%s2 + $0x18] sm:$0xff]
  %v2776 = vld [vmem:[%s2 + $0x20] sm:$0xff]
  %v2777 = vld [vmem:[%s2 + $0x28] sm:$0xff]
  %v2778 = vld [vmem:[%s2 + $0x30] sm:$0xff]
  %v2779 = vld [vmem:[%s2 + $0x38] sm:$0xff]
  %v2780 = vld [vmem:[%s2 + $0x40] sm:$0xff]
  %v2781 = vld [vmem:[%s2 + $0x48] sm:$0xff]
  %v2782 = vld [vmem:[%s2 + $0x50] sm:$0xff]
  %v2783 = vld [vmem:[%s2 + $0x58] sm:$0xff]
  %v2784 = vld [vmem:[%s2 + $0x60] sm:$0xff]
  %v2785 = vld [vmem:[%s2 + $0x68] sm:$0xff]
  %v2786 = vld [vmem:[%s2 + $0x70] sm:$0xff]
  %v2787 = vld [vmem:[%s2 + $0x78] sm:$0xff]
  %v2788 = vld [vmem:[%s2 + $0x80] sm:$0xff]
  %v2789 = vld [vmem:[%s2 + $0x88] sm:$0x33]
  %s2790 = scalar_lea.vmem %s2, 144
  %v2791 = vld [vmem:[%s2790] sm:$0xff]
  %v2792 = vld [vmem:[%s2790 + $0x8] sm:$0xff]
  %v2793 = vld [vmem:[%s2790 + $0x10] sm:$0xff]
  %v2794 = vld [vmem:[%s2790 + $0x18] sm:$0xff]
  %v2795 = vld [vmem:[%s2790 + $0x20] sm:$0xff]
  %v2796 = vld [vmem:[%s2790 + $0x28] sm:$0xff]
  %v2797 = vld [vmem:[%s2790 + $0x30] sm:$0xff]
  %v2798 = vld [vmem:[%s2790 + $0x38] sm:$0xff]
  %v2799 = vld [vmem:[%s2790 + $0x40] sm:$0xff]
  %v2800 = vld [vmem:[%s2790 + $0x48] sm:$0xff]
  %v2801 = vld [vmem:[%s2790 + $0x50] sm:$0xff]
  %v2802 = vld [vmem:[%s2790 + $0x58] sm:$0xff]
  %v2803 = vld [vmem:[%s2790 + $0x60] sm:$0xff]
  %v2804 = vld [vmem:[%s2790 + $0x68] sm:$0xff]
  %v2805 = vld [vmem:[%s2790 + $0x70] sm:$0xff]
  %v2806 = vld [vmem:[%s2790 + $0x78] sm:$0xff]
  %v2807 = vld [vmem:[%s2790 + $0x80] sm:$0xff]
  %v2808 = vld [vmem:[%s2790 + $0x88] sm:$0x33]
  %v2827 = vunpack.c.l.b16 %v2791
  %v2828 = vunpack.c.h.b16 %v2791
  %v2829 = vunpack.c.l.b16 %v2792
  %v2830 = vunpack.c.h.b16 %v2792
  %v2831 = vunpack.c.l.b16 %v2793
  %v2832 = vunpack.c.h.b16 %v2793
  %v2833 = vunpack.c.l.b16 %v2794
  %v2834 = vunpack.c.h.b16 %v2794
  %v2835 = vunpack.c.l.b16 %v2795
  %v2836 = vunpack.c.h.b16 %v2795
  %v2837 = vunpack.c.l.b16 %v2796
  %v2838 = vunpack.c.h.b16 %v2796
  %v2839 = vunpack.c.l.b16 %v2797
  %v2840 = vunpack.c.h.b16 %v2797
  %v2841 = vunpack.c.l.b16 %v2798
  %v2842 = vunpack.c.h.b16 %v2798
  %v2843 = vunpack.c.l.b16 %v2799
  %v2844 = vunpack.c.h.b16 %v2799
  %v2845 = vunpack.c.l.b16 %v2800
  %v2846 = vunpack.c.h.b16 %v2800
  %v2847 = vunpack.c.l.b16 %v2801
  %v2848 = vunpack.c.h.b16 %v2801
  %v2849 = vunpack.c.l.b16 %v2802
  %v2850 = vunpack.c.h.b16 %v2802
  %v2851 = vunpack.c.l.b16 %v2803
  %v2852 = vunpack.c.h.b16 %v2803
  %v2853 = vunpack.c.l.b16 %v2804
  %v2854 = vunpack.c.h.b16 %v2804
  %v2855 = vunpack.c.l.b16 %v2805
  %v2856 = vunpack.c.h.b16 %v2805
  %v2857 = vunpack.c.l.b16 %v2806
  %v2858 = vunpack.c.h.b16 %v2806
  %v2859 = vunpack.c.l.b16 %v2807
  %v2860 = vunpack.c.h.b16 %v2807
  %v2861 = vunpack.c.l.b16 %v2808
  %v2862 = vunpack.c.h.b16 %v2808
  %v2863 = vpack.c.b16 %v2829, %v2827
  %v2864 = vpack.c.b16 %v2830, %v2828
  %v2865 = vpack.c.b16 %v2833, %v2831
  %v2866 = vpack.c.b16 %v2834, %v2832
  %v2867 = vpack.c.b16 %v2837, %v2835
  %v2868 = vpack.c.b16 %v2838, %v2836
  %v2869 = vpack.c.b16 %v2841, %v2839
  %v2870 = vpack.c.b16 %v2842, %v2840
  %v2871 = vpack.c.b16 %v2845, %v2843
  %v2872 = vpack.c.b16 %v2846, %v2844
  %v2873 = vpack.c.b16 %v2849, %v2847
  %v2874 = vpack.c.b16 %v2850, %v2848
  %v2875 = vpack.c.b16 %v2853, %v2851
  %v2876 = vpack.c.b16 %v2854, %v2852
  %v2877 = vpack.c.b16 %v2857, %v2855
  %v2878 = vpack.c.b16 %v2858, %v2856
  %v2879 = vpack.c.b16 %v2861, %v2859
  %v2880 = vpack.c.b16 %v2862, %v2860
  %vm2897 = vcmask 97280
  %v2899 = vsel %vm2897, %v2770, 0
  %vm2901 = vcmask 1045504
  %v2903 = vsel %vm2901, %v2879, 0
  %v2906 = vsel %vm2901, %v2880, 0
  %2908 = vmatprep.subr.bf16.mxu0 %v2878
  %2909 = vmatpush1.bf16.msra.mxu0 %v2877
  %2910 = vmatprep.subr.bf16.mxu0 %v2876
  %2911 = vmatpush1.bf16.msra.mxu0 %v2875
  %2912 = vmatprep.subr.bf16.mxu0 %v2874
  %2913 = vmatpush1.bf16.msra.mxu0 %v2873
  %2914 = vmatprep.subr.bf16.mxu0 %v2872
  %2915 = vmatpush1.bf16.msra.mxu0 %v2871
  %2916 = vmatprep.subr.bf16.mxu0 %v2870
  %2917 = vmatpush1.bf16.msra.mxu0 %v2869
  %2918 = vmatprep.subr.bf16.mxu0 %v2868
  %2919 = vmatpush1.bf16.msra.mxu0 %v2867
  %2920 = vmatprep.subr.bf16.mxu0 %v2866
  %2921 = vmatpush1.bf16.msra.mxu0 %v2865
  %2922 = vmatprep.subr.bf16.mxu0 %v2864
  %2923 = vmatpush1.bf16.msra.mxu0 %v2863
  %2924 = vmatprep.subr.bf16.mxu0 0
  %2925 = vmatpush2.bf16.msra.mxu0 0
  %2926 = vmatprep.subr.bf16.mxu0 0
  %2927 = vmatpush2.bf16.msra.mxu0 0
  %2928 = vmatprep.subr.bf16.mxu0 0
  %2929 = vmatpush2.bf16.msra.mxu0 0
  %2930 = vmatprep.subr.bf16.mxu0 0
  %2931 = vmatpush2.bf16.msra.mxu0 0
  %2932 = vmatprep.subr.bf16.mxu0 0
  %2933 = vmatpush2.bf16.msra.mxu0 0
  %2934 = vmatprep.subr.bf16.mxu0 0
  %2935 = vmatpush2.bf16.msra.mxu0 0
  %2936 = vmatprep.subr.bf16.mxu0 0
  %2937 = vmatpush2.bf16.msra.mxu0 0
  %2938 = vmatprep.subr.bf16.mxu0 %v2906
  %2939 = vmatpush2.bf16.msra.mxu0 %v2903
  %2940 = vmatprep.mubr.bf16.mxu0 %v2899
  %2941 = vmatmul.mubr.bf16.gmra.mxu0 %v2769
  %v2942 = vpop.f32.mrf.mxu0
  %v2943 = vadd.f32 0.0, %v2942
  %v2944 = vpop.f32.mrf.mxu0
  %v2945 = vadd.f32 0.0, %v2944
  %v2946 = vpop.f32.mrf.mxu0
  %v2947 = vadd.f32 0.0, %v2946
  %v2948 = vpop.f32.mrf.mxu0
  %v2949 = vadd.f32 0.0, %v2948
  %2950 = vdwg.mxu0
  %v2969 = vunpack.c.l.b16 %v2772
  %v2970 = vunpack.c.h.b16 %v2772
  %v2971 = vunpack.c.l.b16 %v2773
  %v2972 = vunpack.c.h.b16 %v2773
  %v2973 = vunpack.c.l.b16 %v2774
  %v2974 = vunpack.c.h.b16 %v2774
  %v2975 = vunpack.c.l.b16 %v2775
  %v2976 = vunpack.c.h.b16 %v2775
  %v2977 = vunpack.c.l.b16 %v2776
  %v2978 = vunpack.c.h.b16 %v2776
  %v2979 = vunpack.c.l.b16 %v2777
  %v2980 = vunpack.c.h.b16 %v2777
  %v2981 = vunpack.c.l.b16 %v2778
  %v2982 = vunpack.c.h.b16 %v2778
  %v2983 = vunpack.c.l.b16 %v2779
  %v2984 = vunpack.c.h.b16 %v2779
  %v2985 = vunpack.c.l.b16 %v2780
  %v2986 = vunpack.c.h.b16 %v2780
  %v2987 = vunpack.c.l.b16 %v2781
  %v2988 = vunpack.c.h.b16 %v2781
  %v2989 = vunpack.c.l.b16 %v2782
  %v2990 = vunpack.c.h.b16 %v2782
  %v2991 = vunpack.c.l.b16 %v2783
  %v2992 = vunpack.c.h.b16 %v2783
  %v2993 = vunpack.c.l.b16 %v2784
  %v2994 = vunpack.c.h.b16 %v2784
  %v2995 = vunpack.c.l.b16 %v2785
  %v2996 = vunpack.c.h.b16 %v2785
  %v2997 = vunpack.c.l.b16 %v2786
  %v2998 = vunpack.c.h.b16 %v2786
  %v2999 = vunpack.c.l.b16 %v2787
  %v3000 = vunpack.c.h.b16 %v2787
  %v3001 = vunpack.c.l.b16 %v2788
  %v3002 = vunpack.c.h.b16 %v2788
  %v3003 = vunpack.c.l.b16 %v2789
  %v3004 = vunpack.c.h.b16 %v2789
  %v3005 = vpack.c.b16 %v2971, %v2969
  %v3006 = vpack.c.b16 %v2972, %v2970
  %v3007 = vpack.c.b16 %v2975, %v2973
  %v3008 = vpack.c.b16 %v2976, %v2974
  %v3009 = vpack.c.b16 %v2979, %v2977
  %v3010 = vpack.c.b16 %v2980, %v2978
  %v3011 = vpack.c.b16 %v2983, %v2981
  %v3012 = vpack.c.b16 %v2984, %v2982
  %v3013 = vpack.c.b16 %v2987, %v2985
  %v3014 = vpack.c.b16 %v2988, %v2986
  %v3015 = vpack.c.b16 %v2991, %v2989
  %v3016 = vpack.c.b16 %v2992, %v2990
  %v3017 = vpack.c.b16 %v2995, %v2993
  %v3018 = vpack.c.b16 %v2996, %v2994
  %v3019 = vpack.c.b16 %v2999, %v2997
  %v3020 = vpack.c.b16 %v3000, %v2998
  %v3021 = vpack.c.b16 %v3003, %v3001
  %v3022 = vpack.c.b16 %v3004, %v3002
  %v3040 = vsel %vm2897, %v1826, 0
  %v3043 = vsel %vm2901, %v3021, 0
  %v3046 = vsel %vm2901, %v3022, 0
  %3048 = vmatprep.subr.bf16.mxu0 %v3020
  %3049 = vmatpush1.bf16.msra.mxu0 %v3019
  %3050 = vmatprep.subr.bf16.mxu0 %v3018
  %3051 = vmatpush1.bf16.msra.mxu0 %v3017
  %3052 = vmatprep.subr.bf16.mxu0 %v3016
  %3053 = vmatpush1.bf16.msra.mxu0 %v3015
  %3054 = vmatprep.subr.bf16.mxu0 %v3014
  %3055 = vmatpush1.bf16.msra.mxu0 %v3013
  %3056 = vmatprep.subr.bf16.mxu0 %v3012
  %3057 = vmatpush1.bf16.msra.mxu0 %v3011
  %3058 = vmatprep.subr.bf16.mxu0 %v3010
  %3059 = vmatpush1.bf16.msra.mxu0 %v3009
  %3060 = vmatprep.subr.bf16.mxu0 %v3008
  %3061 = vmatpush1.bf16.msra.mxu0 %v3007
  %3062 = vmatprep.subr.bf16.mxu0 %v3006
  %3063 = vmatpush1.bf16.msra.mxu0 %v3005
  %3064 = vmatprep.subr.bf16.mxu0 0
  %3065 = vmatpush2.bf16.msra.mxu0 0
  %3066 = vmatprep.subr.bf16.mxu0 0
  %3067 = vmatpush2.bf16.msra.mxu0 0
  %3068 = vmatprep.subr.bf16.mxu0 0
  %3069 = vmatpush2.bf16.msra.mxu0 0
  %3070 = vmatprep.subr.bf16.mxu0 0
  %3071 = vmatpush2.bf16.msra.mxu0 0
  %3072 = vmatprep.subr.bf16.mxu0 0
  %3073 = vmatpush2.bf16.msra.mxu0 0
  %3074 = vmatprep.subr.bf16.mxu0 0
  %3075 = vmatpush2.bf16.msra.mxu0 0
  %3076 = vmatprep.subr.bf16.mxu0 0
  %3077 = vmatpush2.bf16.msra.mxu0 0
  %3078 = vmatprep.subr.bf16.mxu0 %v3046
  %3079 = vmatpush2.bf16.msra.mxu0 %v3043
  %3080 = vmatprep.mubr.bf16.mxu0 %v3040
  %3081 = vmatmul.mubr.bf16.gmra.mxu0 %v1825
  %v3082 = vpop.f32.mrf.mxu0
  %v3083 = vadd.f32 %v2943, %v3082
  %v3084 = vpop.f32.mrf.mxu0
  %v3085 = vadd.f32 %v2945, %v3084
  %v3086 = vpop.f32.mrf.mxu0
  %v3087 = vadd.f32 %v2947, %v3086
  %v3088 = vpop.f32.mrf.mxu0
  %v3089 = vadd.f32 %v2949, %v3088
  %3090 = vdwg.mxu0
  %v3092 = vshrl.u32 %v1825, 16
  %v3094 = vshll.u32 %v1825, 16
  %v3096 = vrot.slane %v3094, 1
  %v3097 = vor.u32 %v3092, %v3096
  %v3098 = vshrl.u32 %v1826, 16
  %v3100 = vshll.u32 %v1826, 16
  %v3102 = vrot.slane %v3100, 1
  %v3103 = vor.u32 %v3098, %v3102
  %v3108 = vsel %vm1071, %v3097, %v3096
  %v3109 = vsel %vm1071, %v3103, %v3102
  %s3110 = scalar_lea.vmem %s2, 288
  %v3111 = vld [vmem:[%s3110] sm:$0xff]
  %v3112 = vld [vmem:[%s3110 + $0x8] sm:$0xff]
  %v3113 = vld [vmem:[%s3110 + $0x10] sm:$0xff]
  %v3114 = vld [vmem:[%s3110 + $0x18] sm:$0xff]
  %v3115 = vld [vmem:[%s3110 + $0x20] sm:$0xff]
  %v3116 = vld [vmem:[%s3110 + $0x28] sm:$0xff]
  %v3117 = vld [vmem:[%s3110 + $0x30] sm:$0xff]
  %v3118 = vld [vmem:[%s3110 + $0x38] sm:$0xff]
  %v3119 = vld [vmem:[%s3110 + $0x40] sm:$0xff]
  %v3120 = vld [vmem:[%s3110 + $0x48] sm:$0xff]
  %v3121 = vld [vmem:[%s3110 + $0x50] sm:$0xff]
  %v3122 = vld [vmem:[%s3110 + $0x58] sm:$0xff]
  %v3123 = vld [vmem:[%s3110 + $0x60] sm:$0xff]
  %v3124 = vld [vmem:[%s3110 + $0x68] sm:$0xff]
  %v3125 = vld [vmem:[%s3110 + $0x70] sm:$0xff]
  %v3126 = vld [vmem:[%s3110 + $0x78] sm:$0xff]
  %v3127 = vld [vmem:[%s3110 + $0x80] sm:$0xff]
  %v3128 = vld [vmem:[%s3110 + $0x88] sm:$0x33]
  %v3147 = vunpack.c.l.b16 %v3111
  %v3148 = vunpack.c.h.b16 %v3111
  %v3149 = vunpack.c.l.b16 %v3112
  %v3150 = vunpack.c.h.b16 %v3112
  %v3151 = vunpack.c.l.b16 %v3113
  %v3152 = vunpack.c.h.b16 %v3113
  %v3153 = vunpack.c.l.b16 %v3114
  %v3154 = vunpack.c.h.b16 %v3114
  %v3155 = vunpack.c.l.b16 %v3115
  %v3156 = vunpack.c.h.b16 %v3115
  %v3157 = vunpack.c.l.b16 %v3116
  %v3158 = vunpack.c.h.b16 %v3116
  %v3159 = vunpack.c.l.b16 %v3117
  %v3160 = vunpack.c.h.b16 %v3117
  %v3161 = vunpack.c.l.b16 %v3118
  %v3162 = vunpack.c.h.b16 %v3118
  %v3163 = vunpack.c.l.b16 %v3119
  %v3164 = vunpack.c.h.b16 %v3119
  %v3165 = vunpack.c.l.b16 %v3120
  %v3166 = vunpack.c.h.b16 %v3120
  %v3167 = vunpack.c.l.b16 %v3121
  %v3168 = vunpack.c.h.b16 %v3121
  %v3169 = vunpack.c.l.b16 %v3122
  %v3170 = vunpack.c.h.b16 %v3122
  %v3171 = vunpack.c.l.b16 %v3123
  %v3172 = vunpack.c.h.b16 %v3123
  %v3173 = vunpack.c.l.b16 %v3124
  %v3174 = vunpack.c.h.b16 %v3124
  %v3175 = vunpack.c.l.b16 %v3125
  %v3176 = vunpack.c.h.b16 %v3125
  %v3177 = vunpack.c.l.b16 %v3126
  %v3178 = vunpack.c.h.b16 %v3126
  %v3179 = vunpack.c.l.b16 %v3127
  %v3180 = vunpack.c.h.b16 %v3127
  %v3181 = vunpack.c.l.b16 %v3128
  %v3182 = vunpack.c.h.b16 %v3128
  %v3183 = vpack.c.b16 %v3149, %v3147
  %v3184 = vpack.c.b16 %v3150, %v3148
  %v3185 = vpack.c.b16 %v3153, %v3151
  %v3186 = vpack.c.b16 %v3154, %v3152
  %v3187 = vpack.c.b16 %v3157, %v3155
  %v3188 = vpack.c.b16 %v3158, %v3156
  %v3189 = vpack.c.b16 %v3161, %v3159
  %v3190 = vpack.c.b16 %v3162, %v3160
  %v3191 = vpack.c.b16 %v3165, %v3163
  %v3192 = vpack.c.b16 %v3166, %v3164
  %v3193 = vpack.c.b16 %v3169, %v3167
  %v3194 = vpack.c.b16 %v3170, %v3168
  %v3195 = vpack.c.b16 %v3173, %v3171
  %v3196 = vpack.c.b16 %v3174, %v3172
  %v3197 = vpack.c.b16 %v3177, %v3175
  %v3198 = vpack.c.b16 %v3178, %v3176
  %v3199 = vpack.c.b16 %v3181, %v3179
  %v3200 = vpack.c.b16 %v3182, %v3180
  %v3218 = vsel %vm2897, %v3109, 0
  %v3221 = vsel %vm2901, %v3199, 0
  %v3224 = vsel %vm2901, %v3200, 0
  %3226 = vmatprep.subr.bf16.mxu0 %v3198
  %3227 = vmatpush1.bf16.msra.mxu0 %v3197
  %3228 = vmatprep.subr.bf16.mxu0 %v3196
  %3229 = vmatpush1.bf16.msra.mxu0 %v3195
  %3230 = vmatprep.subr.bf16.mxu0 %v3194
  %3231 = vmatpush1.bf16.msra.mxu0 %v3193
  %3232 = vmatprep.subr.bf16.mxu0 %v3192
  %3233 = vmatpush1.bf16.msra.mxu0 %v3191
  %3234 = vmatprep.subr.bf16.mxu0 %v3190
  %3235 = vmatpush1.bf16.msra.mxu0 %v3189
  %3236 = vmatprep.subr.bf16.mxu0 %v3188
  %3237 = vmatpush1.bf16.msra.mxu0 %v3187
  %3238 = vmatprep.subr.bf16.mxu0 %v3186
  %3239 = vmatpush1.bf16.msra.mxu0 %v3185
  %3240 = vmatprep.subr.bf16.mxu0 %v3184
  %3241 = vmatpush1.bf16.msra.mxu0 %v3183
  %3242 = vmatprep.subr.bf16.mxu0 0
  %3243 = vmatpush2.bf16.msra.mxu0 0
  %3244 = vmatprep.subr.bf16.mxu0 0
  %3245 = vmatpush2.bf16.msra.mxu0 0
  %3246 = vmatprep.subr.bf16.mxu0 0
  %3247 = vmatpush2.bf16.msra.mxu0 0
  %3248 = vmatprep.subr.bf16.mxu0 0
  %3249 = vmatpush2.bf16.msra.mxu0 0
  %3250 = vmatprep.subr.bf16.mxu0 0
  %3251 = vmatpush2.bf16.msra.mxu0 0
  %3252 = vmatprep.subr.bf16.mxu0 0
  %3253 = vmatpush2.bf16.msra.mxu0 0
  %3254 = vmatprep.subr.bf16.mxu0 0
  %3255 = vmatpush2.bf16.msra.mxu0 0
  %3256 = vmatprep.subr.bf16.mxu0 %v3224
  %3257 = vmatpush2.bf16.msra.mxu0 %v3221
  %3258 = vmatprep.mubr.bf16.mxu0 %v3218
  %3259 = vmatmul.mubr.bf16.gmra.mxu0 %v3108
  %v3260 = vpop.f32.mrf.mxu0
  %v3261 = vadd.f32 0.0, %v3260
  %v3262 = vpop.f32.mrf.mxu0
  %v3263 = vadd.f32 0.0, %v3262
  %v3264 = vpop.f32.mrf.mxu0
  %v3265 = vadd.f32 0.0, %v3264
  %v3266 = vpop.f32.mrf.mxu0
  %v3267 = vadd.f32 0.0, %v3266
  %3268 = vdwg.mxu0
  %v3269 = vadd.f32 %v3083, %v3261
  %v3270 = vadd.f32 %v3085, %v3263
  %v3271 = vadd.f32 %v3087, %v3265
  %v3272 = vadd.f32 %v3089, %v3267
  %v3274 = vshrl.u32 %v2769, 16
  %v3276 = vshll.u32 %v2769, 16
  %v3278 = vrot.slane %v3276, 1
  %v3279 = vor.u32 %v3274, %v3278
  %v3280 = vshrl.u32 %v2770, 16
  %v3282 = vshll.u32 %v2770, 16
  %v3284 = vrot.slane %v3282, 1
  %v3285 = vor.u32 %v3280, %v3284
  %v3290 = vsel %vm1071, %v3279, %v3278
  %v3291 = vsel %vm1071, %v3285, %v3284
  %s3292 = scalar_lea.vmem %s2, 432
  %v3293 = vld [vmem:[%s3292] sm:$0xff]
  %v3294 = vld [vmem:[%s3292 + $0x8] sm:$0xff]
  %v3295 = vld [vmem:[%s3292 + $0x10] sm:$0xff]
  %v3296 = vld [vmem:[%s3292 + $0x18] sm:$0xff]
  %v3297 = vld [vmem:[%s3292 + $0x20] sm:$0xff]
  %v3298 = vld [vmem:[%s3292 + $0x28] sm:$0xff]
  %v3299 = vld [vmem:[%s3292 + $0x30] sm:$0xff]
  %v3300 = vld [vmem:[%s3292 + $0x38] sm:$0xff]
  %v3301 = vld [vmem:[%s3292 + $0x40] sm:$0xff]
  %v3302 = vld [vmem:[%s3292 + $0x48] sm:$0xff]
  %v3303 = vld [vmem:[%s3292 + $0x50] sm:$0xff]
  %v3304 = vld [vmem:[%s3292 + $0x58] sm:$0xff]
  %v3305 = vld [vmem:[%s3292 + $0x60] sm:$0xff]
  %v3306 = vld [vmem:[%s3292 + $0x68] sm:$0xff]
  %v3307 = vld [vmem:[%s3292 + $0x70] sm:$0xff]
  %v3308 = vld [vmem:[%s3292 + $0x78] sm:$0xff]
  %v3309 = vld [vmem:[%s3292 + $0x80] sm:$0xff]
  %v3310 = vld [vmem:[%s3292 + $0x88] sm:$0x33]
  %v3329 = vunpack.c.l.b16 %v3293
  %v3330 = vunpack.c.h.b16 %v3293
  %v3331 = vunpack.c.l.b16 %v3294
  %v3332 = vunpack.c.h.b16 %v3294
  %v3333 = vunpack.c.l.b16 %v3295
  %v3334 = vunpack.c.h.b16 %v3295
  %v3335 = vunpack.c.l.b16 %v3296
  %v3336 = vunpack.c.h.b16 %v3296
  %v3337 = vunpack.c.l.b16 %v3297
  %v3338 = vunpack.c.h.b16 %v3297
  %v3339 = vunpack.c.l.b16 %v3298
  %v3340 = vunpack.c.h.b16 %v3298
  %v3341 = vunpack.c.l.b16 %v3299
  %v3342 = vunpack.c.h.b16 %v3299
  %v3343 = vunpack.c.l.b16 %v3300
  %v3344 = vunpack.c.h.b16 %v3300
  %v3345 = vunpack.c.l.b16 %v3301
  %v3346 = vunpack.c.h.b16 %v3301
  %v3347 = vunpack.c.l.b16 %v3302
  %v3348 = vunpack.c.h.b16 %v3302
  %v3349 = vunpack.c.l.b16 %v3303
  %v3350 = vunpack.c.h.b16 %v3303
  %v3351 = vunpack.c.l.b16 %v3304
  %v3352 = vunpack.c.h.b16 %v3304
  %v3353 = vunpack.c.l.b16 %v3305
  %v3354 = vunpack.c.h.b16 %v3305
  %v3355 = vunpack.c.l.b16 %v3306
  %v3356 = vunpack.c.h.b16 %v3306
  %v3357 = vunpack.c.l.b16 %v3307
  %v3358 = vunpack.c.h.b16 %v3307
  %v3359 = vunpack.c.l.b16 %v3308
  %v3360 = vunpack.c.h.b16 %v3308
  %v3361 = vunpack.c.l.b16 %v3309
  %v3362 = vunpack.c.h.b16 %v3309
  %v3363 = vunpack.c.l.b16 %v3310
  %v3364 = vunpack.c.h.b16 %v3310
  %v3365 = vpack.c.b16 %v3331, %v3329
  %v3366 = vpack.c.b16 %v3332, %v3330
  %v3367 = vpack.c.b16 %v3335, %v3333
  %v3368 = vpack.c.b16 %v3336, %v3334
  %v3369 = vpack.c.b16 %v3339, %v3337
  %v3370 = vpack.c.b16 %v3340, %v3338
  %v3371 = vpack.c.b16 %v3343, %v3341
  %v3372 = vpack.c.b16 %v3344, %v3342
  %v3373 = vpack.c.b16 %v3347, %v3345
  %v3374 = vpack.c.b16 %v3348, %v3346
  %v3375 = vpack.c.b16 %v3351, %v3349
  %v3376 = vpack.c.b16 %v3352, %v3350
  %v3377 = vpack.c.b16 %v3355, %v3353
  %v3378 = vpack.c.b16 %v3356, %v3354
  %v3379 = vpack.c.b16 %v3359, %v3357
  %v3380 = vpack.c.b16 %v3360, %v3358
  %v3381 = vpack.c.b16 %v3363, %v3361
  %v3382 = vpack.c.b16 %v3364, %v3362
  %v3400 = vsel %vm2897, %v3291, 0
  %v3403 = vsel %vm2901, %v3381, 0
  %v3406 = vsel %vm2901, %v3382, 0
  %3408 = vmatprep.subr.bf16.mxu0 %v3380
  %3409 = vmatpush1.bf16.msra.mxu0 %v3379
  %3410 = vmatprep.subr.bf16.mxu0 %v3378
  %3411 = vmatpush1.bf16.msra.mxu0 %v3377
  %3412 = vmatprep.subr.bf16.mxu0 %v3376
  %3413 = vmatpush1.bf16.msra.mxu0 %v3375
  %3414 = vmatprep.subr.bf16.mxu0 %v3374
  %3415 = vmatpush1.bf16.msra.mxu0 %v3373
  %3416 = vmatprep.subr.bf16.mxu0 %v3372
  %3417 = vmatpush1.bf16.msra.mxu0 %v3371
  %3418 = vmatprep.subr.bf16.mxu0 %v3370
  %3419 = vmatpush1.bf16.msra.mxu0 %v3369
  %3420 = vmatprep.subr.bf16.mxu0 %v3368
  %3421 = vmatpush1.bf16.msra.mxu0 %v3367
  %3422 = vmatprep.subr.bf16.mxu0 %v3366
  %3423 = vmatpush1.bf16.msra.mxu0 %v3365
  %3424 = vmatprep.subr.bf16.mxu0 0
  %3425 = vmatpush2.bf16.msra.mxu0 0
  %3426 = vmatprep.subr.bf16.mxu0 0
  %3427 = vmatpush2.bf16.msra.mxu0 0
  %3428 = vmatprep.subr.bf16.mxu0 0
  %3429 = vmatpush2.bf16.msra.mxu0 0
  %3430 = vmatprep.subr.bf16.mxu0 0
  %3431 = vmatpush2.bf16.msra.mxu0 0
  %3432 = vmatprep.subr.bf16.mxu0 0
  %3433 = vmatpush2.bf16.msra.mxu0 0
  %3434 = vmatprep.subr.bf16.mxu0 0
  %3435 = vmatpush2.bf16.msra.mxu0 0
  %3436 = vmatprep.subr.bf16.mxu0 0
  %3437 = vmatpush2.bf16.msra.mxu0 0
  %3438 = vmatprep.subr.bf16.mxu0 %v3406
  %3439 = vmatpush2.bf16.msra.mxu0 %v3403
  %3440 = vmatprep.mubr.bf16.mxu0 %v3400
  %3441 = vmatmul.mubr.bf16.gmra.mxu0 %v3290
  %v3442 = vpop.f32.mrf.mxu0
  %v3443 = vadd.f32 0.0, %v3442
  %v3444 = vpop.f32.mrf.mxu0
  %v3445 = vadd.f32 0.0, %v3444
  %v3446 = vpop.f32.mrf.mxu0
  %v3447 = vadd.f32 0.0, %v3446
  %v3448 = vpop.f32.mrf.mxu0
  %v3449 = vadd.f32 0.0, %v3448
  %3450 = vdwg.mxu0
  %v3451 = vadd.f32 %v3269, %v3443
  %v3452 = vadd.f32 %v3270, %v3445
  %v3453 = vadd.f32 %v3271, %v3447
  %v3454 = vadd.f32 %v3272, %v3449
  %v3457 = vrot.slane %v1825, 1
  %v3458 = vrot.slane %v1826, 1
  %vm3459 = vcmask 1046528
  %v3461 = vsel %vm3459, %v3457, %v3457
  %v3464 = vsel %vm3459, %v3458, %v3458
  %s3465 = scalar_lea.vmem %s2, 576
  %v3466 = vld [vmem:[%s3465] sm:$0xff]
  %v3467 = vld [vmem:[%s3465 + $0x8] sm:$0xff]
  %v3468 = vld [vmem:[%s3465 + $0x10] sm:$0xff]
  %v3469 = vld [vmem:[%s3465 + $0x18] sm:$0xff]
  %v3470 = vld [vmem:[%s3465 + $0x20] sm:$0xff]
  %v3471 = vld [vmem:[%s3465 + $0x28] sm:$0xff]
  %v3472 = vld [vmem:[%s3465 + $0x30] sm:$0xff]
  %v3473 = vld [vmem:[%s3465 + $0x38] sm:$0xff]
  %v3474 = vld [vmem:[%s3465 + $0x40] sm:$0xff]
  %v3475 = vld [vmem:[%s3465 + $0x48] sm:$0xff]
  %v3476 = vld [vmem:[%s3465 + $0x50] sm:$0xff]
  %v3477 = vld [vmem:[%s3465 + $0x58] sm:$0xff]
  %v3478 = vld [vmem:[%s3465 + $0x60] sm:$0xff]
  %v3479 = vld [vmem:[%s3465 + $0x68] sm:$0xff]
  %v3480 = vld [vmem:[%s3465 + $0x70] sm:$0xff]
  %v3481 = vld [vmem:[%s3465 + $0x78] sm:$0xff]
  %v3482 = vld [vmem:[%s3465 + $0x80] sm:$0xff]
  %v3483 = vld [vmem:[%s3465 + $0x88] sm:$0x33]
  %v3502 = vunpack.c.l.b16 %v3466
  %v3503 = vunpack.c.h.b16 %v3466
  %v3504 = vunpack.c.l.b16 %v3467
  %v3505 = vunpack.c.h.b16 %v3467
  %v3506 = vunpack.c.l.b16 %v3468
  %v3507 = vunpack.c.h.b16 %v3468
  %v3508 = vunpack.c.l.b16 %v3469
  %v3509 = vunpack.c.h.b16 %v3469
  %v3510 = vunpack.c.l.b16 %v3470
  %v3511 = vunpack.c.h.b16 %v3470
  %v3512 = vunpack.c.l.b16 %v3471
  %v3513 = vunpack.c.h.b16 %v3471
  %v3514 = vunpack.c.l.b16 %v3472
  %v3515 = vunpack.c.h.b16 %v3472
  %v3516 = vunpack.c.l.b16 %v3473
  %v3517 = vunpack.c.h.b16 %v3473
  %v3518 = vunpack.c.l.b16 %v3474
  %v3519 = vunpack.c.h.b16 %v3474
  %v3520 = vunpack.c.l.b16 %v3475
  %v3521 = vunpack.c.h.b16 %v3475
  %v3522 = vunpack.c.l.b16 %v3476
  %v3523 = vunpack.c.h.b16 %v3476
  %v3524 = vunpack.c.l.b16 %v3477
  %v3525 = vunpack.c.h.b16 %v3477
  %v3526 = vunpack.c.l.b16 %v3478
  %v3527 = vunpack.c.h.b16 %v3478
  %v3528 = vunpack.c.l.b16 %v3479
  %v3529 = vunpack.c.h.b16 %v3479
  %v3530 = vunpack.c.l.b16 %v3480
  %v3531 = vunpack.c.h.b16 %v3480
  %v3532 = vunpack.c.l.b16 %v3481
  %v3533 = vunpack.c.h.b16 %v3481
  %v3534 = vunpack.c.l.b16 %v3482
  %v3535 = vunpack.c.h.b16 %v3482
  %v3536 = vunpack.c.l.b16 %v3483
  %v3537 = vunpack.c.h.b16 %v3483
  %v3538 = vpack.c.b16 %v3504, %v3502
  %v3539 = vpack.c.b16 %v3505, %v3503
  %v3540 = vpack.c.b16 %v3508, %v3506
  %v3541 = vpack.c.b16 %v3509, %v3507
  %v3542 = vpack.c.b16 %v3512, %v3510
  %v3543 = vpack.c.b16 %v3513, %v3511
  %v3544 = vpack.c.b16 %v3516, %v3514
  %v3545 = vpack.c.b16 %v3517, %v3515
  %v3546 = vpack.c.b16 %v3520, %v3518
  %v3547 = vpack.c.b16 %v3521, %v3519
  %v3548 = vpack.c.b16 %v3524, %v3522
  %v3549 = vpack.c.b16 %v3525, %v3523
  %v3550 = vpack.c.b16 %v3528, %v3526
  %v3551 = vpack.c.b16 %v3529, %v3527
  %v3552 = vpack.c.b16 %v3532, %v3530
  %v3553 = vpack.c.b16 %v3533, %v3531
  %v3554 = vpack.c.b16 %v3536, %v3534
  %v3555 = vpack.c.b16 %v3537, %v3535
  %v3572 = vsel %vm2897, %v3464, 0
  %v3575 = vsel %vm2901, %v3554, 0
  %v3578 = vsel %vm2901, %v3555, 0
  %3580 = vmatprep.subr.bf16.mxu0 %v3553
  %3581 = vmatpush1.bf16.msra.mxu0 %v3552
  %3582 = vmatprep.subr.bf16.mxu0 %v3551
  %3583 = vmatpush1.bf16.msra.mxu0 %v3550
  %3584 = vmatprep.subr.bf16.mxu0 %v3549
  %3585 = vmatpush1.bf16.msra.mxu0 %v3548
  %3586 = vmatprep.subr.bf16.mxu0 %v3547
  %3587 = vmatpush1.bf16.msra.mxu0 %v3546
  %3588 = vmatprep.subr.bf16.mxu0 %v3545
  %3589 = vmatpush1.bf16.msra.mxu0 %v3544
  %3590 = vmatprep.subr.bf16.mxu0 %v3543
  %3591 = vmatpush1.bf16.msra.mxu0 %v3542
  %3592 = vmatprep.subr.bf16.mxu0 %v3541
  %3593 = vmatpush1.bf16.msra.mxu0 %v3540
  %3594 = vmatprep.subr.bf16.mxu0 %v3539
  %3595 = vmatpush1.bf16.msra.mxu0 %v3538
  %3596 = vmatprep.subr.bf16.mxu0 0
  %3597 = vmatpush2.bf16.msra.mxu0 0
  %3598 = vmatprep.subr.bf16.mxu0 0
  %3599 = vmatpush2.bf16.msra.mxu0 0
  %3600 = vmatprep.subr.bf16.mxu0 0
  %3601 = vmatpush2.bf16.msra.mxu0 0
  %3602 = vmatprep.subr.bf16.mxu0 0
  %3603 = vmatpush2.bf16.msra.mxu0 0
  %3604 = vmatprep.subr.bf16.mxu0 0
  %3605 = vmatpush2.bf16.msra.mxu0 0
  %3606 = vmatprep.subr.bf16.mxu0 0
  %3607 = vmatpush2.bf16.msra.mxu0 0
  %3608 = vmatprep.subr.bf16.mxu0 0
  %3609 = vmatpush2.bf16.msra.mxu0 0
  %3610 = vmatprep.subr.bf16.mxu0 %v3578
  %3611 = vmatpush2.bf16.msra.mxu0 %v3575
  %3612 = vmatprep.mubr.bf16.mxu0 %v3572
  %3613 = vmatmul.mubr.bf16.gmra.mxu0 %v3461
  %v3614 = vpop.f32.mrf.mxu0
  %v3615 = vadd.f32 0.0, %v3614
  %v3616 = vpop.f32.mrf.mxu0
  %v3617 = vadd.f32 0.0, %v3616
  %v3618 = vpop.f32.mrf.mxu0
  %v3619 = vadd.f32 0.0, %v3618
  %v3620 = vpop.f32.mrf.mxu0
  %v3621 = vadd.f32 0.0, %v3620
  %3622 = vdwg.mxu0
  %v3623 = vadd.f32 %v3451, %v3615
  %v3624 = vadd.f32 %v3452, %v3617
  %v3625 = vadd.f32 %v3453, %v3619
  %v3626 = vadd.f32 %v3454, %v3621
  %3627 = vmatprep.subr.bf16.mxu0 %v2878
  %3628 = vmatpush1.bf16.msra.mxu0 %v2877
  %3629 = vmatprep.subr.bf16.mxu0 %v2876
  %3630 = vmatpush1.bf16.msra.mxu0 %v2875
  %3631 = vmatprep.subr.bf16.mxu0 %v2874
  %3632 = vmatpush1.bf16.msra.mxu0 %v2873
  %3633 = vmatprep.subr.bf16.mxu0 %v2872
  %3634 = vmatpush1.bf16.msra.mxu0 %v2871
  %3635 = vmatprep.subr.bf16.mxu0 %v2870
  %3636 = vmatpush1.bf16.msra.mxu0 %v2869
  %3637 = vmatprep.subr.bf16.mxu0 %v2868
  %3638 = vmatpush1.bf16.msra.mxu0 %v2867
  %3639 = vmatprep.subr.bf16.mxu0 %v2866
  %3640 = vmatpush1.bf16.msra.mxu0 %v2865
  %3641 = vmatprep.subr.bf16.mxu0 %v2864
  %3642 = vmatpush1.bf16.msra.mxu0 %v2863
  %3643 = vmatprep.subr.bf16.mxu0 0
  %3644 = vmatpush2.bf16.msra.mxu0 0
  %3645 = vmatprep.subr.bf16.mxu0 0
  %3646 = vmatpush2.bf16.msra.mxu0 0
  %3647 = vmatprep.subr.bf16.mxu0 0
  %3648 = vmatpush2.bf16.msra.mxu0 0
  %3649 = vmatprep.subr.bf16.mxu0 0
  %3650 = vmatpush2.bf16.msra.mxu0 0
  %3651 = vmatprep.subr.bf16.mxu0 0
  %3652 = vmatpush2.bf16.msra.mxu0 0
  %3653 = vmatprep.subr.bf16.mxu0 0
  %3654 = vmatpush2.bf16.msra.mxu0 0
  %3655 = vmatprep.subr.bf16.mxu0 0
  %3656 = vmatpush2.bf16.msra.mxu0 0
  %3657 = vmatprep.subr.bf16.mxu0 %v2906
  %3658 = vmatpush2.bf16.msra.mxu0 %v2903
  %3659 = vmatprep.mubr.bf16.mxu0 %v3218
  %3660 = vmatmul.mubr.bf16.gmra.mxu0 %v3108
  %v3661 = vpop.f32.mrf.mxu0
  %v3662 = vadd.f32 0.0, %v3661
  %v3663 = vpop.f32.mrf.mxu0
  %v3664 = vadd.f32 0.0, %v3663
  %v3665 = vpop.f32.mrf.mxu0
  %v3666 = vadd.f32 0.0, %v3665
  %v3667 = vpop.f32.mrf.mxu0
  %v3668 = vadd.f32 0.0, %v3667
  %3669 = vdwg.mxu0
  %3670 = vmatprep.subr.bf16.mxu0 %v3020
  %3671 = vmatpush1.bf16.msra.mxu0 %v3019
  %3672 = vmatprep.subr.bf16.mxu0 %v3018
  %3673 = vmatpush1.bf16.msra.mxu0 %v3017
  %3674 = vmatprep.subr.bf16.mxu0 %v3016
  %3675 = vmatpush1.bf16.msra.mxu0 %v3015
  %3676 = vmatprep.subr.bf16.mxu0 %v3014
  %3677 = vmatpush1.bf16.msra.mxu0 %v3013
  %3678 = vmatprep.subr.bf16.mxu0 %v3012
  %3679 = vmatpush1.bf16.msra.mxu0 %v3011
  %3680 = vmatprep.subr.bf16.mxu0 %v3010
  %3681 = vmatpush1.bf16.msra.mxu0 %v3009
  %3682 = vmatprep.subr.bf16.mxu0 %v3008
  %3683 = vmatpush1.bf16.msra.mxu0 %v3007
  %3684 = vmatprep.subr.bf16.mxu0 %v3006
  %3685 = vmatpush1.bf16.msra.mxu0 %v3005
  %3686 = vmatprep.subr.bf16.mxu0 0
  %3687 = vmatpush2.bf16.msra.mxu0 0
  %3688 = vmatprep.subr.bf16.mxu0 0
  %3689 = vmatpush2.bf16.msra.mxu0 0
  %3690 = vmatprep.subr.bf16.mxu0 0
  %3691 = vmatpush2.bf16.msra.mxu0 0
  %3692 = vmatprep.subr.bf16.mxu0 0
  %3693 = vmatpush2.bf16.msra.mxu0 0
  %3694 = vmatprep.subr.bf16.mxu0 0
  %3695 = vmatpush2.bf16.msra.mxu0 0
  %3696 = vmatprep.subr.bf16.mxu0 0
  %3697 = vmatpush2.bf16.msra.mxu0 0
  %3698 = vmatprep.subr.bf16.mxu0 0
  %3699 = vmatpush2.bf16.msra.mxu0 0
  %3700 = vmatprep.subr.bf16.mxu0 %v3046
  %3701 = vmatpush2.bf16.msra.mxu0 %v3043
  %3702 = vmatprep.mubr.bf16.mxu0 %v2899
  %3703 = vmatmul.mubr.bf16.gmra.mxu0 %v2769
  %v3704 = vpop.f32.mrf.mxu0
  %v3705 = vadd.f32 %v3662, %v3704
  %v3706 = vpop.f32.mrf.mxu0
  %v3707 = vadd.f32 %v3664, %v3706
  %v3708 = vpop.f32.mrf.mxu0
  %v3709 = vadd.f32 %v3666, %v3708
  %v3710 = vpop.f32.mrf.mxu0
  %v3711 = vadd.f32 %v3668, %v3710
  %3712 = vdwg.mxu0
  %3713 = vmatprep.subr.bf16.mxu0 %v3198
  %3714 = vmatpush1.bf16.msra.mxu0 %v3197
  %3715 = vmatprep.subr.bf16.mxu0 %v3196
  %3716 = vmatpush1.bf16.msra.mxu0 %v3195
  %3717 = vmatprep.subr.bf16.mxu0 %v3194
  %3718 = vmatpush1.bf16.msra.mxu0 %v3193
  %3719 = vmatprep.subr.bf16.mxu0 %v3192
  %3720 = vmatpush1.bf16.msra.mxu0 %v3191
  %3721 = vmatprep.subr.bf16.mxu0 %v3190
  %3722 = vmatpush1.bf16.msra.mxu0 %v3189
  %3723 = vmatprep.subr.bf16.mxu0 %v3188
  %3724 = vmatpush1.bf16.msra.mxu0 %v3187
  %3725 = vmatprep.subr.bf16.mxu0 %v3186
  %3726 = vmatpush1.bf16.msra.mxu0 %v3185
  %3727 = vmatprep.subr.bf16.mxu0 %v3184
  %3728 = vmatpush1.bf16.msra.mxu0 %v3183
  %3729 = vmatprep.subr.bf16.mxu0 0
  %3730 = vmatpush2.bf16.msra.mxu0 0
  %3731 = vmatprep.subr.bf16.mxu0 0
  %3732 = vmatpush2.bf16.msra.mxu0 0
  %3733 = vmatprep.subr.bf16.mxu0 0
  %3734 = vmatpush2.bf16.msra.mxu0 0
  %3735 = vmatprep.subr.bf16.mxu0 0
  %3736 = vmatpush2.bf16.msra.mxu0 0
  %3737 = vmatprep.subr.bf16.mxu0 0
  %3738 = vmatpush2.bf16.msra.mxu0 0
  %3739 = vmatprep.subr.bf16.mxu0 0
  %3740 = vmatpush2.bf16.msra.mxu0 0
  %3741 = vmatprep.subr.bf16.mxu0 0
  %3742 = vmatpush2.bf16.msra.mxu0 0
  %3743 = vmatprep.subr.bf16.mxu0 %v3224
  %3744 = vmatpush2.bf16.msra.mxu0 %v3221
  %3745 = vmatprep.mubr.bf16.mxu0 %v3400
  %3746 = vmatmul.mubr.bf16.gmra.mxu0 %v3290
  %v3747 = vpop.f32.mrf.mxu0
  %v3748 = vadd.f32 0.0, %v3747
  %v3749 = vpop.f32.mrf.mxu0
  %v3750 = vadd.f32 0.0, %v3749
  %v3751 = vpop.f32.mrf.mxu0
  %v3752 = vadd.f32 0.0, %v3751
  %v3753 = vpop.f32.mrf.mxu0
  %v3754 = vadd.f32 0.0, %v3753
  %3755 = vdwg.mxu0
  %v3756 = vadd.f32 %v3705, %v3748
  %v3757 = vadd.f32 %v3707, %v3750
  %v3758 = vadd.f32 %v3709, %v3752
  %v3759 = vadd.f32 %v3711, %v3754
  %3760 = vmatprep.subr.bf16.mxu0 %v3380
  %3761 = vmatpush1.bf16.msra.mxu0 %v3379
  %3762 = vmatprep.subr.bf16.mxu0 %v3378
  %3763 = vmatpush1.bf16.msra.mxu0 %v3377
  %3764 = vmatprep.subr.bf16.mxu0 %v3376
  %3765 = vmatpush1.bf16.msra.mxu0 %v3375
  %3766 = vmatprep.subr.bf16.mxu0 %v3374
  %3767 = vmatpush1.bf16.msra.mxu0 %v3373
  %3768 = vmatprep.subr.bf16.mxu0 %v3372
  %3769 = vmatpush1.bf16.msra.mxu0 %v3371
  %3770 = vmatprep.subr.bf16.mxu0 %v3370
  %3771 = vmatpush1.bf16.msra.mxu0 %v3369
  %3772 = vmatprep.subr.bf16.mxu0 %v3368
  %3773 = vmatpush1.bf16.msra.mxu0 %v3367
  %3774 = vmatprep.subr.bf16.mxu0 %v3366
  %3775 = vmatpush1.bf16.msra.mxu0 %v3365
  %3776 = vmatprep.subr.bf16.mxu0 0
  %3777 = vmatpush2.bf16.msra.mxu0 0
  %3778 = vmatprep.subr.bf16.mxu0 0
  %3779 = vmatpush2.bf16.msra.mxu0 0
  %3780 = vmatprep.subr.bf16.mxu0 0
  %3781 = vmatpush2.bf16.msra.mxu0 0
  %3782 = vmatprep.subr.bf16.mxu0 0
  %3783 = vmatpush2.bf16.msra.mxu0 0
  %3784 = vmatprep.subr.bf16.mxu0 0
  %3785 = vmatpush2.bf16.msra.mxu0 0
  %3786 = vmatprep.subr.bf16.mxu0 0
  %3787 = vmatpush2.bf16.msra.mxu0 0
  %3788 = vmatprep.subr.bf16.mxu0 0
  %3789 = vmatpush2.bf16.msra.mxu0 0
  %3790 = vmatprep.subr.bf16.mxu0 %v3406
  %3791 = vmatpush2.bf16.msra.mxu0 %v3403
  %3792 = vmatprep.mubr.bf16.mxu0 %v3572
  %3793 = vmatmul.mubr.bf16.gmra.mxu0 %v3461
  %v3794 = vpop.f32.mrf.mxu0
  %v3795 = vadd.f32 0.0, %v3794
  %v3796 = vpop.f32.mrf.mxu0
  %v3797 = vadd.f32 0.0, %v3796
  %v3798 = vpop.f32.mrf.mxu0
  %v3799 = vadd.f32 0.0, %v3798
  %v3800 = vpop.f32.mrf.mxu0
  %v3801 = vadd.f32 0.0, %v3800
  %3802 = vdwg.mxu0
  %v3803 = vadd.f32 %v3756, %v3795
  %v3804 = vadd.f32 %v3757, %v3797
  %v3805 = vadd.f32 %v3758, %v3799
  %v3806 = vadd.f32 %v3759, %v3801
  %v3809 = vrot.slane %v2769, 1
  %v3810 = vrot.slane %v2770, 1
  %v3812 = vsel %vm3459, %v3809, %v3809
  %v3815 = vsel %vm3459, %v3810, %v3810
  %v3816 = vsel %vm2897, %v3815, 0
  %3818 = vmatprep.subr.bf16.mxu0 %v3553
  %3819 = vmatpush1.bf16.msra.mxu0 %v3552
  %3820 = vmatprep.subr.bf16.mxu0 %v3551
  %3821 = vmatpush1.bf16.msra.mxu0 %v3550
  %3822 = vmatprep.subr.bf16.mxu0 %v3549
  %3823 = vmatpush1.bf16.msra.mxu0 %v3548
  %3824 = vmatprep.subr.bf16.mxu0 %v3547
  %3825 = vmatpush1.bf16.msra.mxu0 %v3546
  %3826 = vmatprep.subr.bf16.mxu0 %v3545
  %3827 = vmatpush1.bf16.msra.mxu0 %v3544
  %3828 = vmatprep.subr.bf16.mxu0 %v3543
  %3829 = vmatpush1.bf16.msra.mxu0 %v3542
  %3830 = vmatprep.subr.bf16.mxu0 %v3541
  %3831 = vmatpush1.bf16.msra.mxu0 %v3540
  %3832 = vmatprep.subr.bf16.mxu0 %v3539
  %3833 = vmatpush1.bf16.msra.mxu0 %v3538
  %3834 = vmatprep.subr.bf16.mxu0 0
  %3835 = vmatpush2.bf16.msra.mxu0 0
  %3836 = vmatprep.subr.bf16.mxu0 0
  %3837 = vmatpush2.bf16.msra.mxu0 0
  %3838 = vmatprep.subr.bf16.mxu0 0
  %3839 = vmatpush2.bf16.msra.mxu0 0
  %3840 = vmatprep.subr.bf16.mxu0 0
  %3841 = vmatpush2.bf16.msra.mxu0 0
  %3842 = vmatprep.subr.bf16.mxu0 0
  %3843 = vmatpush2.bf16.msra.mxu0 0
  %3844 = vmatprep.subr.bf16.mxu0 0
  %3845 = vmatpush2.bf16.msra.mxu0 0
  %3846 = vmatprep.subr.bf16.mxu0 0
  %3847 = vmatpush2.bf16.msra.mxu0 0
  %3848 = vmatprep.subr.bf16.mxu0 %v3578
  %3849 = vmatpush2.bf16.msra.mxu0 %v3575
  %3850 = vmatprep.mubr.bf16.mxu0 %v3816
  %3851 = vmatmul.mubr.bf16.gmra.mxu0 %v3812
  %v3852 = vpop.f32.mrf.mxu0
  %v3853 = vadd.f32 0.0, %v3852
  %v3854 = vpop.f32.mrf.mxu0
  %v3855 = vadd.f32 0.0, %v3854
  %v3856 = vpop.f32.mrf.mxu0
  %v3857 = vadd.f32 0.0, %v3856
  %v3858 = vpop.f32.mrf.mxu0
  %v3859 = vadd.f32 0.0, %v3858
  %3860 = vdwg.mxu0
  %v3861 = vadd.f32 %v3803, %v3853
  %v3862 = vadd.f32 %v3804, %v3855
  %v3863 = vadd.f32 %v3805, %v3857
  %v3864 = vadd.f32 %v3806, %v3859
  %v3865 = vmax.f32 %v3623, %v3861
  %v3866 = vmax.f32 %v3624, %v3862
  %v3867 = vmax.f32 %v3625, %v3863
  %v3868 = vmax.f32 %v3626, %v3864
  %3873 = vrot.lane.b32.xlu0 %v3865, 28
  %v3874 = vpop.permute.xlu0 %3873
  %3875 = vrot.lane.b32.xlu0 %v3866, 28
  %v3876 = vpop.permute.xlu0 %3875
  %3877 = vrot.lane.b32.xlu0 %v3867, 28
  %v3878 = vpop.permute.xlu0 %3877
  %3879 = vrot.lane.b32.xlu0 %v3868, 28
  %v3880 = vpop.permute.xlu0 %3879
  %vm3881 = vcmask 228352
  %v3882 = vsel %vm3881, %v3874, %v3876
  %v3883 = vsel %vm3881, %v3878, %v3880
  %v3886 = vmax.f32 %v3865, %v3882
  %v3887 = vmax.f32 %v3867, %v3883
  %v3889 = vlaneseq
  %v3890 = vshrl.u32 %v3889, 7
  %v3891 = vsub.s32 0, %v3890
  %v3892 = vrot.slane %v2771, %v3891
  %v3894 = vadd.f32 %v3886, %v3892
  %v3895 = vadd.f32 %v3887, %v3892
  %v3896 = vmax.f32 %v3894, 0.0
  %v3897 = vmax.f32 %v3895, 0.0
  %v3898 = vpack.c.bf16 %v3897, %v3896
  %v3899 = vld [vmem:[%s3] sm:$0xff]
  %v3900 = vld [vmem:[%s3 + $0x8] sm:$0xff]
  %v3901 = vld [vmem:[%s3 + $0x10] sm:$0xf]
  %v3902 = vld [vmem:[%s3 + $0x14] sm:$0xff]
  %v3903 = vld [vmem:[%s3 + $0x1c] sm:$0xff]
  %v3904 = vld [vmem:[%s3 + $0x24] sm:$0xf]
  %v3905 = vld [vmem:[%s3 + $0x28] sm:$0xff]
  %v3906 = vld [vmem:[%s3 + $0x30] sm:$0xff]
  %v3907 = vld [vmem:[%s3 + $0x38] sm:$0xf]
  %v3908 = vld [vmem:[%s3 + $0x3c] sm:$0xff]
  %v3909 = vld [vmem:[%s3 + $0x44] sm:$0xff]
  %v3910 = vld [vmem:[%s3 + $0x4c] sm:$0xf]
  %v3911 = vld [vmem:[%s3 + $0x50] sm:$0xff]
  %v3912 = vld [vmem:[%s3 + $0x58] sm:$0xff]
  %v3913 = vld [vmem:[%s3 + $0x60] sm:$0xf]
  %v3914 = vld [vmem:[%s3 + $0x64] sm:$0xff]
  %v3915 = vld [vmem:[%s3 + $0x6c] sm:$0xff]
  %v3916 = vld [vmem:[%s3 + $0x74] sm:$0xf]
  %v3917 = vld [vmem:[%s3 + $0x78] sm:$0xff]
  %v3918 = vld [vmem:[%s3 + $0x80] sm:$0xff]
  %v3919 = vld [vmem:[%s3 + $0x88] sm:$0xf]
  %v3920 = vld [vmem:[%s3 + $0x8c] sm:$0xff]
  %v3921 = vld [vmem:[%s3 + $0x94] sm:$0xff]
  %v3922 = vld [vmem:[%s3 + $0x9c] sm:$0xf]
  %v3923 = vld [vmem:[%s3 + $0xa0] sm:$0xff]
  %v3924 = vld [vmem:[%s3 + $0xa8] sm:$0xff]
  %v3925 = vld [vmem:[%s3 + $0xb0] sm:$0xf]
  %v3926 = vld [vmem:[%s3 + $0xb4] sm:$0xff]
  %v3927 = vld [vmem:[%s3 + $0xbc] sm:$0xff]
  %v3928 = vld [vmem:[%s3 + $0xc4] sm:$0xf]
  %v3929 = vld [vmem:[%s3 + $0xc8] sm:$0xff]
  %v3930 = vld [vmem:[%s3 + $0xd0] sm:$0xff]
  %v3931 = vld [vmem:[%s3 + $0xd8] sm:$0xf]
  %v3932 = vld [vmem:[%s3 + $0xdc] sm:$0xff]
  %v3933 = vld [vmem:[%s3 + $0xe4] sm:$0xff]
  %v3934 = vld [vmem:[%s3 + $0xec] sm:$0xf]
  %v3935 = vld [vmem:[%s3 + $0xf0] sm:$0x33]
  %v3936 = vld [vmem:[%s3 + $0xf8] sm:$0x33]
  %v3937 = vld [vmem:[%s3 + $0x100] sm:$0x3]
  %v3939 = vshrl.u32 %v3898, 16
  %v3941 = vshll.u32 %v3898, 16
  %v3943 = vrot.slane %v3941, 1
  %v3944 = vor.u32 %v3939, %v3943
  %v3947 = vsel %vm1071, %v3944, %v3943
  %v3961 = vunpack.c.l.b16 %v3899
  %v3962 = vunpack.c.h.b16 %v3899
  %v3963 = vunpack.c.l.b16 %v3902
  %v3964 = vunpack.c.h.b16 %v3902
  %v3965 = vunpack.c.l.b16 %v3905
  %v3966 = vunpack.c.h.b16 %v3905
  %v3967 = vunpack.c.l.b16 %v3908
  %v3968 = vunpack.c.h.b16 %v3908
  %v3969 = vunpack.c.l.b16 %v3911
  %v3970 = vunpack.c.h.b16 %v3911
  %v3971 = vunpack.c.l.b16 %v3914
  %v3972 = vunpack.c.h.b16 %v3914
  %v3973 = vunpack.c.l.b16 %v3917
  %v3974 = vunpack.c.h.b16 %v3917
  %v3975 = vunpack.c.l.b16 %v3920
  %v3976 = vunpack.c.h.b16 %v3920
  %v3977 = vunpack.c.l.b16 %v3923
  %v3978 = vunpack.c.h.b16 %v3923
  %v3979 = vunpack.c.l.b16 %v3926
  %v3980 = vunpack.c.h.b16 %v3926
  %v3981 = vunpack.c.l.b16 %v3929
  %v3982 = vunpack.c.h.b16 %v3929
  %v3983 = vunpack.c.l.b16 %v3932
  %v3984 = vunpack.c.h.b16 %v3932
  %v3985 = vunpack.c.l.b16 %v3935
  %v3986 = vunpack.c.h.b16 %v3935
  %v3987 = vpack.c.b16 %v3963, %v3961
  %v3988 = vpack.c.b16 %v3964, %v3962
  %v3989 = vpack.c.b16 %v3967, %v3965
  %v3990 = vpack.c.b16 %v3968, %v3966
  %v3991 = vpack.c.b16 %v3971, %v3969
  %v3992 = vpack.c.b16 %v3972, %v3970
  %v3993 = vpack.c.b16 %v3975, %v3973
  %v3994 = vpack.c.b16 %v3976, %v3974
  %v3995 = vpack.c.b16 %v3979, %v3977
  %v3996 = vpack.c.b16 %v3980, %v3978
  %v3997 = vpack.c.b16 %v3983, %v3981
  %v3998 = vpack.c.b16 %v3984, %v3982
  %v3999 = vpack.c.b16 %v3985, %v3985
  %v4000 = vpack.c.b16 %v3986, %v3986
  %4001 = vrot.lane.b32.xlu0 %v3987, 8
  %v4002 = vpop.permute.xlu0 %4001
  %4003 = vrot.lane.b32.xlu0 %v3988, 8
  %v4004 = vpop.permute.xlu0 %4003
  %4005 = vrot.lane.b32.xlu0 %v3989, 8
  %v4006 = vpop.permute.xlu0 %4005
  %4007 = vrot.lane.b32.xlu0 %v3990, 8
  %v4008 = vpop.permute.xlu0 %4007
  %4009 = vrot.lane.b32.xlu0 %v3991, 8
  %v4010 = vpop.permute.xlu0 %4009
  %4011 = vrot.lane.b32.xlu0 %v3992, 8
  %v4012 = vpop.permute.xlu0 %4011
  %4013 = vrot.lane.b32.xlu0 %v3993, 8
  %v4014 = vpop.permute.xlu0 %4013
  %4015 = vrot.lane.b32.xlu0 %v3994, 8
  %v4016 = vpop.permute.xlu0 %4015
  %4017 = vrot.lane.b32.xlu0 %v3995, 8
  %v4018 = vpop.permute.xlu0 %4017
  %4019 = vrot.lane.b32.xlu0 %v3996, 8
  %v4020 = vpop.permute.xlu0 %4019
  %4021 = vrot.lane.b32.xlu0 %v3997, 8
  %v4022 = vpop.permute.xlu0 %4021
  %4023 = vrot.lane.b32.xlu0 %v3998, 8
  %v4024 = vpop.permute.xlu0 %4023
  %4025 = vrot.lane.b32.xlu0 %v3999, 8
  %v4026 = vpop.permute.xlu0 %4025
  %4027 = vrot.lane.b32.xlu0 %v4000, 8
  %v4028 = vpop.permute.xlu0 %4027
  %vm4029 = vcmask 64512
  %v4030 = vsel %vm4029, %v4002, %v4004
  %v4031 = vsel %vm4029, %v4006, %v4008
  %v4032 = vsel %vm4029, %v4010, %v4012
  %v4033 = vsel %vm4029, %v4014, %v4016
  %v4034 = vsel %vm4029, %v4018, %v4020
  %v4035 = vsel %vm4029, %v4022, %v4024
  %v4036 = vsel %vm4029, %v4026, %v4028
  %vm4043 = vcmask 818176
  %v4045 = vsel %vm4043, %v3947, 0
  %vm4047 = vcmask 1041408
  %v4049 = vsel %vm4047, %v4036, 0
  %4051 = vmatprep.subr.bf16.mxu0 0
  %4052 = vmatpush1.bf16.msra.mxu0 0
  %4053 = vmatprep.subr.bf16.mxu0 0
  %4054 = vmatpush1.bf16.msra.mxu0 %v4049
  %4055 = vmatprep.subr.bf16.mxu0 0
  %4056 = vmatpush1.bf16.msra.mxu0 %v4035
  %4057 = vmatprep.subr.bf16.mxu0 0
  %4058 = vmatpush1.bf16.msra.mxu0 %v4034
  %4059 = vmatprep.subr.bf16.mxu0 0
  %4060 = vmatpush1.bf16.msra.mxu0 %v4033
  %4061 = vmatprep.subr.bf16.mxu0 0
  %4062 = vmatpush1.bf16.msra.mxu0 %v4032
  %4063 = vmatprep.subr.bf16.mxu0 0
  %4064 = vmatpush1.bf16.msra.mxu0 %v4031
  %4065 = vmatprep.subr.bf16.mxu0 0
  %4066 = vmatpush1.bf16.msra.mxu0 %v4030
  %4067 = vmatprep.subr.bf16.mxu0 0
  %4068 = vmatpush2.bf16.msra.mxu0 0
  %4069 = vmatprep.subr.bf16.mxu0 0
  %4070 = vmatpush2.bf16.msra.mxu0 0
  %4071 = vmatprep.subr.bf16.mxu0 0
  %4072 = vmatpush2.bf16.msra.mxu0 0
  %4073 = vmatprep.subr.bf16.mxu0 0
  %4074 = vmatpush2.bf16.msra.mxu0 0
  %4075 = vmatprep.subr.bf16.mxu0 0
  %4076 = vmatpush2.bf16.msra.mxu0 0
  %4077 = vmatprep.subr.bf16.mxu0 0
  %4078 = vmatpush2.bf16.msra.mxu0 0
  %4079 = vmatprep.subr.bf16.mxu0 0
  %4080 = vmatpush2.bf16.msra.mxu0 0
  %4081 = vmatprep.subr.bf16.mxu0 0
  %4082 = vmatpush2.bf16.msra.mxu0 0
  %4083 = vmatprep.mubr.bf16.mxu0 0
  %4084 = vmatmul.mubr.bf16.gmra.mxu0 %v4045
  %v4085 = vpop.f32.mrf.mxu0
  %v4086 = vadd.f32 0.0, %v4085
  %v4087 = vpop.f32.mrf.mxu0
  %v4088 = vpop.f32.mrf.mxu0
  %v4089 = vadd.f32 0.0, %v4088
  %v4090 = vpop.f32.mrf.mxu0
  %4091 = vdwg.mxu0
  %v4098 = vsel %vm4043, %v3898, 0
  %v4101 = vsel %vm4047, %v3999, 0
  %4103 = vmatprep.subr.bf16.mxu0 0
  %4104 = vmatpush1.bf16.msra.mxu0 0
  %4105 = vmatprep.subr.bf16.mxu0 0
  %4106 = vmatpush1.bf16.msra.mxu0 %v4101
  %4107 = vmatprep.subr.bf16.mxu0 0
  %4108 = vmatpush1.bf16.msra.mxu0 %v3997
  %4109 = vmatprep.subr.bf16.mxu0 0
  %4110 = vmatpush1.bf16.msra.mxu0 %v3995
  %4111 = vmatprep.subr.bf16.mxu0 0
  %4112 = vmatpush1.bf16.msra.mxu0 %v3993
  %4113 = vmatprep.subr.bf16.mxu0 0
  %4114 = vmatpush1.bf16.msra.mxu0 %v3991
  %4115 = vmatprep.subr.bf16.mxu0 0
  %4116 = vmatpush1.bf16.msra.mxu0 %v3989
  %4117 = vmatprep.subr.bf16.mxu0 0
  %4118 = vmatpush1.bf16.msra.mxu0 %v3987
  %4119 = vmatprep.subr.bf16.mxu0 0
  %4120 = vmatpush2.bf16.msra.mxu0 0
  %4121 = vmatprep.subr.bf16.mxu0 0
  %4122 = vmatpush2.bf16.msra.mxu0 0
  %4123 = vmatprep.subr.bf16.mxu0 0
  %4124 = vmatpush2.bf16.msra.mxu0 0
  %4125 = vmatprep.subr.bf16.mxu0 0
  %4126 = vmatpush2.bf16.msra.mxu0 0
  %4127 = vmatprep.subr.bf16.mxu0 0
  %4128 = vmatpush2.bf16.msra.mxu0 0
  %4129 = vmatprep.subr.bf16.mxu0 0
  %4130 = vmatpush2.bf16.msra.mxu0 0
  %4131 = vmatprep.subr.bf16.mxu0 0
  %4132 = vmatpush2.bf16.msra.mxu0 0
  %4133 = vmatprep.subr.bf16.mxu0 0
  %4134 = vmatpush2.bf16.msra.mxu0 0
  %4135 = vmatprep.mubr.bf16.mxu0 0
  %4136 = vmatmul.mubr.bf16.gmra.mxu0 %v4098
  %v4137 = vpop.f32.mrf.mxu0
  %v4138 = vadd.f32 %v4086, %v4137
  %v4139 = vpop.f32.mrf.mxu0
  %v4140 = vpop.f32.mrf.mxu0
  %v4141 = vadd.f32 %v4089, %v4140
  %v4142 = vpop.f32.mrf.mxu0
  %4143 = vdwg.mxu0
  %v4145 = vrot.slane %v3898, 1
  %v4147 = vsel %vm3459, %v4145, %v4145
  %v4161 = vunpack.c.l.b16 %v3900
  %v4162 = vunpack.c.l.b16 %v3903
  %v4163 = vunpack.c.l.b16 %v3906
  %v4164 = vunpack.c.l.b16 %v3909
  %v4165 = vunpack.c.l.b16 %v3912
  %v4166 = vunpack.c.l.b16 %v3915
  %v4167 = vunpack.c.l.b16 %v3918
  %v4168 = vunpack.c.l.b16 %v3921
  %v4169 = vunpack.c.l.b16 %v3924
  %v4170 = vunpack.c.l.b16 %v3927
  %v4171 = vunpack.c.l.b16 %v3930
  %v4172 = vunpack.c.l.b16 %v3933
  %v4173 = vunpack.c.l.b16 %v3936
  %v4174 = vpack.c.b16 %v4162, %v4161
  %v4175 = vpack.c.b16 %v4164, %v4163
  %v4176 = vpack.c.b16 %v4166, %v4165
  %v4177 = vpack.c.b16 %v4168, %v4167
  %v4178 = vpack.c.b16 %v4170, %v4169
  %v4179 = vpack.c.b16 %v4172, %v4171
  %v4180 = vpack.c.b16 %v4173, %v4173
  %4181 = vrot.lane.b32.xlu0 %v3988, 16
  %v4182 = vpop.permute.xlu0 %4181
  %4183 = vrot.lane.b32.xlu0 %v4174, 16
  %v4184 = vpop.permute.xlu0 %4183
  %4185 = vrot.lane.b32.xlu0 %v3990, 16
  %v4186 = vpop.permute.xlu0 %4185
  %4187 = vrot.lane.b32.xlu0 %v4175, 16
  %v4188 = vpop.permute.xlu0 %4187
  %4189 = vrot.lane.b32.xlu0 %v3992, 16
  %v4190 = vpop.permute.xlu0 %4189
  %4191 = vrot.lane.b32.xlu0 %v4176, 16
  %v4192 = vpop.permute.xlu0 %4191
  %4193 = vrot.lane.b32.xlu0 %v3994, 16
  %v4194 = vpop.permute.xlu0 %4193
  %4195 = vrot.lane.b32.xlu0 %v4177, 16
  %v4196 = vpop.permute.xlu0 %4195
  %4197 = vrot.lane.b32.xlu0 %v3996, 16
  %v4198 = vpop.permute.xlu0 %4197
  %4199 = vrot.lane.b32.xlu0 %v4178, 16
  %v4200 = vpop.permute.xlu0 %4199
  %4201 = vrot.lane.b32.xlu0 %v3998, 16
  %v4202 = vpop.permute.xlu0 %4201
  %4203 = vrot.lane.b32.xlu0 %v4179, 16
  %v4204 = vpop.permute.xlu0 %4203
  %4205 = vrot.lane.b32.xlu0 %v4000, 16
  %v4206 = vpop.permute.xlu0 %4205
  %4207 = vrot.lane.b32.xlu0 %v4180, 16
  %v4208 = vpop.permute.xlu0 %4207
  %vm4209 = vcmask 130048
  %v4210 = vsel %vm4209, %v4182, %v4184
  %v4211 = vsel %vm4209, %v4186, %v4188
  %v4212 = vsel %vm4209, %v4190, %v4192
  %v4213 = vsel %vm4209, %v4194, %v4196
  %v4214 = vsel %vm4209, %v4198, %v4200
  %v4215 = vsel %vm4209, %v4202, %v4204
  %v4216 = vsel %vm4209, %v4206, %v4208
  %v4223 = vsel %vm4043, %v4147, 0
  %v4226 = vsel %vm4047, %v4216, 0
  %4228 = vmatprep.subr.bf16.mxu0 0
  %4229 = vmatpush1.bf16.msra.mxu0 0
  %4230 = vmatprep.subr.bf16.mxu0 0
  %4231 = vmatpush1.bf16.msra.mxu0 %v4226
  %4232 = vmatprep.subr.bf16.mxu0 0
  %4233 = vmatpush1.bf16.msra.mxu0 %v4215
  %4234 = vmatprep.subr.bf16.mxu0 0
  %4235 = vmatpush1.bf16.msra.mxu0 %v4214
  %4236 = vmatprep.subr.bf16.mxu0 0
  %4237 = vmatpush1.bf16.msra.mxu0 %v4213
  %4238 = vmatprep.subr.bf16.mxu0 0
  %4239 = vmatpush1.bf16.msra.mxu0 %v4212
  %4240 = vmatprep.subr.bf16.mxu0 0
  %4241 = vmatpush1.bf16.msra.mxu0 %v4211
  %4242 = vmatprep.subr.bf16.mxu0 0
  %4243 = vmatpush1.bf16.msra.mxu0 %v4210
  %4244 = vmatprep.subr.bf16.mxu0 0
  %4245 = vmatpush2.bf16.msra.mxu0 0
  %4246 = vmatprep.subr.bf16.mxu0 0
  %4247 = vmatpush2.bf16.msra.mxu0 0
  %4248 = vmatprep.subr.bf16.mxu0 0
  %4249 = vmatpush2.bf16.msra.mxu0 0
  %4250 = vmatprep.subr.bf16.mxu0 0
  %4251 = vmatpush2.bf16.msra.mxu0 0
  %4252 = vmatprep.subr.bf16.mxu0 0
  %4253 = vmatpush2.bf16.msra.mxu0 0
  %4254 = vmatprep.subr.bf16.mxu0 0
  %4255 = vmatpush2.bf16.msra.mxu0 0
  %4256 = vmatprep.subr.bf16.mxu0 0
  %4257 = vmatpush2.bf16.msra.mxu0 0
  %4258 = vmatprep.subr.bf16.mxu0 0
  %4259 = vmatpush2.bf16.msra.mxu0 0
  %4260 = vmatprep.mubr.bf16.mxu0 0
  %4261 = vmatmul.mubr.bf16.gmra.mxu0 %v4223
  %v4262 = vpop.f32.mrf.mxu0
  %v4263 = vadd.f32 0.0, %v4262
  %v4264 = vpop.f32.mrf.mxu0
  %v4265 = vpop.f32.mrf.mxu0
  %v4266 = vadd.f32 0.0, %v4265
  %v4267 = vpop.f32.mrf.mxu0
  %4268 = vdwg.mxu0
  %v4269 = vadd.f32 %v4138, %v4263
  %v4270 = vadd.f32 %v4141, %v4266
  %v4271 = vrot.slane %v3939, 1
  %v4272 = vrot.slane %v3941, 2
  %v4273 = vor.u32 %v4271, %v4272
  %vm4275 = vcmask 1046528
  %vm4276 = vsmask.f32 6400
  %vm4277 = vmand %vm4275, %vm4276
  %v4278 = vsel %vm4277, %v4273, %v4273
  %v4279 = vunpack.c.h.b16 %v3900
  %v4280 = vunpack.c.h.b16 %v3903
  %v4281 = vunpack.c.h.b16 %v3906
  %v4282 = vunpack.c.h.b16 %v3909
  %v4283 = vunpack.c.h.b16 %v3912
  %v4284 = vunpack.c.h.b16 %v3915
  %v4285 = vunpack.c.h.b16 %v3918
  %v4286 = vunpack.c.h.b16 %v3921
  %v4287 = vunpack.c.h.b16 %v3924
  %v4288 = vunpack.c.h.b16 %v3927
  %v4289 = vunpack.c.h.b16 %v3930
  %v4290 = vunpack.c.h.b16 %v3933
  %v4291 = vunpack.c.h.b16 %v3936
  %v4292 = vpack.c.b16 %v4280, %v4279
  %v4293 = vpack.c.b16 %v4282, %v4281
  %v4294 = vpack.c.b16 %v4284, %v4283
  %v4295 = vpack.c.b16 %v4286, %v4285
  %v4296 = vpack.c.b16 %v4288, %v4287
  %v4297 = vpack.c.b16 %v4290, %v4289
  %v4298 = vpack.c.b16 %v4291, %v4291
  %4299 = vrot.lane.b32.xlu0 %v4174, 24
  %v4300 = vpop.permute.xlu0 %4299
  %4301 = vrot.lane.b32.xlu0 %v4292, 24
  %v4302 = vpop.permute.xlu0 %4301
  %4303 = vrot.lane.b32.xlu0 %v4175, 24
  %v4304 = vpop.permute.xlu0 %4303
  %4305 = vrot.lane.b32.xlu0 %v4293, 24
  %v4306 = vpop.permute.xlu0 %4305
  %4307 = vrot.lane.b32.xlu0 %v4176, 24
  %v4308 = vpop.permute.xlu0 %4307
  %4309 = vrot.lane.b32.xlu0 %v4294, 24
  %v4310 = vpop.permute.xlu0 %4309
  %4311 = vrot.lane.b32.xlu0 %v4177, 24
  %v4312 = vpop.permute.xlu0 %4311
  %4313 = vrot.lane.b32.xlu0 %v4295, 24
  %v4314 = vpop.permute.xlu0 %4313
  %4315 = vrot.lane.b32.xlu0 %v4178, 24
  %v4316 = vpop.permute.xlu0 %4315
  %4317 = vrot.lane.b32.xlu0 %v4296, 24
  %v4318 = vpop.permute.xlu0 %4317
  %4319 = vrot.lane.b32.xlu0 %v4179, 24
  %v4320 = vpop.permute.xlu0 %4319
  %4321 = vrot.lane.b32.xlu0 %v4297, 24
  %v4322 = vpop.permute.xlu0 %4321
  %4323 = vrot.lane.b32.xlu0 %v4180, 24
  %v4324 = vpop.permute.xlu0 %4323
  %4325 = vrot.lane.b32.xlu0 %v4298, 24
  %v4326 = vpop.permute.xlu0 %4325
  %vm4327 = vcmask 195584
  %v4328 = vsel %vm4327, %v4300, %v4302
  %v4329 = vsel %vm4327, %v4304, %v4306
  %v4330 = vsel %vm4327, %v4308, %v4310
  %v4331 = vsel %vm4327, %v4312, %v4314
  %v4332 = vsel %vm4327, %v4316, %v4318
  %v4333 = vsel %vm4327, %v4320, %v4322
  %v4334 = vsel %vm4327, %v4324, %v4326
  %v4342 = vsel %vm4043, %v4278, 0
  %v4345 = vsel %vm4047, %v4334, 0
  %4347 = vmatprep.subr.bf16.mxu0 0
  %4348 = vmatpush1.bf16.msra.mxu0 0
  %4349 = vmatprep.subr.bf16.mxu0 0
  %4350 = vmatpush1.bf16.msra.mxu0 %v4345
  %4351 = vmatprep.subr.bf16.mxu0 0
  %4352 = vmatpush1.bf16.msra.mxu0 %v4333
  %4353 = vmatprep.subr.bf16.mxu0 0
  %4354 = vmatpush1.bf16.msra.mxu0 %v4332
  %4355 = vmatprep.subr.bf16.mxu0 0
  %4356 = vmatpush1.bf16.msra.mxu0 %v4331
  %4357 = vmatprep.subr.bf16.mxu0 0
  %4358 = vmatpush1.bf16.msra.mxu0 %v4330
  %4359 = vmatprep.subr.bf16.mxu0 0
  %4360 = vmatpush1.bf16.msra.mxu0 %v4329
  %4361 = vmatprep.subr.bf16.mxu0 0
  %4362 = vmatpush1.bf16.msra.mxu0 %v4328
  %4363 = vmatprep.subr.bf16.mxu0 0
  %4364 = vmatpush2.bf16.msra.mxu0 0
  %4365 = vmatprep.subr.bf16.mxu0 0
  %4366 = vmatpush2.bf16.msra.mxu0 0
  %4367 = vmatprep.subr.bf16.mxu0 0
  %4368 = vmatpush2.bf16.msra.mxu0 0
  %4369 = vmatprep.subr.bf16.mxu0 0
  %4370 = vmatpush2.bf16.msra.mxu0 0
  %4371 = vmatprep.subr.bf16.mxu0 0
  %4372 = vmatpush2.bf16.msra.mxu0 0
  %4373 = vmatprep.subr.bf16.mxu0 0
  %4374 = vmatpush2.bf16.msra.mxu0 0
  %4375 = vmatprep.subr.bf16.mxu0 0
  %4376 = vmatpush2.bf16.msra.mxu0 0
  %4377 = vmatprep.subr.bf16.mxu0 0
  %4378 = vmatpush2.bf16.msra.mxu0 0
  %4379 = vmatprep.mubr.bf16.mxu0 0
  %4380 = vmatmul.mubr.bf16.gmra.mxu0 %v4342
  %v4381 = vpop.f32.mrf.mxu0
  %v4382 = vadd.f32 0.0, %v4381
  %v4383 = vpop.f32.mrf.mxu0
  %v4384 = vpop.f32.mrf.mxu0
  %v4385 = vadd.f32 0.0, %v4384
  %v4386 = vpop.f32.mrf.mxu0
  %4387 = vdwg.mxu0
  %v4388 = vadd.f32 %v4269, %v4382
  %v4389 = vadd.f32 %v4270, %v4385
  %v4390 = vrot.slane %v3898, 2
  %v4392 = vsel %vm2901, %v4390, %v4390
  %v4406 = vunpack.c.l.b16 %v3901
  %v4407 = vunpack.c.l.b16 %v3904
  %v4408 = vunpack.c.l.b16 %v3907
  %v4409 = vunpack.c.l.b16 %v3910
  %v4410 = vunpack.c.l.b16 %v3913
  %v4411 = vunpack.c.l.b16 %v3916
  %v4412 = vunpack.c.l.b16 %v3919
  %v4413 = vunpack.c.l.b16 %v3922
  %v4414 = vunpack.c.l.b16 %v3925
  %v4415 = vunpack.c.l.b16 %v3928
  %v4416 = vunpack.c.l.b16 %v3931
  %v4417 = vunpack.c.l.b16 %v3934
  %v4418 = vunpack.c.l.b16 %v3937
  %v4419 = vpack.c.b16 %v4407, %v4406
  %v4420 = vpack.c.b16 %v4409, %v4408
  %v4421 = vpack.c.b16 %v4411, %v4410
  %v4422 = vpack.c.b16 %v4413, %v4412
  %v4423 = vpack.c.b16 %v4415, %v4414
  %v4424 = vpack.c.b16 %v4417, %v4416
  %v4425 = vpack.c.b16 %v4418, %v4418
  %4426 = vrot.lane.b32.xlu0 %v4292, 32
  %v4427 = vpop.permute.xlu0 %4426
  %4428 = vrot.lane.b32.xlu0 %v4419, 32
  %v4429 = vpop.permute.xlu0 %4428
  %4430 = vrot.lane.b32.xlu0 %v4293, 32
  %v4431 = vpop.permute.xlu0 %4430
  %4432 = vrot.lane.b32.xlu0 %v4420, 32
  %v4433 = vpop.permute.xlu0 %4432
  %4434 = vrot.lane.b32.xlu0 %v4294, 32
  %v4435 = vpop.permute.xlu0 %4434
  %4436 = vrot.lane.b32.xlu0 %v4421, 32
  %v4437 = vpop.permute.xlu0 %4436
  %4438 = vrot.lane.b32.xlu0 %v4295, 32
  %v4439 = vpop.permute.xlu0 %4438
  %4440 = vrot.lane.b32.xlu0 %v4422, 32
  %v4441 = vpop.permute.xlu0 %4440
  %4442 = vrot.lane.b32.xlu0 %v4296, 32
  %v4443 = vpop.permute.xlu0 %4442
  %4444 = vrot.lane.b32.xlu0 %v4423, 32
  %v4445 = vpop.permute.xlu0 %4444
  %4446 = vrot.lane.b32.xlu0 %v4297, 32
  %v4447 = vpop.permute.xlu0 %4446
  %4448 = vrot.lane.b32.xlu0 %v4424, 32
  %v4449 = vpop.permute.xlu0 %4448
  %4450 = vrot.lane.b32.xlu0 %v4298, 32
  %v4451 = vpop.permute.xlu0 %4450
  %4452 = vrot.lane.b32.xlu0 %v4425, 32
  %v4453 = vpop.permute.xlu0 %4452
  %vm4454 = vcmask 261120
  %v4455 = vsel %vm4454, %v4427, %v4429
  %v4456 = vsel %vm4454, %v4431, %v4433
  %v4457 = vsel %vm4454, %v4435, %v4437
  %v4458 = vsel %vm4454, %v4439, %v4441
  %v4459 = vsel %vm4454, %v4443, %v4445
  %v4460 = vsel %vm4454, %v4447, %v4449
  %v4461 = vsel %vm4454, %v4451, %v4453
  %v4468 = vsel %vm4043, %v4392, 0
  %v4471 = vsel %vm4047, %v4461, 0
  %4473 = vmatprep.subr.bf16.mxu0 0
  %4474 = vmatpush1.bf16.msra.mxu0 0
  %4475 = vmatprep.subr.bf16.mxu0 0
  %4476 = vmatpush1.bf16.msra.mxu0 %v4471
  %4477 = vmatprep.subr.bf16.mxu0 0
  %4478 = vmatpush1.bf16.msra.mxu0 %v4460
  %4479 = vmatprep.subr.bf16.mxu0 0
  %4480 = vmatpush1.bf16.msra.mxu0 %v4459
  %4481 = vmatprep.subr.bf16.mxu0 0
  %4482 = vmatpush1.bf16.msra.mxu0 %v4458
  %4483 = vmatprep.subr.bf16.mxu0 0
  %4484 = vmatpush1.bf16.msra.mxu0 %v4457
  %4485 = vmatprep.subr.bf16.mxu0 0
  %4486 = vmatpush1.bf16.msra.mxu0 %v4456
  %4487 = vmatprep.subr.bf16.mxu0 0
  %4488 = vmatpush1.bf16.msra.mxu0 %v4455
  %4489 = vmatprep.subr.bf16.mxu0 0
  %4490 = vmatpush2.bf16.msra.mxu0 0
  %4491 = vmatprep.subr.bf16.mxu0 0
  %4492 = vmatpush2.bf16.msra.mxu0 0
  %4493 = vmatprep.subr.bf16.mxu0 0
  %4494 = vmatpush2.bf16.msra.mxu0 0
  %4495 = vmatprep.subr.bf16.mxu0 0
  %4496 = vmatpush2.bf16.msra.mxu0 0
  %4497 = vmatprep.subr.bf16.mxu0 0
  %4498 = vmatpush2.bf16.msra.mxu0 0
  %4499 = vmatprep.subr.bf16.mxu0 0
  %4500 = vmatpush2.bf16.msra.mxu0 0
  %4501 = vmatprep.subr.bf16.mxu0 0
  %4502 = vmatpush2.bf16.msra.mxu0 0
  %4503 = vmatprep.subr.bf16.mxu0 0
  %4504 = vmatpush2.bf16.msra.mxu0 0
  %4505 = vmatprep.mubr.bf16.mxu0 0
  %4506 = vmatmul.mubr.bf16.gmra.mxu0 %v4468
  %v4507 = vpop.f32.mrf.mxu0
  %v4508 = vadd.f32 0.0, %v4507
  %v4509 = vpop.f32.mrf.mxu0
  %v4510 = vpop.f32.mrf.mxu0
  %v4511 = vadd.f32 0.0, %v4510
  %v4512 = vpop.f32.mrf.mxu0
  %4513 = vdwg.mxu0
  %v4514 = vadd.f32 %v4388, %v4508
  %v4515 = vadd.f32 %v4389, %v4511
  %v4516 = vld [vmem:[%s8] sm:$0x1]
  %v4518 = vlaneseq
  %v4519 = vshrl.u32 %v4518, 7
  %v4520 = vsub.s32 0, %v4519
  %v4521 = vrot.slane %v4516, %v4520
  %v4523 = vadd.f32 %v4514, %v4521
  %v4524 = vadd.f32 %v4515, %v4521
  %v4525 = vmax.f32 %v4523, 0.0
  %v4526 = vmax.f32 %v4524, 0.0
  %v4527 = vpack.c.bf16 %v4526, %v4525
  %v4528 = vld [vmem:[%s4] sm:$0xf]
  %v4529 = vld [vmem:[%s4 + $0x4] sm:$0xf]
  %v4530 = vld [vmem:[%s4 + $0x8] sm:$0xf]
  %v4531 = vld [vmem:[%s4 + $0xc] sm:$0xf]
  %v4532 = vld [vmem:[%s4 + $0x10] sm:$0xf]
  %v4533 = vld [vmem:[%s4 + $0x14] sm:$0xf]
  %v4534 = vld [vmem:[%s4 + $0x18] sm:$0xf]
  %v4535 = vld [vmem:[%s4 + $0x1c] sm:$0xf]
  %v4536 = vld [vmem:[%s4 + $0x20] sm:$0xf]
  %v4537 = vld [vmem:[%s4 + $0x24] sm:$0xf]
  %v4538 = vld [vmem:[%s4 + $0x28] sm:$0xf]
  %v4539 = vld [vmem:[%s4 + $0x2c] sm:$0xf]
  %v4540 = vld [vmem:[%s4 + $0x30] sm:$0xf]
  %v4541 = vld [vmem:[%s4 + $0x34] sm:$0xf]
  %v4542 = vld [vmem:[%s4 + $0x38] sm:$0xf]
  %v4543 = vld [vmem:[%s9] sm:$0x1]
  %v4545 = vlaneseq
  %v4546 = vshrl.u32 %v4545, 7
  %v4547 = vsub.s32 0, %v4546
  %v4548 = vrot.slane %v4543, %v4547
  %v4565 = vunpack.c.l.b16 %v4528
  %v4566 = vunpack.c.l.b16 %v4529
  %v4567 = vunpack.c.l.b16 %v4530
  %v4568 = vunpack.c.l.b16 %v4531
  %v4569 = vunpack.c.l.b16 %v4532
  %v4570 = vunpack.c.l.b16 %v4533
  %v4571 = vunpack.c.l.b16 %v4534
  %v4572 = vunpack.c.l.b16 %v4535
  %v4573 = vunpack.c.l.b16 %v4536
  %v4574 = vunpack.c.l.b16 %v4537
  %v4575 = vunpack.c.l.b16 %v4538
  %v4576 = vunpack.c.l.b16 %v4539
  %v4577 = vunpack.c.l.b16 %v4540
  %v4578 = vunpack.c.l.b16 %v4541
  %v4579 = vunpack.c.l.b16 %v4542
  %v4580 = vpack.c.b16 %v4566, %v4565
  %v4581 = vpack.c.b16 %v4568, %v4567
  %v4582 = vpack.c.b16 %v4570, %v4569
  %v4583 = vpack.c.b16 %v4572, %v4571
  %v4584 = vpack.c.b16 %v4574, %v4573
  %v4585 = vpack.c.b16 %v4576, %v4575
  %v4586 = vpack.c.b16 %v4578, %v4577
  %v4587 = vpack.c.b16 %v4579, %v4579
  %vm4595 = vcmask 982016
  %v4597 = vsel %vm4595, %v4527, 0
  %vm4599 = vcmask 1043456
  %v4601 = vsel %vm4599, %v4587, 0
  %4603 = vmatprep.subr.bf16.mxu0 0
  %4604 = vmatpush1.bf16.msra.mxu0 %v4601
  %4605 = vmatprep.subr.bf16.mxu0 0
  %4606 = vmatpush1.bf16.msra.mxu0 %v4586
  %4607 = vmatprep.subr.bf16.mxu0 0
  %4608 = vmatpush1.bf16.msra.mxu0 %v4585
  %4609 = vmatprep.subr.bf16.mxu0 0
  %4610 = vmatpush1.bf16.msra.mxu0 %v4584
  %4611 = vmatprep.subr.bf16.mxu0 0
  %4612 = vmatpush1.bf16.msra.mxu0 %v4583
  %4613 = vmatprep.subr.bf16.mxu0 0
  %4614 = vmatpush1.bf16.msra.mxu0 %v4582
  %4615 = vmatprep.subr.bf16.mxu0 0
  %4616 = vmatpush1.bf16.msra.mxu0 %v4581
  %4617 = vmatprep.subr.bf16.mxu0 0
  %4618 = vmatpush1.bf16.msra.mxu0 %v4580
  %4619 = vmatprep.subr.bf16.mxu0 0
  %4620 = vmatpush2.bf16.msra.mxu0 0
  %4621 = vmatprep.subr.bf16.mxu0 0
  %4622 = vmatpush2.bf16.msra.mxu0 0
  %4623 = vmatprep.subr.bf16.mxu0 0
  %4624 = vmatpush2.bf16.msra.mxu0 0
  %4625 = vmatprep.subr.bf16.mxu0 0
  %4626 = vmatpush2.bf16.msra.mxu0 0
  %4627 = vmatprep.subr.bf16.mxu0 0
  %4628 = vmatpush2.bf16.msra.mxu0 0
  %4629 = vmatprep.subr.bf16.mxu0 0
  %4630 = vmatpush2.bf16.msra.mxu0 0
  %4631 = vmatprep.subr.bf16.mxu0 0
  %4632 = vmatpush2.bf16.msra.mxu0 0
  %4633 = vmatprep.subr.bf16.mxu0 0
  %4634 = vmatpush2.bf16.msra.mxu0 0
  %4635 = vmatprep.mubr.bf16.mxu0 0
  %4636 = vmatmul.mubr.bf16.gmra.mxu0 %v4597
  %v4637 = vpop.f32.mrf.mxu0
  %v4638 = vadd.f32 %v4548, %v4637
  %v4639 = vpop.f32.mrf.mxu0
  %v4640 = vpop.f32.mrf.mxu0
  %v4641 = vadd.f32 %v4548, %v4640
  %v4642 = vpop.f32.mrf.mxu0
  %4643 = vdwg.mxu0
  %v4644 = vmax.f32 %v4638, 0.0
  %v4645 = vmax.f32 %v4641, 0.0
  %v4646 = vpack.c.bf16 %v4645, %v4644
  %v4647 = vld [vmem:[%s5] sm:$0xf]
  %v4648 = vld [vmem:[%s5 + $0x4] sm:$0xf]
  %v4649 = vld [vmem:[%s5 + $0x8] sm:$0xf]
  %v4650 = vld [vmem:[%s5 + $0xc] sm:$0xf]
  %v4651 = vld [vmem:[%s5 + $0x10] sm:$0xf]
  %v4652 = vld [vmem:[%s5 + $0x14] sm:$0xf]
  %v4653 = vld [vmem:[%s5 + $0x18] sm:$0xf]
  %v4654 = vld [vmem:[%s5 + $0x1c] sm:$0xf]
  %v4655 = vld [vmem:[%s5 + $0x20] sm:$0xf]
  %v4656 = vld [vmem:[%s5 + $0x24] sm:$0xf]
  %v4657 = vld [vmem:[%s5 + $0x28] sm:$0x3]
  %v4658 = vld [vmem:[%s10] sm:$0x1]
  %v4660 = vlaneseq
  %v4661 = vshrl.u32 %v4660, 7
  %v4662 = vsub.s32 0, %v4661
  %v4663 = vrot.slane %v4658, %v4662
  %v4676 = vunpack.c.l.b16 %v4647
  %v4677 = vunpack.c.l.b16 %v4648
  %v4678 = vunpack.c.l.b16 %v4649
  %v4679 = vunpack.c.l.b16 %v4650
  %v4680 = vunpack.c.l.b16 %v4651
  %v4681 = vunpack.c.l.b16 %v4652
  %v4682 = vunpack.c.l.b16 %v4653
  %v4683 = vunpack.c.l.b16 %v4654
  %v4684 = vunpack.c.l.b16 %v4655
  %v4685 = vunpack.c.l.b16 %v4656
  %v4686 = vunpack.c.l.b16 %v4657
  %v4687 = vpack.c.b16 %v4677, %v4676
  %v4688 = vpack.c.b16 %v4679, %v4678
  %v4689 = vpack.c.b16 %v4681, %v4680
  %v4690 = vpack.c.b16 %v4683, %v4682
  %v4691 = vpack.c.b16 %v4685, %v4684
  %v4692 = vpack.c.b16 %v4686, %v4686
  %vm4698 = vcmask 687104
  %v4700 = vsel %vm4698, %v4646, 0
  %v4703 = vsel %vm4047, %v4692, 0
  %4705 = vmatprep.subr.bf16.mxu0 0
  %4706 = vmatpush1.bf16.msra.mxu0 0
  %4707 = vmatprep.subr.bf16.mxu0 0
  %4708 = vmatpush1.bf16.msra.mxu0 0
  %4709 = vmatprep.subr.bf16.mxu0 0
  %4710 = vmatpush1.bf16.msra.mxu0 %v4703
  %4711 = vmatprep.subr.bf16.mxu0 0
  %4712 = vmatpush1.bf16.msra.mxu0 %v4691
  %4713 = vmatprep.subr.bf16.mxu0 0
  %4714 = vmatpush1.bf16.msra.mxu0 %v4690
  %4715 = vmatprep.subr.bf16.mxu0 0
  %4716 = vmatpush1.bf16.msra.mxu0 %v4689
  %4717 = vmatprep.subr.bf16.mxu0 0
  %4718 = vmatpush1.bf16.msra.mxu0 %v4688
  %4719 = vmatprep.subr.bf16.mxu0 0
  %4720 = vmatpush1.bf16.msra.mxu0 %v4687
  %4721 = vmatprep.subr.bf16.mxu0 0
  %4722 = vmatpush2.bf16.msra.mxu0 0
  %4723 = vmatprep.subr.bf16.mxu0 0
  %4724 = vmatpush2.bf16.msra.mxu0 0
  %4725 = vmatprep.subr.bf16.mxu0 0
  %4726 = vmatpush2.bf16.msra.mxu0 0
  %4727 = vmatprep.subr.bf16.mxu0 0
  %4728 = vmatpush2.bf16.msra.mxu0 0
  %4729 = vmatprep.subr.bf16.mxu0 0
  %4730 = vmatpush2.bf16.msra.mxu0 0
  %4731 = vmatprep.subr.bf16.mxu0 0
  %4732 = vmatpush2.bf16.msra.mxu0 0
  %4733 = vmatprep.subr.bf16.mxu0 0
  %4734 = vmatpush2.bf16.msra.mxu0 0
  %4735 = vmatprep.subr.bf16.mxu0 0
  %4736 = vmatpush2.bf16.msra.mxu0 0
  %4737 = vmatprep.mubr.bf16.mxu0 0
  %4738 = vmatmul.mubr.bf16.gmra.mxu0 %v4700
  %v4739 = vpop.f32.mrf.mxu0
  %v4740 = vadd.f32 %v4663, %v4739
  %v4741 = vpop.f32.mrf.mxu0
  %v4742 = vpop.f32.mrf.mxu0
  %v4743 = vadd.f32 %v4663, %v4742
  %v4744 = vpop.f32.mrf.mxu0
  %4745 = vdwg.mxu0
  %vm4746 = vcmask 80896
  %4747 = vst.msk [vmem:[%s11] sm:$0xff] %vm4746, %v4740
  %4748 = vst.msk [vmem:[%s11 + $0x8] sm:$0xff] %vm4746, %v4743
  // Predicated region
  $region46: #{net_forward.1} parent=0 // pred_check
    _
  $region47: #{net_forward.1} parent=0 // pred_check_branch
    %4750 = sbr.rel (0) target = $region49
  $region48: #{net_forward.1} parent=0 // pred_region
    _
  $region49: #{net_forward.1} parent=0 // pred_fallthru
    _
  // Predicated region
  $region50: #{net_forward.1} parent=0 // pred_check
    _
  $region51: #{net_forward.1} parent=0 // pred_check_branch
    %4752 = sbr.rel (0) target = $region53
  $region52: #{net_forward.1} parent=0 // pred_region
    _
  $region53: #{net_forward.1} parent=0 // pred_fallthru
    _

</llo_original>
